<compile_context>
chip_gen: v7x
topology: tpu7x:2x2x1
jax: 0.10.0
libtpu: 0.0.40
codegen_flags: <defaults>
</compile_context>

<pallas_src>
import jax
import jax.numpy as jnp
from jax.experimental import pallas as pl
from jax.experimental.pallas import tpu as pltpu

IN_FEATURES = 28 * 28   # 784
HIDDEN = 128
OUT_FEATURES = 10
DEFAULT_BLOCK_BATCH = 2048   # 256-aligned; ~30 MiB VMEM footprint (safe on v5e/v6e/v7x)


def _round_up(n, m):
    return ((n + m - 1) // m) * m


def _vmem_limit_bytes(tb):
    """Actual pipeline footprint + headroom (don't request all of v7x's 64 MiB)."""
    x_tile = tb * IN_FEATURES * 4                 # f32 input tile
    out_tile = tb * 128 * 4                       # output tile (lane-padded in VMEM)
    weights = (IN_FEATURES * HIDDEN * 2 + HIDDEN * 4
               + HIDDEN * OUT_FEATURES * 2 + OUT_FEATURES * 4)
    intermediates = 6 * tb * HIDDEN * 4           # h(f32), h(bf16), o(f32), slack
    total = 2 * x_tile + 2 * out_tile + 2 * weights + intermediates
    return min(int(total * 1.25) + (4 << 20), 100 << 20)


def mlp_kernel(x_ref, w1_ref, b1_ref, w2_ref, b2_ref, out_ref):
    # x tile arrives as f32 from HBM; cast to bf16 in-register for the MXU.
    x_bf = x_ref[...].astype(jnp.bfloat16)
    # fc1: (TB, 784)bf16 @ (784, 128)bf16 -> f32 accumulation on the MXU.
    h = jnp.dot(x_bf, w1_ref[...], preferred_element_type=jnp.float32)
    h = jnp.maximum(h + b1_ref[...], 0.0)
    # fc2: bf16 MXU path again; narrow N=10 output (MXU pads lanes internally).
    o = jnp.dot(h.astype(jnp.bfloat16), w2_ref[...],
                preferred_element_type=jnp.float32)
    out_ref[...] = (o + b2_ref[...]).astype(out_ref.dtype)


def simple_model_forward(x, w1_t, b1, w2_t, b2, *, block_batch=DEFAULT_BLOCK_BATCH):
    """x: any shape that flattens to (-1, 784), matching torch's x.view(-1, 784).

    w1_t: (784, 128), b1: (1, 128), w2_t: (128, 10), b2: (1, 10)  (all f32).
    Returns f32 logits of shape (batch, 10).
    """
    x2d = x.reshape(-1, IN_FEATURES).astype(jnp.float32)
    batch = x2d.shape[0]

    # Batch tile: 256-aligned (clean bf16 sublane packing for the in-kernel
    # intermediate), no batch padding — the last partial block is handled by
    # Pallas OOB semantics (garbage reads, dropped writes).
    tb = min(block_batch, _round_up(batch, 256))
    grid = (pl.cdiv(batch, tb),)

    w1_bf = w1_t.astype(jnp.bfloat16)
    w2_bf = w2_t.astype(jnp.bfloat16)
    b1_f = b1.astype(jnp.float32).reshape(1, HIDDEN)
    b2_f = b2.astype(jnp.float32).reshape(1, OUT_FEATURES)

    weight_bytes = (IN_FEATURES * HIDDEN * 2 + HIDDEN * 4
                    + HIDDEN * OUT_FEATURES * 2 + OUT_FEATURES * 4)
    cost = pl.CostEstimate(
        flops=2 * batch * (IN_FEATURES * HIDDEN + HIDDEN * OUT_FEATURES),
        transcendentals=0,
        bytes_accessed=batch * (IN_FEATURES * 4 + OUT_FEATURES * 4) + weight_bytes,
    )

    out = pl.pallas_call(
        mlp_kernel,
        out_shape=jax.ShapeDtypeStruct((batch, OUT_FEATURES), jnp.float32),
        grid=grid,
        in_specs=[
            pl.BlockSpec((tb, IN_FEATURES), lambda i: (i, 0)),        # x tile (pipelined, f32)
            pl.BlockSpec((IN_FEATURES, HIDDEN), lambda i: (0, 0)),    # w1 resident (bf16)
            pl.BlockSpec((1, HIDDEN), lambda i: (0, 0)),              # b1 resident (f32)
            pl.BlockSpec((HIDDEN, OUT_FEATURES), lambda i: (0, 0)),   # w2 resident (bf16)
            pl.BlockSpec((1, OUT_FEATURES), lambda i: (0, 0)),        # b2 resident (f32)
        ],
        out_specs=pl.BlockSpec((tb, OUT_FEATURES), lambda i: (i, 0)),
        compiler_params=pltpu.CompilerParams(
            dimension_semantics=("parallel",),     # megacore-shardable on v7x
            vmem_limit_bytes=_vmem_limit_bytes(tb),
        ),
        cost_estimate=cost,
    )(x2d, w1_bf, b1_f, w2_bf, b2_f)

    return out


def init_params(key):
    """Deterministic init matching nn.Linear shapes (weights stored transposed)."""
    k1, k2, k3, k4 = jax.random.split(key, 4)
    lim1 = 1.0 / jnp.sqrt(IN_FEATURES)
    w1_t = jax.random.uniform(k1, (IN_FEATURES, HIDDEN), jnp.float32, -lim1, lim1)
    b1 = jax.random.uniform(k2, (1, HIDDEN), jnp.float32, -lim1, lim1)
    lim2 = 1.0 / jnp.sqrt(HIDDEN)
    w2_t = jax.random.uniform(k3, (HIDDEN, OUT_FEATURES), jnp.float32, -lim2, lim2)
    b2 = jax.random.uniform(k4, (1, OUT_FEATURES), jnp.float32, -lim2, lim2)
    return w1_t, b1, w2_t, b2


if __name__ == "__main__":
    key = jax.random.PRNGKey(0)
    k_x, k_p = jax.random.split(key)

    # MNIST-like input: (batch=2, 1, 28, 28); forward flattens to (2, 784).
    x = jax.random.normal(k_x, (2, 1, 28, 28), jnp.float32)
    w1_t, b1, w2_t, b2 = init_params(k_p)

    out = simple_model_forward(x, w1_t, b1, w2_t, b2)
    out = jax.block_until_ready(out)
    assert out.shape == (2, OUT_FEATURES)

    # Pure-JAX reference of the same (bf16-operand, f32-accumulate) math.
    # TODO(synk): kernel uses bf16 MXU operands, so it differs from an exact
    # f32 nn.Linear by ~1e-2 relative error (memory-bound; f32 path possible).
    x2d = x.reshape(-1, IN_FEATURES)
    xb = x2d.astype(jnp.bfloat16).astype(jnp.float32)
    w1b = w1_t.astype(jnp.bfloat16).astype(jnp.float32)
    w2b = w2_t.astype(jnp.bfloat16).astype(jnp.float32)
    h = jnp.maximum(xb @ w1b + b1, 0.0)
    ref = h.astype(jnp.bfloat16).astype(jnp.float32) @ w2b + b2
    assert jnp.allclose(out, ref, atol=1e-2, rtol=1e-2), (
        f"max abs err {jnp.max(jnp.abs(out - ref))}")

    print("KERNEL_OK")
</pallas_src>

<mosaic_0001>
module attributes {stable_mosaic.version = 11 : i64} {
  func.func @mlp_kernel(%arg0: i32, %arg1: memref<256x784xf32, #tpu.memory_space<vmem>>, %arg2: memref<784x128xbf16, #tpu.memory_space<vmem>>, %arg3: memref<1x128xf32, #tpu.memory_space<vmem>>, %arg4: memref<128x10xbf16, #tpu.memory_space<vmem>>, %arg5: memref<1x10xf32, #tpu.memory_space<vmem>>, %arg6: memref<256x10xf32, #tpu.memory_space<vmem>>) attributes {dimension_semantics = [#tpu.dimension_semantics<parallel>], iteration_bounds = array<i64: 1>, scalar_prefetch = 0 : i64, scratch_operands = 0 : i64, tpu.core_type = #tpu.core_type<tc>, window_params = [{transform_indices = @transform_0, window_bounds = array<i64: 256, 784>}, {pipeline_mode = #tpu.pipeline_mode<synchronous>, transform_indices = @transform_1, window_bounds = array<i64: 784, 128>}, {pipeline_mode = #tpu.pipeline_mode<synchronous>, transform_indices = @transform_2, window_bounds = array<i64: 1, 128>}, {pipeline_mode = #tpu.pipeline_mode<synchronous>, transform_indices = @transform_3, window_bounds = array<i64: 128, 10>}, {pipeline_mode = #tpu.pipeline_mode<synchronous>, transform_indices = @transform_4, window_bounds = array<i64: 1, 10>}, {transform_indices = @transform_5, window_bounds = array<i64: 256, 10>}]} {
    %c0 = arith.constant 0 : index
    %c0_0 = arith.constant 0 : index
    %0 = vector.load %arg1[%c0, %c0_0] : memref<256x784xf32, #tpu.memory_space<vmem>>, vector<256x784xf32>
    %1 = arith.truncf %0 : vector<256x784xf32> to vector<256x784xbf16>
    %c0_1 = arith.constant 0 : index
    %c0_2 = arith.constant 0 : index
    %2 = vector.load %arg2[%c0_1, %c0_2] : memref<784x128xbf16, #tpu.memory_space<vmem>>, vector<784x128xbf16>
    %cst = arith.constant dense<0.000000e+00> : vector<256x128xf32>
    %3 = tpu.matmul %1, %2, %cst {dimension_numbers = #tpu.dot_dimension_numbers<[1], [0], [0], [1], [0, 0, 1, 1], [], []>} : vector<256x784xbf16>, vector<784x128xbf16>, vector<256x128xf32> -> vector<256x128xf32>
    %c0_3 = arith.constant 0 : index
    %c0_4 = arith.constant 0 : index
    %4 = vector.load %arg3[%c0_3, %c0_4] : memref<1x128xf32, #tpu.memory_space<vmem>>, vector<1x128xf32>
    %5 = vector.broadcast %4 : vector<1x128xf32> to vector<256x128xf32>
    %6 = arith.addf %3, %5 : vector<256x128xf32>
    %cst_5 = arith.constant 0.000000e+00 : f32
    %7 = vector.broadcast %cst_5 : f32 to vector<256x128xf32>
    %8 = arith.maximumf %6, %7 : vector<256x128xf32>
    %9 = arith.truncf %8 : vector<256x128xf32> to vector<256x128xbf16>
    %c0_6 = arith.constant 0 : index
    %c0_7 = arith.constant 0 : index
    %10 = vector.load %arg4[%c0_6, %c0_7] : memref<128x10xbf16, #tpu.memory_space<vmem>>, vector<128x10xbf16>
    %cst_8 = arith.constant dense<0.000000e+00> : vector<256x10xf32>
    %11 = tpu.matmul %9, %10, %cst_8 {dimension_numbers = #tpu.dot_dimension_numbers<[1], [0], [0], [1], [0, 0, 1, 1], [], []>} : vector<256x128xbf16>, vector<128x10xbf16>, vector<256x10xf32> -> vector<256x10xf32>
    %c0_9 = arith.constant 0 : index
    %c0_10 = arith.constant 0 : index
    %12 = vector.load %arg5[%c0_9, %c0_10] : memref<1x10xf32, #tpu.memory_space<vmem>>, vector<1x10xf32>
    %13 = vector.broadcast %12 : vector<1x10xf32> to vector<256x10xf32>
    %14 = arith.addf %11, %13 : vector<256x10xf32>
    %c0_11 = arith.constant 0 : index
    %c0_12 = arith.constant 0 : index
    %15 = vector.load %arg6[%c0_11, %c0_12] : memref<256x10xf32, #tpu.memory_space<vmem>>, vector<256x10xf32>
    tpu.vector_store %arg6[%c0_11, %c0_12], %14 {strides = array<i32>} : memref<256x10xf32, #tpu.memory_space<vmem>>, vector<256x10xf32>,
    return
  }
  func.func @transform_0(%arg0: i32) -> (i32, i32) {
    %c0_i32 = arith.constant 0 : i32
    %c0_i32_0 = arith.constant 0 : i32
    return %arg0, %c0_i32 : i32, i32
  }
  func.func @transform_1(%arg0: i32) -> (i32, i32) {
    %c0_i32 = arith.constant 0 : i32
    %c0_i32_0 = arith.constant 0 : i32
    %c0_i32_1 = arith.constant 0 : i32
    return %c0_i32, %c0_i32_0 : i32, i32
  }
  func.func @transform_2(%arg0: i32) -> (i32, i32) {
    %c0_i32 = arith.constant 0 : i32
    %c0_i32_0 = arith.constant 0 : i32
    %c0_i32_1 = arith.constant 0 : i32
    return %c0_i32, %c0_i32_0 : i32, i32
  }
  func.func @transform_3(%arg0: i32) -> (i32, i32) {
    %c0_i32 = arith.constant 0 : i32
    %c0_i32_0 = arith.constant 0 : i32
    %c0_i32_1 = arith.constant 0 : i32
    return %c0_i32, %c0_i32_0 : i32, i32
  }
  func.func @transform_4(%arg0: i32) -> (i32, i32) {
    %c0_i32 = arith.constant 0 : i32
    %c0_i32_0 = arith.constant 0 : i32
    %c0_i32_1 = arith.constant 0 : i32
    return %c0_i32, %c0_i32_0 : i32, i32
  }
  func.func @transform_5(%arg0: i32) -> (i32, i32) {
    %c0_i32 = arith.constant 0 : i32
    %c0_i32_0 = arith.constant 0 : i32
    return %arg0, %c0_i32 : i32, i32
  }
}

</mosaic_0001>

<llo_original>
// kernel: tpu_custom_call.1
$region0: #{tpu_custom_call.1}
  #allocation0 [shape = 'u32[]', space=smem, size = 0x4, offset = 0x4, fixed_abs, tag = 'smem constant byte address 0x4 - core index']
  #allocation1 [shape = 'u32[144,128]{1,0:T(1,128)}', space=vmem, size = 0x12000, scoped, tag = 'internal scratch']
  %s0 = inlined_call_operand.vmem [shape: f32[2,784], index: 0, kind: input, shape index: {}]
  %s1 = inlined_call_operand.hbm [shape: bf16[784,128], index: 1, kind: input, shape index: {}]
  %s2 = inlined_call_operand.vmem [shape: f32[1,128], index: 2, kind: input, shape index: {}]
  %s3 = inlined_call_operand.vmem [shape: bf16[128,10], index: 3, kind: input, shape index: {}]
  %s4 = inlined_call_operand.vmem [shape: f32[1,10], index: 4, kind: input, shape index: {}]
  %s5 = inlined_call_operand.hbm [shape: f32[2,10], index: 5, kind: output, shape index: {}]
  %s6 = sld [smem:[#allocation0]]
  $region34: #{tpu_custom_call.1} parent=0
    _
  %s8 = ssub.s32 1, %s6
  %s9 = scalar_select 0, %s8, %s6
  $region1: #{tpu_custom_call.1} parent=0
    #allocation2 [shape = 'u8[200704]{0}', space=vmem, size = 0x31000, scoped, tag = 'input window, operand 1, single buffered']
    #allocation3 [shape = 's32[1]{0}', space=sflag, size = 0x4, scoped, tag = 'scoped memory for tpu_custom_call.1']
    #allocation4 [shape = 's32[1]{0}', space=sflag, size = 0x4, scoped, tag = 'scoped memory for tpu_custom_call.1']
    #allocation5 [shape = 'u8[131072]{0}', space=vmem, size = 0x20000, scoped, tag = 'output window, operand 0, single buffered']
    %10 = vsyncpa [#allocation3], 0
    %11 = vsyncpa [#allocation4], 0
    // Predicated region
    $region2: #{tpu_custom_call.1} parent=1 // pred_check
      _
    $region3: #{tpu_custom_call.1} parent=1 // pred_check_branch
      %13 = sbr.rel (0) target = $region5
    $region4: #{tpu_custom_call.1} parent=1 // pred_region
      _
    $region5: #{tpu_custom_call.1} parent=1 // pred_fallthru
      _
    // Predicated region
    $region6: #{tpu_custom_call.1} parent=1 // pred_check
      _
    $region7: #{tpu_custom_call.1} parent=1 // pred_check_branch
      %15 = sbr.rel (0) target = $region9
    $region8: #{tpu_custom_call.1} parent=1 // pred_region
      %s17 = ssub.s32 6272, 6272
      %18 = vsyncadd [#allocation3], %s17
      %s19 = sshll.u32 [#allocation2], 4
      %s20 = int_to_ptr.vmem [resolvable:$true] %s19
      %25 = dma.hbm_to_vmem [thread:$0]  %s1, 6272, %s20, [#allocation3], 64, 64, 4
    $region9: #{tpu_custom_call.1} parent=1 // pred_fallthru
      _
    // Predicated region
    $region10: #{tpu_custom_call.1} parent=1 // pred_check
      _
    $region11: #{tpu_custom_call.1} parent=1 // pred_check_branch
      %27 = sbr.rel (0) target = $region13
    $region12: #{tpu_custom_call.1} parent=1 // pred_region
      _
    $region13: #{tpu_custom_call.1} parent=1 // pred_fallthru
      _
    // Predicated region
    $region14: #{tpu_custom_call.1} parent=1 // pred_check
      _
    $region15: #{tpu_custom_call.1} parent=1 // pred_check_branch
      %29 = sbr.rel (0) target = $region17
    $region16: #{tpu_custom_call.1} parent=1 // pred_region
      _
    $region17: #{tpu_custom_call.1} parent=1 // pred_fallthru
      _
    // Predicated region
    $region18: #{tpu_custom_call.1} parent=1 // pred_check
      _
    $region19: #{tpu_custom_call.1} parent=1 // pred_check_branch
      %31 = sbr.rel (0) target = $region21
    $region20: #{tpu_custom_call.1} parent=1 // pred_region
      _
    $region21: #{tpu_custom_call.1} parent=1 // pred_fallthru
      _
    // Predicated region
    $region22: #{tpu_custom_call.1} parent=1 // pred_check
      _
    $region23: #{tpu_custom_call.1} parent=1 // pred_check_branch
      %33 = sbr.rel (0) target = $region25
    $region24: #{tpu_custom_call.1} parent=1 // pred_region
      %34 = dma.done [#allocation3], 6272
    $region25: #{tpu_custom_call.1} parent=1 // pred_fallthru
      _
    %v36 = vld [vmem:[%s0] sm:$0xff]
    %v37 = vld [vmem:[%s0 + $0x8] sm:$0x3f]
    %v38 = vld [vmem:[%s0 + $0xe] sm:$0xff]
    %v39 = vld [vmem:[%s0 + $0x16] sm:$0x3f]
    %v40 = vld [vmem:[%s0 + $0x1c] sm:$0xff]
    %v41 = vld [vmem:[%s0 + $0x24] sm:$0x3f]
    %v42 = vld [vmem:[%s0 + $0x2a] sm:$0xff]
    %v43 = vld [vmem:[%s0 + $0x32] sm:$0x3f]
    %v44 = vld [vmem:[%s0 + $0x38] sm:$0xff]
    %v45 = vld [vmem:[%s0 + $0x40] sm:$0x3f]
    %v46 = vld [vmem:[%s0 + $0x46] sm:$0xff]
    %v47 = vld [vmem:[%s0 + $0x4e] sm:$0x3f]
    %v48 = vld [vmem:[%s0 + $0x54] sm:$0xff]
    %v49 = vld [vmem:[%s0 + $0x5c] sm:$0x3f]
    %v50 = vld [vmem:[%s0 + $0x62] sm:$0xff]
    %v51 = vld [vmem:[%s0 + $0x6a] sm:$0x3f]
    %v52 = vld [vmem:[%s0 + $0x70] sm:$0xff]
    %v53 = vld [vmem:[%s0 + $0x78] sm:$0x3f]
    %v54 = vld [vmem:[%s0 + $0x7e] sm:$0xff]
    %v55 = vld [vmem:[%s0 + $0x86] sm:$0x3f]
    %v56 = vld [vmem:[%s0 + $0x8c] sm:$0xff]
    %v57 = vld [vmem:[%s0 + $0x94] sm:$0x3f]
    %v58 = vld [vmem:[%s0 + $0x9a] sm:$0xff]
    %v59 = vld [vmem:[%s0 + $0xa2] sm:$0x3f]
    %v60 = vld [vmem:[%s0 + $0xa8] sm:$0xff]
    %v61 = vld [vmem:[%s0 + $0xb0] sm:$0x3f]
    %v62 = vld [vmem:[%s0 + $0xb6] sm:$0xff]
    %v63 = vld [vmem:[%s0 + $0xbe] sm:$0x3f]
    %v64 = vld [vmem:[%s0 + $0xc4] sm:$0xff]
    %v65 = vld [vmem:[%s0 + $0xcc] sm:$0x3f]
    %v66 = vld [vmem:[%s0 + $0xd2] sm:$0xff]
    %v67 = vld [vmem:[%s0 + $0xda] sm:$0x3f]
    %v68 = vld [vmem:[%s0 + $0xe0] sm:$0xff]
    %v69 = vld [vmem:[%s0 + $0xe8] sm:$0x3f]
    %v70 = vld [vmem:[%s0 + $0xee] sm:$0xff]
    %v71 = vld [vmem:[%s0 + $0xf6] sm:$0x3f]
    %v72 = vld [vmem:[%s0 + $0xfc] sm:$0xff]
    %v73 = vld [vmem:[%s0 + $0x104] sm:$0x3f]
    %v74 = vld [vmem:[%s0 + $0x10a] sm:$0xff]
    %v75 = vld [vmem:[%s0 + $0x112] sm:$0x3f]
    %v76 = vld [vmem:[%s0 + $0x118] sm:$0xff]
    %v77 = vld [vmem:[%s0 + $0x120] sm:$0x3f]
    %v78 = vld [vmem:[%s0 + $0x126] sm:$0xff]
    %v79 = vld [vmem:[%s0 + $0x12e] sm:$0x3f]
    %v80 = vld [vmem:[%s0 + $0x134] sm:$0xff]
    %v81 = vld [vmem:[%s0 + $0x13c] sm:$0x3f]
    %v82 = vld [vmem:[%s0 + $0x142] sm:$0xff]
    %v83 = vld [vmem:[%s0 + $0x14a] sm:$0x3f]
    %v84 = vld [vmem:[%s0 + $0x150] sm:$0xff]
    %v85 = vld [vmem:[%s0 + $0x158] sm:$0x3f]
    %v86 = vld [vmem:[%s0 + $0x15e] sm:$0xff]
    %v87 = vld [vmem:[%s0 + $0x166] sm:$0x3f]
    %v88 = vld [vmem:[%s0 + $0x16c] sm:$0xff]
    %v89 = vld [vmem:[%s0 + $0x174] sm:$0x3f]
    %v90 = vld [vmem:[%s0 + $0x17a] sm:$0xff]
    %v91 = vld [vmem:[%s0 + $0x182] sm:$0x3f]
    %v92 = vld [vmem:[%s0 + $0x188] sm:$0xff]
    %v93 = vld [vmem:[%s0 + $0x190] sm:$0x3f]
    %v94 = vld [vmem:[%s0 + $0x196] sm:$0xff]
    %v95 = vld [vmem:[%s0 + $0x19e] sm:$0x3f]
    %v96 = vld [vmem:[%s0 + $0x1a4] sm:$0xff]
    %v97 = vld [vmem:[%s0 + $0x1ac] sm:$0x3f]
    %v98 = vld [vmem:[%s0 + $0x1b2] sm:$0xff]
    %v99 = vld [vmem:[%s0 + $0x1ba] sm:$0x3f]
    %v100 = vld [vmem:[%s0 + $0x1c0] sm:$0xff]
    %v101 = vld [vmem:[%s0 + $0x1c8] sm:$0x3f]
    %v102 = vld [vmem:[%s0 + $0x1ce] sm:$0xff]
    %v103 = vld [vmem:[%s0 + $0x1d6] sm:$0x3f]
    %v104 = vld [vmem:[%s0 + $0x1dc] sm:$0xff]
    %v105 = vld [vmem:[%s0 + $0x1e4] sm:$0x3f]
    %v106 = vld [vmem:[%s0 + $0x1ea] sm:$0xff]
    %v107 = vld [vmem:[%s0 + $0x1f2] sm:$0x3f]
    %v108 = vld [vmem:[%s0 + $0x1f8] sm:$0xff]
    %v109 = vld [vmem:[%s0 + $0x200] sm:$0x3f]
    %v110 = vld [vmem:[%s0 + $0x206] sm:$0xff]
    %v111 = vld [vmem:[%s0 + $0x20e] sm:$0x3f]
    %v112 = vld [vmem:[%s0 + $0x214] sm:$0xff]
    %v113 = vld [vmem:[%s0 + $0x21c] sm:$0x3f]
    %v114 = vld [vmem:[%s0 + $0x222] sm:$0xff]
    %v115 = vld [vmem:[%s0 + $0x22a] sm:$0x3f]
    %v116 = vld [vmem:[%s0 + $0x230] sm:$0xff]
    %v117 = vld [vmem:[%s0 + $0x238] sm:$0x3f]
    %v118 = vld [vmem:[%s0 + $0x23e] sm:$0xff]
    %v119 = vld [vmem:[%s0 + $0x246] sm:$0x3f]
    %v120 = vld [vmem:[%s0 + $0x24c] sm:$0xff]
    %v121 = vld [vmem:[%s0 + $0x254] sm:$0x3f]
    %v122 = vld [vmem:[%s0 + $0x25a] sm:$0xff]
    %v123 = vld [vmem:[%s0 + $0x262] sm:$0x3f]
    %v124 = vld [vmem:[%s0 + $0x268] sm:$0xff]
    %v125 = vld [vmem:[%s0 + $0x270] sm:$0x3f]
    %v126 = vld [vmem:[%s0 + $0x276] sm:$0xff]
    %v127 = vld [vmem:[%s0 + $0x27e] sm:$0x3f]
    %v128 = vld [vmem:[%s0 + $0x284] sm:$0xff]
    %v129 = vld [vmem:[%s0 + $0x28c] sm:$0x3f]
    %v130 = vld [vmem:[%s0 + $0x292] sm:$0xff]
    %v131 = vld [vmem:[%s0 + $0x29a] sm:$0x3f]
    %v132 = vld [vmem:[%s0 + $0x2a0] sm:$0xff]
    %v133 = vld [vmem:[%s0 + $0x2a8] sm:$0x3f]
    %v134 = vld [vmem:[%s0 + $0x2ae] sm:$0xff]
    %v135 = vld [vmem:[%s0 + $0x2b6] sm:$0x3f]
    %v136 = vld [vmem:[%s0 + $0x2bc] sm:$0xff]
    %v137 = vld [vmem:[%s0 + $0x2c4] sm:$0x3f]
    %v138 = vld [vmem:[%s0 + $0x2ca] sm:$0xff]
    %v139 = vld [vmem:[%s0 + $0x2d2] sm:$0x3f]
    %v140 = vld [vmem:[%s0 + $0x2d8] sm:$0xff]
    %v141 = vld [vmem:[%s0 + $0x2e0] sm:$0x3f]
    %v142 = vld [vmem:[%s0 + $0x2e6] sm:$0xff]
    %v143 = vld [vmem:[%s0 + $0x2ee] sm:$0x3f]
    %v144 = vld [vmem:[%s0 + $0x2f4] sm:$0xff]
    %v145 = vld [vmem:[%s0 + $0x2fc] sm:$0x3f]
    %v146 = vld [vmem:[%s0 + $0x302] sm:$0xff]
    %v147 = vld [vmem:[%s0 + $0x30a] sm:$0x3f]
    %v148 = vld [vmem:[%s0 + $0x310] sm:$0xff]
    %v149 = vld [vmem:[%s0 + $0x318] sm:$0x3f]
    %v150 = vld [vmem:[%s0 + $0x31e] sm:$0xff]
    %v151 = vld [vmem:[%s0 + $0x326] sm:$0x3f]
    %v152 = vld [vmem:[%s0 + $0x32c] sm:$0xff]
    %v153 = vld [vmem:[%s0 + $0x334] sm:$0x3f]
    %v154 = vld [vmem:[%s0 + $0x33a] sm:$0xff]
    %v155 = vld [vmem:[%s0 + $0x342] sm:$0x3f]
    %v156 = vld [vmem:[%s0 + $0x348] sm:$0xff]
    %v157 = vld [vmem:[%s0 + $0x350] sm:$0x3f]
    %v158 = vld [vmem:[%s0 + $0x356] sm:$0xff]
    %v159 = vld [vmem:[%s0 + $0x35e] sm:$0x3f]
    %v160 = vld [vmem:[%s0 + $0x364] sm:$0xff]
    %v161 = vld [vmem:[%s0 + $0x36c] sm:$0x3f]
    %v162 = vld [vmem:[%s0 + $0x372] sm:$0xff]
    %v163 = vld [vmem:[%s0 + $0x37a] sm:$0x3f]
    %v164 = vld [vmem:[%s0 + $0x380] sm:$0xff]
    %v165 = vld [vmem:[%s0 + $0x388] sm:$0x3f]
    %v166 = vld [vmem:[%s0 + $0x38e] sm:$0xff]
    %v167 = vld [vmem:[%s0 + $0x396] sm:$0x3f]
    %v168 = vld [vmem:[%s0 + $0x39c] sm:$0xff]
    %v169 = vld [vmem:[%s0 + $0x3a4] sm:$0x3f]
    %v170 = vld [vmem:[%s0 + $0x3aa] sm:$0xff]
    %v171 = vld [vmem:[%s0 + $0x3b2] sm:$0x3f]
    %v172 = vld [vmem:[%s0 + $0x3b8] sm:$0xff]
    %v173 = vld [vmem:[%s0 + $0x3c0] sm:$0x3f]
    %v174 = vld [vmem:[%s0 + $0x3c6] sm:$0xff]
    %v175 = vld [vmem:[%s0 + $0x3ce] sm:$0x3f]
    %v176 = vld [vmem:[%s0 + $0x3d4] sm:$0xff]
    %v177 = vld [vmem:[%s0 + $0x3dc] sm:$0x3f]
    %v178 = vld [vmem:[%s0 + $0x3e2] sm:$0xff]
    %v179 = vld [vmem:[%s0 + $0x3ea] sm:$0x3f]
    %v180 = vld [vmem:[%s0 + $0x3f0] sm:$0xff]
    %v181 = vld [vmem:[%s0 + $0x3f8] sm:$0x3f]
    %v182 = vld [vmem:[%s0 + $0x3fe] sm:$0xff]
    %v183 = vld [vmem:[%s0 + $0x406] sm:$0x3f]
    %v184 = vld [vmem:[%s0 + $0x40c] sm:$0xff]
    %v185 = vld [vmem:[%s0 + $0x414] sm:$0x3f]
    %v186 = vld [vmem:[%s0 + $0x41a] sm:$0xff]
    %v187 = vld [vmem:[%s0 + $0x422] sm:$0x3f]
    %v188 = vld [vmem:[%s0 + $0x428] sm:$0xff]
    %v189 = vld [vmem:[%s0 + $0x430] sm:$0x3f]
    %v190 = vld [vmem:[%s0 + $0x436] sm:$0xff]
    %v191 = vld [vmem:[%s0 + $0x43e] sm:$0x3f]
    %v192 = vld [vmem:[%s0 + $0x444] sm:$0xff]
    %v193 = vld [vmem:[%s0 + $0x44c] sm:$0x3f]
    %v194 = vld [vmem:[%s0 + $0x452] sm:$0xff]
    %v195 = vld [vmem:[%s0 + $0x45a] sm:$0x3f]
    %v196 = vld [vmem:[%s0 + $0x460] sm:$0xff]
    %v197 = vld [vmem:[%s0 + $0x468] sm:$0x3f]
    %v198 = vld [vmem:[%s0 + $0x46e] sm:$0xff]
    %v199 = vld [vmem:[%s0 + $0x476] sm:$0x3f]
    %v200 = vld [vmem:[%s0 + $0x47c] sm:$0xff]
    %v201 = vld [vmem:[%s0 + $0x484] sm:$0x3f]
    %v202 = vld [vmem:[%s0 + $0x48a] sm:$0xff]
    %v203 = vld [vmem:[%s0 + $0x492] sm:$0x3f]
    %v204 = vld [vmem:[%s0 + $0x498] sm:$0xff]
    %v205 = vld [vmem:[%s0 + $0x4a0] sm:$0x3f]
    %v206 = vld [vmem:[%s0 + $0x4a6] sm:$0xff]
    %v207 = vld [vmem:[%s0 + $0x4ae] sm:$0x3f]
    %v208 = vld [vmem:[%s0 + $0x4b4] sm:$0xff]
    %v209 = vld [vmem:[%s0 + $0x4bc] sm:$0x3f]
    %v210 = vld [vmem:[%s0 + $0x4c2] sm:$0xff]
    %v211 = vld [vmem:[%s0 + $0x4ca] sm:$0x3f]
    %v212 = vld [vmem:[%s0 + $0x4d0] sm:$0xff]
    %v213 = vld [vmem:[%s0 + $0x4d8] sm:$0x3f]
    %v214 = vld [vmem:[%s0 + $0x4de] sm:$0xff]
    %v215 = vld [vmem:[%s0 + $0x4e6] sm:$0x3f]
    %v216 = vld [vmem:[%s0 + $0x4ec] sm:$0xff]
    %v217 = vld [vmem:[%s0 + $0x4f4] sm:$0x3f]
    %v218 = vld [vmem:[%s0 + $0x4fa] sm:$0xff]
    %v219 = vld [vmem:[%s0 + $0x502] sm:$0x3f]
    %v220 = vld [vmem:[%s0 + $0x508] sm:$0xff]
    %v221 = vld [vmem:[%s0 + $0x510] sm:$0x3f]
    %v222 = vld [vmem:[%s0 + $0x516] sm:$0xff]
    %v223 = vld [vmem:[%s0 + $0x51e] sm:$0x3f]
    %v224 = vld [vmem:[%s0 + $0x524] sm:$0xff]
    %v225 = vld [vmem:[%s0 + $0x52c] sm:$0x3f]
    %v226 = vld [vmem:[%s0 + $0x532] sm:$0xff]
    %v227 = vld [vmem:[%s0 + $0x53a] sm:$0x3f]
    %v228 = vld [vmem:[%s0 + $0x540] sm:$0xff]
    %v229 = vld [vmem:[%s0 + $0x548] sm:$0x3f]
    %v230 = vld [vmem:[%s0 + $0x54e] sm:$0xff]
    %v231 = vld [vmem:[%s0 + $0x556] sm:$0x3f]
    %v232 = vld [vmem:[%s0 + $0x55c] sm:$0xff]
    %v233 = vld [vmem:[%s0 + $0x564] sm:$0x3f]
    %v234 = vld [vmem:[%s0 + $0x56a] sm:$0xff]
    %v235 = vld [vmem:[%s0 + $0x572] sm:$0x3f]
    %v236 = vld [vmem:[%s0 + $0x578] sm:$0xff]
    %v237 = vld [vmem:[%s0 + $0x580] sm:$0x3f]
    %v238 = vld [vmem:[%s0 + $0x586] sm:$0xff]
    %v239 = vld [vmem:[%s0 + $0x58e] sm:$0x3f]
    %v240 = vld [vmem:[%s0 + $0x594] sm:$0xff]
    %v241 = vld [vmem:[%s0 + $0x59c] sm:$0x3f]
    %v242 = vld [vmem:[%s0 + $0x5a2] sm:$0xff]
    %v243 = vld [vmem:[%s0 + $0x5aa] sm:$0x3f]
    %v244 = vld [vmem:[%s0 + $0x5b0] sm:$0xff]
    %v245 = vld [vmem:[%s0 + $0x5b8] sm:$0x3f]
    %v246 = vld [vmem:[%s0 + $0x5be] sm:$0xff]
    %v247 = vld [vmem:[%s0 + $0x5c6] sm:$0x3f]
    %v248 = vld [vmem:[%s0 + $0x5cc] sm:$0xff]
    %v249 = vld [vmem:[%s0 + $0x5d4] sm:$0x3f]
    %v250 = vld [vmem:[%s0 + $0x5da] sm:$0xff]
    %v251 = vld [vmem:[%s0 + $0x5e2] sm:$0x3f]
    %v252 = vld [vmem:[%s0 + $0x5e8] sm:$0xff]
    %v253 = vld [vmem:[%s0 + $0x5f0] sm:$0x3f]
    %v254 = vld [vmem:[%s0 + $0x5f6] sm:$0xff]
    %v255 = vld [vmem:[%s0 + $0x5fe] sm:$0x3f]
    %v256 = vld [vmem:[%s0 + $0x604] sm:$0xff]
    %v257 = vld [vmem:[%s0 + $0x60c] sm:$0x3f]
    %v258 = vld [vmem:[%s0 + $0x612] sm:$0xff]
    %v259 = vld [vmem:[%s0 + $0x61a] sm:$0x3f]
    %v260 = vld [vmem:[%s0 + $0x620] sm:$0xff]
    %v261 = vld [vmem:[%s0 + $0x628] sm:$0x3f]
    %v262 = vld [vmem:[%s0 + $0x62e] sm:$0xff]
    %v263 = vld [vmem:[%s0 + $0x636] sm:$0x3f]
    %v264 = vld [vmem:[%s0 + $0x63c] sm:$0xff]
    %v265 = vld [vmem:[%s0 + $0x644] sm:$0x3f]
    %v266 = vld [vmem:[%s0 + $0x64a] sm:$0xff]
    %v267 = vld [vmem:[%s0 + $0x652] sm:$0x3f]
    %v268 = vld [vmem:[%s0 + $0x658] sm:$0xff]
    %v269 = vld [vmem:[%s0 + $0x660] sm:$0x3f]
    %v270 = vld [vmem:[%s0 + $0x666] sm:$0xff]
    %v271 = vld [vmem:[%s0 + $0x66e] sm:$0x3f]
    %v272 = vld [vmem:[%s0 + $0x674] sm:$0xff]
    %v273 = vld [vmem:[%s0 + $0x67c] sm:$0x3f]
    %v274 = vld [vmem:[%s0 + $0x682] sm:$0xff]
    %v275 = vld [vmem:[%s0 + $0x68a] sm:$0x3f]
    %v276 = vld [vmem:[%s0 + $0x690] sm:$0xff]
    %v277 = vld [vmem:[%s0 + $0x698] sm:$0x3f]
    %v278 = vld [vmem:[%s0 + $0x69e] sm:$0xff]
    %v279 = vld [vmem:[%s0 + $0x6a6] sm:$0x3f]
    %v280 = vld [vmem:[%s0 + $0x6ac] sm:$0xff]
    %v281 = vld [vmem:[%s0 + $0x6b4] sm:$0x3f]
    %v282 = vld [vmem:[%s0 + $0x6ba] sm:$0xff]
    %v283 = vld [vmem:[%s0 + $0x6c2] sm:$0x3f]
    %v284 = vld [vmem:[%s0 + $0x6c8] sm:$0xff]
    %v285 = vld [vmem:[%s0 + $0x6d0] sm:$0x3f]
    %v286 = vld [vmem:[%s0 + $0x6d6] sm:$0xff]
    %v287 = vld [vmem:[%s0 + $0x6de] sm:$0x3f]
    %v288 = vld [vmem:[%s0 + $0x6e4] sm:$0xff]
    %v289 = vld [vmem:[%s0 + $0x6ec] sm:$0x3f]
    %v290 = vld [vmem:[%s0 + $0x6f2] sm:$0xff]
    %v291 = vld [vmem:[%s0 + $0x6fa] sm:$0x3f]
    %v548 = vcombine.low %v36, %v38
    %v549 = vcombine.high %v36, %v38
    %v550 = vcombine.low %v40, %v42
    %v551 = vcombine.high %v40, %v42
    %v553 = vunpack.c.l.s4 1983009808
    %v554 = vunpack.c.0.s8 %v553
    %v555 = vlaneseq
    %v556 = vshrl.u32 %v555, 7
    %v557 = vsub.s32 %v554, %v556
    %v558 = vrot.slane %v548, %v557
    %v560 = vunpack.c.l.s4 1983009808
    %v561 = vunpack.c.0.s8 %v560
    %v562 = vlaneseq
    %v563 = vshrl.u32 %v562, 7
    %v564 = vsub.s32 %v561, %v563
    %v565 = vrot.slane %v549, %v564
    %v567 = vunpack.c.l.s4 1983009808
    %v568 = vunpack.c.0.s8 %v567
    %v569 = vlaneseq
    %v570 = vshrl.u32 %v569, 7
    %v571 = vsub.s32 %v568, %v570
    %v572 = vrot.slane %v550, %v571
    %v574 = vunpack.c.l.s4 1983009808
    %v575 = vunpack.c.0.s8 %v574
    %v576 = vlaneseq
    %v577 = vshrl.u32 %v576, 7
    %v578 = vsub.s32 %v575, %v577
    %v579 = vrot.slane %v551, %v578
    %v580 = vcombine.low %v558, %v572
    %v581 = vcombine.high %v558, %v572
    %v582 = vcombine.low %v565, %v579
    %v583 = vcombine.high %v565, %v579
    %v584 = vcombine.low %v37, %v39
    %v585 = vcombine.high %v37, %v39
    %v586 = vcombine.low %v41, %v43
    %v587 = vcombine.high %v41, %v43
    %v589 = vunpack.c.l.s4 1983009808
    %v590 = vunpack.c.0.s8 %v589
    %v591 = vlaneseq
    %v592 = vshrl.u32 %v591, 7
    %v593 = vsub.s32 %v590, %v592
    %v594 = vrot.slane %v584, %v593
    %v596 = vunpack.c.l.s4 1983009808
    %v597 = vunpack.c.0.s8 %v596
    %v598 = vlaneseq
    %v599 = vshrl.u32 %v598, 7
    %v600 = vsub.s32 %v597, %v599
    %v601 = vrot.slane %v585, %v600
    %v603 = vunpack.c.l.s4 1983009808
    %v604 = vunpack.c.0.s8 %v603
    %v605 = vlaneseq
    %v606 = vshrl.u32 %v605, 7
    %v607 = vsub.s32 %v604, %v606
    %v608 = vrot.slane %v586, %v607
    %v610 = vunpack.c.l.s4 1983009808
    %v611 = vunpack.c.0.s8 %v610
    %v612 = vlaneseq
    %v613 = vshrl.u32 %v612, 7
    %v614 = vsub.s32 %v611, %v613
    %v615 = vrot.slane %v587, %v614
    %v616 = vcombine.low %v594, %v608
    %v617 = vcombine.high %v594, %v608
    %v618 = vcombine.low %v601, %v615
    %v619 = vcombine.low %v44, %v46
    %v620 = vcombine.high %v44, %v46
    %v621 = vcombine.low %v48, %v50
    %v622 = vcombine.high %v48, %v50
    %v624 = vunpack.c.l.s4 1983009808
    %v625 = vunpack.c.0.s8 %v624
    %v626 = vlaneseq
    %v627 = vshrl.u32 %v626, 7
    %v628 = vsub.s32 %v625, %v627
    %v629 = vrot.slane %v619, %v628
    %v631 = vunpack.c.l.s4 1983009808
    %v632 = vunpack.c.0.s8 %v631
    %v633 = vlaneseq
    %v634 = vshrl.u32 %v633, 7
    %v635 = vsub.s32 %v632, %v634
    %v636 = vrot.slane %v620, %v635
    %v638 = vunpack.c.l.s4 1983009808
    %v639 = vunpack.c.0.s8 %v638
    %v640 = vlaneseq
    %v641 = vshrl.u32 %v640, 7
    %v642 = vsub.s32 %v639, %v641
    %v643 = vrot.slane %v621, %v642
    %v645 = vunpack.c.l.s4 1983009808
    %v646 = vunpack.c.0.s8 %v645
    %v647 = vlaneseq
    %v648 = vshrl.u32 %v647, 7
    %v649 = vsub.s32 %v646, %v648
    %v650 = vrot.slane %v622, %v649
    %v651 = vcombine.low %v629, %v643
    %v652 = vcombine.high %v629, %v643
    %v653 = vcombine.low %v636, %v650
    %v654 = vcombine.high %v636, %v650
    %v655 = vcombine.low %v45, %v47
    %v656 = vcombine.high %v45, %v47
    %v657 = vcombine.low %v49, %v51
    %v658 = vcombine.high %v49, %v51
    %v660 = vunpack.c.l.s4 1983009808
    %v661 = vunpack.c.0.s8 %v660
    %v662 = vlaneseq
    %v663 = vshrl.u32 %v662, 7
    %v664 = vsub.s32 %v661, %v663
    %v665 = vrot.slane %v655, %v664
    %v667 = vunpack.c.l.s4 1983009808
    %v668 = vunpack.c.0.s8 %v667
    %v669 = vlaneseq
    %v670 = vshrl.u32 %v669, 7
    %v671 = vsub.s32 %v668, %v670
    %v672 = vrot.slane %v656, %v671
    %v674 = vunpack.c.l.s4 1983009808
    %v675 = vunpack.c.0.s8 %v674
    %v676 = vlaneseq
    %v677 = vshrl.u32 %v676, 7
    %v678 = vsub.s32 %v675, %v677
    %v679 = vrot.slane %v657, %v678
    %v681 = vunpack.c.l.s4 1983009808
    %v682 = vunpack.c.0.s8 %v681
    %v683 = vlaneseq
    %v684 = vshrl.u32 %v683, 7
    %v685 = vsub.s32 %v682, %v684
    %v686 = vrot.slane %v658, %v685
    %v687 = vcombine.low %v665, %v679
    %v688 = vcombine.high %v665, %v679
    %v689 = vcombine.low %v672, %v686
    %v690 = vcombine.low %v52, %v54
    %v691 = vcombine.high %v52, %v54
    %v692 = vcombine.low %v56, %v58
    %v693 = vcombine.high %v56, %v58
    %v695 = vunpack.c.l.s4 1983009808
    %v696 = vunpack.c.0.s8 %v695
    %v697 = vlaneseq
    %v698 = vshrl.u32 %v697, 7
    %v699 = vsub.s32 %v696, %v698
    %v700 = vrot.slane %v690, %v699
    %v702 = vunpack.c.l.s4 1983009808
    %v703 = vunpack.c.0.s8 %v702
    %v704 = vlaneseq
    %v705 = vshrl.u32 %v704, 7
    %v706 = vsub.s32 %v703, %v705
    %v707 = vrot.slane %v691, %v706
    %v709 = vunpack.c.l.s4 1983009808
    %v710 = vunpack.c.0.s8 %v709
    %v711 = vlaneseq
    %v712 = vshrl.u32 %v711, 7
    %v713 = vsub.s32 %v710, %v712
    %v714 = vrot.slane %v692, %v713
    %v716 = vunpack.c.l.s4 1983009808
    %v717 = vunpack.c.0.s8 %v716
    %v718 = vlaneseq
    %v719 = vshrl.u32 %v718, 7
    %v720 = vsub.s32 %v717, %v719
    %v721 = vrot.slane %v693, %v720
    %v722 = vcombine.low %v700, %v714
    %v723 = vcombine.high %v700, %v714
    %v724 = vcombine.low %v707, %v721
    %v725 = vcombine.high %v707, %v721
    %v726 = vcombine.low %v53, %v55
    %v727 = vcombine.high %v53, %v55
    %v728 = vcombine.low %v57, %v59
    %v729 = vcombine.high %v57, %v59
    %v731 = vunpack.c.l.s4 1983009808
    %v732 = vunpack.c.0.s8 %v731
    %v733 = vlaneseq
    %v734 = vshrl.u32 %v733, 7
    %v735 = vsub.s32 %v732, %v734
    %v736 = vrot.slane %v726, %v735
    %v738 = vunpack.c.l.s4 1983009808
    %v739 = vunpack.c.0.s8 %v738
    %v740 = vlaneseq
    %v741 = vshrl.u32 %v740, 7
    %v742 = vsub.s32 %v739, %v741
    %v743 = vrot.slane %v727, %v742
    %v745 = vunpack.c.l.s4 1983009808
    %v746 = vunpack.c.0.s8 %v745
    %v747 = vlaneseq
    %v748 = vshrl.u32 %v747, 7
    %v749 = vsub.s32 %v746, %v748
    %v750 = vrot.slane %v728, %v749
    %v752 = vunpack.c.l.s4 1983009808
    %v753 = vunpack.c.0.s8 %v752
    %v754 = vlaneseq
    %v755 = vshrl.u32 %v754, 7
    %v756 = vsub.s32 %v753, %v755
    %v757 = vrot.slane %v729, %v756
    %v758 = vcombine.low %v736, %v750
    %v759 = vcombine.high %v736, %v750
    %v760 = vcombine.low %v743, %v757
    %v761 = vcombine.low %v60, %v62
    %v762 = vcombine.high %v60, %v62
    %v763 = vcombine.low %v64, %v66
    %v764 = vcombine.high %v64, %v66
    %v766 = vunpack.c.l.s4 1983009808
    %v767 = vunpack.c.0.s8 %v766
    %v768 = vlaneseq
    %v769 = vshrl.u32 %v768, 7
    %v770 = vsub.s32 %v767, %v769
    %v771 = vrot.slane %v761, %v770
    %v773 = vunpack.c.l.s4 1983009808
    %v774 = vunpack.c.0.s8 %v773
    %v775 = vlaneseq
    %v776 = vshrl.u32 %v775, 7
    %v777 = vsub.s32 %v774, %v776
    %v778 = vrot.slane %v762, %v777
    %v780 = vunpack.c.l.s4 1983009808
    %v781 = vunpack.c.0.s8 %v780
    %v782 = vlaneseq
    %v783 = vshrl.u32 %v782, 7
    %v784 = vsub.s32 %v781, %v783
    %v785 = vrot.slane %v763, %v784
    %v787 = vunpack.c.l.s4 1983009808
    %v788 = vunpack.c.0.s8 %v787
    %v789 = vlaneseq
    %v790 = vshrl.u32 %v789, 7
    %v791 = vsub.s32 %v788, %v790
    %v792 = vrot.slane %v764, %v791
    %v793 = vcombine.low %v771, %v785
    %v794 = vcombine.high %v771, %v785
    %v795 = vcombine.low %v778, %v792
    %v796 = vcombine.high %v778, %v792
    %v797 = vcombine.low %v61, %v63
    %v798 = vcombine.high %v61, %v63
    %v799 = vcombine.low %v65, %v67
    %v800 = vcombine.high %v65, %v67
    %v802 = vunpack.c.l.s4 1983009808
    %v803 = vunpack.c.0.s8 %v802
    %v804 = vlaneseq
    %v805 = vshrl.u32 %v804, 7
    %v806 = vsub.s32 %v803, %v805
    %v807 = vrot.slane %v797, %v806
    %v809 = vunpack.c.l.s4 1983009808
    %v810 = vunpack.c.0.s8 %v809
    %v811 = vlaneseq
    %v812 = vshrl.u32 %v811, 7
    %v813 = vsub.s32 %v810, %v812
    %v814 = vrot.slane %v798, %v813
    %v816 = vunpack.c.l.s4 1983009808
    %v817 = vunpack.c.0.s8 %v816
    %v818 = vlaneseq
    %v819 = vshrl.u32 %v818, 7
    %v820 = vsub.s32 %v817, %v819
    %v821 = vrot.slane %v799, %v820
    %v823 = vunpack.c.l.s4 1983009808
    %v824 = vunpack.c.0.s8 %v823
    %v825 = vlaneseq
    %v826 = vshrl.u32 %v825, 7
    %v827 = vsub.s32 %v824, %v826
    %v828 = vrot.slane %v800, %v827
    %v829 = vcombine.low %v807, %v821
    %v830 = vcombine.high %v807, %v821
    %v831 = vcombine.low %v814, %v828
    %v832 = vcombine.low %v68, %v70
    %v833 = vcombine.high %v68, %v70
    %v834 = vcombine.low %v72, %v74
    %v835 = vcombine.high %v72, %v74
    %v837 = vunpack.c.l.s4 1983009808
    %v838 = vunpack.c.0.s8 %v837
    %v839 = vlaneseq
    %v840 = vshrl.u32 %v839, 7
    %v841 = vsub.s32 %v838, %v840
    %v842 = vrot.slane %v832, %v841
    %v844 = vunpack.c.l.s4 1983009808
    %v845 = vunpack.c.0.s8 %v844
    %v846 = vlaneseq
    %v847 = vshrl.u32 %v846, 7
    %v848 = vsub.s32 %v845, %v847
    %v849 = vrot.slane %v833, %v848
    %v851 = vunpack.c.l.s4 1983009808
    %v852 = vunpack.c.0.s8 %v851
    %v853 = vlaneseq
    %v854 = vshrl.u32 %v853, 7
    %v855 = vsub.s32 %v852, %v854
    %v856 = vrot.slane %v834, %v855
    %v858 = vunpack.c.l.s4 1983009808
    %v859 = vunpack.c.0.s8 %v858
    %v860 = vlaneseq
    %v861 = vshrl.u32 %v860, 7
    %v862 = vsub.s32 %v859, %v861
    %v863 = vrot.slane %v835, %v862
    %v864 = vcombine.low %v842, %v856
    %v865 = vcombine.high %v842, %v856
    %v866 = vcombine.low %v849, %v863
    %v867 = vcombine.high %v849, %v863
    %v868 = vcombine.low %v69, %v71
    %v869 = vcombine.high %v69, %v71
    %v870 = vcombine.low %v73, %v75
    %v871 = vcombine.high %v73, %v75
    %v873 = vunpack.c.l.s4 1983009808
    %v874 = vunpack.c.0.s8 %v873
    %v875 = vlaneseq
    %v876 = vshrl.u32 %v875, 7
    %v877 = vsub.s32 %v874, %v876
    %v878 = vrot.slane %v868, %v877
    %v880 = vunpack.c.l.s4 1983009808
    %v881 = vunpack.c.0.s8 %v880
    %v882 = vlaneseq
    %v883 = vshrl.u32 %v882, 7
    %v884 = vsub.s32 %v881, %v883
    %v885 = vrot.slane %v869, %v884
    %v887 = vunpack.c.l.s4 1983009808
    %v888 = vunpack.c.0.s8 %v887
    %v889 = vlaneseq
    %v890 = vshrl.u32 %v889, 7
    %v891 = vsub.s32 %v888, %v890
    %v892 = vrot.slane %v870, %v891
    %v894 = vunpack.c.l.s4 1983009808
    %v895 = vunpack.c.0.s8 %v894
    %v896 = vlaneseq
    %v897 = vshrl.u32 %v896, 7
    %v898 = vsub.s32 %v895, %v897
    %v899 = vrot.slane %v871, %v898
    %v900 = vcombine.low %v878, %v892
    %v901 = vcombine.high %v878, %v892
    %v902 = vcombine.low %v885, %v899
    %v903 = vcombine.low %v76, %v78
    %v904 = vcombine.high %v76, %v78
    %v905 = vcombine.low %v80, %v82
    %v906 = vcombine.high %v80, %v82
    %v908 = vunpack.c.l.s4 1983009808
    %v909 = vunpack.c.0.s8 %v908
    %v910 = vlaneseq
    %v911 = vshrl.u32 %v910, 7
    %v912 = vsub.s32 %v909, %v911
    %v913 = vrot.slane %v903, %v912
    %v915 = vunpack.c.l.s4 1983009808
    %v916 = vunpack.c.0.s8 %v915
    %v917 = vlaneseq
    %v918 = vshrl.u32 %v917, 7
    %v919 = vsub.s32 %v916, %v918
    %v920 = vrot.slane %v904, %v919
    %v922 = vunpack.c.l.s4 1983009808
    %v923 = vunpack.c.0.s8 %v922
    %v924 = vlaneseq
    %v925 = vshrl.u32 %v924, 7
    %v926 = vsub.s32 %v923, %v925
    %v927 = vrot.slane %v905, %v926
    %v929 = vunpack.c.l.s4 1983009808
    %v930 = vunpack.c.0.s8 %v929
    %v931 = vlaneseq
    %v932 = vshrl.u32 %v931, 7
    %v933 = vsub.s32 %v930, %v932
    %v934 = vrot.slane %v906, %v933
    %v935 = vcombine.low %v913, %v927
    %v936 = vcombine.high %v913, %v927
    %v937 = vcombine.low %v920, %v934
    %v938 = vcombine.high %v920, %v934
    %v939 = vcombine.low %v77, %v79
    %v940 = vcombine.high %v77, %v79
    %v941 = vcombine.low %v81, %v83
    %v942 = vcombine.high %v81, %v83
    %v944 = vunpack.c.l.s4 1983009808
    %v945 = vunpack.c.0.s8 %v944
    %v946 = vlaneseq
    %v947 = vshrl.u32 %v946, 7
    %v948 = vsub.s32 %v945, %v947
    %v949 = vrot.slane %v939, %v948
    %v951 = vunpack.c.l.s4 1983009808
    %v952 = vunpack.c.0.s8 %v951
    %v953 = vlaneseq
    %v954 = vshrl.u32 %v953, 7
    %v955 = vsub.s32 %v952, %v954
    %v956 = vrot.slane %v940, %v955
    %v958 = vunpack.c.l.s4 1983009808
    %v959 = vunpack.c.0.s8 %v958
    %v960 = vlaneseq
    %v961 = vshrl.u32 %v960, 7
    %v962 = vsub.s32 %v959, %v961
    %v963 = vrot.slane %v941, %v962
    %v965 = vunpack.c.l.s4 1983009808
    %v966 = vunpack.c.0.s8 %v965
    %v967 = vlaneseq
    %v968 = vshrl.u32 %v967, 7
    %v969 = vsub.s32 %v966, %v968
    %v970 = vrot.slane %v942, %v969
    %v971 = vcombine.low %v949, %v963
    %v972 = vcombine.high %v949, %v963
    %v973 = vcombine.low %v956, %v970
    %v974 = vcombine.low %v84, %v86
    %v975 = vcombine.high %v84, %v86
    %v976 = vcombine.low %v88, %v90
    %v977 = vcombine.high %v88, %v90
    %v979 = vunpack.c.l.s4 1983009808
    %v980 = vunpack.c.0.s8 %v979
    %v981 = vlaneseq
    %v982 = vshrl.u32 %v981, 7
    %v983 = vsub.s32 %v980, %v982
    %v984 = vrot.slane %v974, %v983
    %v986 = vunpack.c.l.s4 1983009808
    %v987 = vunpack.c.0.s8 %v986
    %v988 = vlaneseq
    %v989 = vshrl.u32 %v988, 7
    %v990 = vsub.s32 %v987, %v989
    %v991 = vrot.slane %v975, %v990
    %v993 = vunpack.c.l.s4 1983009808
    %v994 = vunpack.c.0.s8 %v993
    %v995 = vlaneseq
    %v996 = vshrl.u32 %v995, 7
    %v997 = vsub.s32 %v994, %v996
    %v998 = vrot.slane %v976, %v997
    %v1000 = vunpack.c.l.s4 1983009808
    %v1001 = vunpack.c.0.s8 %v1000
    %v1002 = vlaneseq
    %v1003 = vshrl.u32 %v1002, 7
    %v1004 = vsub.s32 %v1001, %v1003
    %v1005 = vrot.slane %v977, %v1004
    %v1006 = vcombine.low %v984, %v998
    %v1007 = vcombine.high %v984, %v998
    %v1008 = vcombine.low %v991, %v1005
    %v1009 = vcombine.high %v991, %v1005
    %v1010 = vcombine.low %v85, %v87
    %v1011 = vcombine.high %v85, %v87
    %v1012 = vcombine.low %v89, %v91
    %v1013 = vcombine.high %v89, %v91
    %v1015 = vunpack.c.l.s4 1983009808
    %v1016 = vunpack.c.0.s8 %v1015
    %v1017 = vlaneseq
    %v1018 = vshrl.u32 %v1017, 7
    %v1019 = vsub.s32 %v1016, %v1018
    %v1020 = vrot.slane %v1010, %v1019
    %v1022 = vunpack.c.l.s4 1983009808
    %v1023 = vunpack.c.0.s8 %v1022
    %v1024 = vlaneseq
    %v1025 = vshrl.u32 %v1024, 7
    %v1026 = vsub.s32 %v1023, %v1025
    %v1027 = vrot.slane %v1011, %v1026
    %v1029 = vunpack.c.l.s4 1983009808
    %v1030 = vunpack.c.0.s8 %v1029
    %v1031 = vlaneseq
    %v1032 = vshrl.u32 %v1031, 7
    %v1033 = vsub.s32 %v1030, %v1032
    %v1034 = vrot.slane %v1012, %v1033
    %v1036 = vunpack.c.l.s4 1983009808
    %v1037 = vunpack.c.0.s8 %v1036
    %v1038 = vlaneseq
    %v1039 = vshrl.u32 %v1038, 7
    %v1040 = vsub.s32 %v1037, %v1039
    %v1041 = vrot.slane %v1013, %v1040
    %v1042 = vcombine.low %v1020, %v1034
    %v1043 = vcombine.high %v1020, %v1034
    %v1044 = vcombine.low %v1027, %v1041
    %v1045 = vcombine.low %v92, %v94
    %v1046 = vcombine.high %v92, %v94
    %v1047 = vcombine.low %v96, %v98
    %v1048 = vcombine.high %v96, %v98
    %v1050 = vunpack.c.l.s4 1983009808
    %v1051 = vunpack.c.0.s8 %v1050
    %v1052 = vlaneseq
    %v1053 = vshrl.u32 %v1052, 7
    %v1054 = vsub.s32 %v1051, %v1053
    %v1055 = vrot.slane %v1045, %v1054
    %v1057 = vunpack.c.l.s4 1983009808
    %v1058 = vunpack.c.0.s8 %v1057
    %v1059 = vlaneseq
    %v1060 = vshrl.u32 %v1059, 7
    %v1061 = vsub.s32 %v1058, %v1060
    %v1062 = vrot.slane %v1046, %v1061
    %v1064 = vunpack.c.l.s4 1983009808
    %v1065 = vunpack.c.0.s8 %v1064
    %v1066 = vlaneseq
    %v1067 = vshrl.u32 %v1066, 7
    %v1068 = vsub.s32 %v1065, %v1067
    %v1069 = vrot.slane %v1047, %v1068
    %v1071 = vunpack.c.l.s4 1983009808
    %v1072 = vunpack.c.0.s8 %v1071
    %v1073 = vlaneseq
    %v1074 = vshrl.u32 %v1073, 7
    %v1075 = vsub.s32 %v1072, %v1074
    %v1076 = vrot.slane %v1048, %v1075
    %v1077 = vcombine.low %v1055, %v1069
    %v1078 = vcombine.high %v1055, %v1069
    %v1079 = vcombine.low %v1062, %v1076
    %v1080 = vcombine.high %v1062, %v1076
    %v1081 = vcombine.low %v93, %v95
    %v1082 = vcombine.high %v93, %v95
    %v1083 = vcombine.low %v97, %v99
    %v1084 = vcombine.high %v97, %v99
    %v1086 = vunpack.c.l.s4 1983009808
    %v1087 = vunpack.c.0.s8 %v1086
    %v1088 = vlaneseq
    %v1089 = vshrl.u32 %v1088, 7
    %v1090 = vsub.s32 %v1087, %v1089
    %v1091 = vrot.slane %v1081, %v1090
    %v1093 = vunpack.c.l.s4 1983009808
    %v1094 = vunpack.c.0.s8 %v1093
    %v1095 = vlaneseq
    %v1096 = vshrl.u32 %v1095, 7
    %v1097 = vsub.s32 %v1094, %v1096
    %v1098 = vrot.slane %v1082, %v1097
    %v1100 = vunpack.c.l.s4 1983009808
    %v1101 = vunpack.c.0.s8 %v1100
    %v1102 = vlaneseq
    %v1103 = vshrl.u32 %v1102, 7
    %v1104 = vsub.s32 %v1101, %v1103
    %v1105 = vrot.slane %v1083, %v1104
    %v1107 = vunpack.c.l.s4 1983009808
    %v1108 = vunpack.c.0.s8 %v1107
    %v1109 = vlaneseq
    %v1110 = vshrl.u32 %v1109, 7
    %v1111 = vsub.s32 %v1108, %v1110
    %v1112 = vrot.slane %v1084, %v1111
    %v1113 = vcombine.low %v1091, %v1105
    %v1114 = vcombine.high %v1091, %v1105
    %v1115 = vcombine.low %v1098, %v1112
    %v1116 = vcombine.low %v100, %v102
    %v1117 = vcombine.high %v100, %v102
    %v1118 = vcombine.low %v104, %v106
    %v1119 = vcombine.high %v104, %v106
    %v1121 = vunpack.c.l.s4 1983009808
    %v1122 = vunpack.c.0.s8 %v1121
    %v1123 = vlaneseq
    %v1124 = vshrl.u32 %v1123, 7
    %v1125 = vsub.s32 %v1122, %v1124
    %v1126 = vrot.slane %v1116, %v1125
    %v1128 = vunpack.c.l.s4 1983009808
    %v1129 = vunpack.c.0.s8 %v1128
    %v1130 = vlaneseq
    %v1131 = vshrl.u32 %v1130, 7
    %v1132 = vsub.s32 %v1129, %v1131
    %v1133 = vrot.slane %v1117, %v1132
    %v1135 = vunpack.c.l.s4 1983009808
    %v1136 = vunpack.c.0.s8 %v1135
    %v1137 = vlaneseq
    %v1138 = vshrl.u32 %v1137, 7
    %v1139 = vsub.s32 %v1136, %v1138
    %v1140 = vrot.slane %v1118, %v1139
    %v1142 = vunpack.c.l.s4 1983009808
    %v1143 = vunpack.c.0.s8 %v1142
    %v1144 = vlaneseq
    %v1145 = vshrl.u32 %v1144, 7
    %v1146 = vsub.s32 %v1143, %v1145
    %v1147 = vrot.slane %v1119, %v1146
    %v1148 = vcombine.low %v1126, %v1140
    %v1149 = vcombine.high %v1126, %v1140
    %v1150 = vcombine.low %v1133, %v1147
    %v1151 = vcombine.high %v1133, %v1147
    %v1152 = vcombine.low %v101, %v103
    %v1153 = vcombine.high %v101, %v103
    %v1154 = vcombine.low %v105, %v107
    %v1155 = vcombine.high %v105, %v107
    %v1157 = vunpack.c.l.s4 1983009808
    %v1158 = vunpack.c.0.s8 %v1157
    %v1159 = vlaneseq
    %v1160 = vshrl.u32 %v1159, 7
    %v1161 = vsub.s32 %v1158, %v1160
    %v1162 = vrot.slane %v1152, %v1161
    %v1164 = vunpack.c.l.s4 1983009808
    %v1165 = vunpack.c.0.s8 %v1164
    %v1166 = vlaneseq
    %v1167 = vshrl.u32 %v1166, 7
    %v1168 = vsub.s32 %v1165, %v1167
    %v1169 = vrot.slane %v1153, %v1168
    %v1171 = vunpack.c.l.s4 1983009808
    %v1172 = vunpack.c.0.s8 %v1171
    %v1173 = vlaneseq
    %v1174 = vshrl.u32 %v1173, 7
    %v1175 = vsub.s32 %v1172, %v1174
    %v1176 = vrot.slane %v1154, %v1175
    %v1178 = vunpack.c.l.s4 1983009808
    %v1179 = vunpack.c.0.s8 %v1178
    %v1180 = vlaneseq
    %v1181 = vshrl.u32 %v1180, 7
    %v1182 = vsub.s32 %v1179, %v1181
    %v1183 = vrot.slane %v1155, %v1182
    %v1184 = vcombine.low %v1162, %v1176
    %v1185 = vcombine.high %v1162, %v1176
    %v1186 = vcombine.low %v1169, %v1183
    %v1187 = vcombine.low %v108, %v110
    %v1188 = vcombine.high %v108, %v110
    %v1189 = vcombine.low %v112, %v114
    %v1190 = vcombine.high %v112, %v114
    %v1192 = vunpack.c.l.s4 1983009808
    %v1193 = vunpack.c.0.s8 %v1192
    %v1194 = vlaneseq
    %v1195 = vshrl.u32 %v1194, 7
    %v1196 = vsub.s32 %v1193, %v1195
    %v1197 = vrot.slane %v1187, %v1196
    %v1199 = vunpack.c.l.s4 1983009808
    %v1200 = vunpack.c.0.s8 %v1199
    %v1201 = vlaneseq
    %v1202 = vshrl.u32 %v1201, 7
    %v1203 = vsub.s32 %v1200, %v1202
    %v1204 = vrot.slane %v1188, %v1203
    %v1206 = vunpack.c.l.s4 1983009808
    %v1207 = vunpack.c.0.s8 %v1206
    %v1208 = vlaneseq
    %v1209 = vshrl.u32 %v1208, 7
    %v1210 = vsub.s32 %v1207, %v1209
    %v1211 = vrot.slane %v1189, %v1210
    %v1213 = vunpack.c.l.s4 1983009808
    %v1214 = vunpack.c.0.s8 %v1213
    %v1215 = vlaneseq
    %v1216 = vshrl.u32 %v1215, 7
    %v1217 = vsub.s32 %v1214, %v1216
    %v1218 = vrot.slane %v1190, %v1217
    %v1219 = vcombine.low %v1197, %v1211
    %v1220 = vcombine.high %v1197, %v1211
    %v1221 = vcombine.low %v1204, %v1218
    %v1222 = vcombine.high %v1204, %v1218
    %v1223 = vcombine.low %v109, %v111
    %v1224 = vcombine.high %v109, %v111
    %v1225 = vcombine.low %v113, %v115
    %v1226 = vcombine.high %v113, %v115
    %v1228 = vunpack.c.l.s4 1983009808
    %v1229 = vunpack.c.0.s8 %v1228
    %v1230 = vlaneseq
    %v1231 = vshrl.u32 %v1230, 7
    %v1232 = vsub.s32 %v1229, %v1231
    %v1233 = vrot.slane %v1223, %v1232
    %v1235 = vunpack.c.l.s4 1983009808
    %v1236 = vunpack.c.0.s8 %v1235
    %v1237 = vlaneseq
    %v1238 = vshrl.u32 %v1237, 7
    %v1239 = vsub.s32 %v1236, %v1238
    %v1240 = vrot.slane %v1224, %v1239
    %v1242 = vunpack.c.l.s4 1983009808
    %v1243 = vunpack.c.0.s8 %v1242
    %v1244 = vlaneseq
    %v1245 = vshrl.u32 %v1244, 7
    %v1246 = vsub.s32 %v1243, %v1245
    %v1247 = vrot.slane %v1225, %v1246
    %v1249 = vunpack.c.l.s4 1983009808
    %v1250 = vunpack.c.0.s8 %v1249
    %v1251 = vlaneseq
    %v1252 = vshrl.u32 %v1251, 7
    %v1253 = vsub.s32 %v1250, %v1252
    %v1254 = vrot.slane %v1226, %v1253
    %v1255 = vcombine.low %v1233, %v1247
    %v1256 = vcombine.high %v1233, %v1247
    %v1257 = vcombine.low %v1240, %v1254
    %v1258 = vcombine.low %v116, %v118
    %v1259 = vcombine.high %v116, %v118
    %v1260 = vcombine.low %v120, %v122
    %v1261 = vcombine.high %v120, %v122
    %v1263 = vunpack.c.l.s4 1983009808
    %v1264 = vunpack.c.0.s8 %v1263
    %v1265 = vlaneseq
    %v1266 = vshrl.u32 %v1265, 7
    %v1267 = vsub.s32 %v1264, %v1266
    %v1268 = vrot.slane %v1258, %v1267
    %v1270 = vunpack.c.l.s4 1983009808
    %v1271 = vunpack.c.0.s8 %v1270
    %v1272 = vlaneseq
    %v1273 = vshrl.u32 %v1272, 7
    %v1274 = vsub.s32 %v1271, %v1273
    %v1275 = vrot.slane %v1259, %v1274
    %v1277 = vunpack.c.l.s4 1983009808
    %v1278 = vunpack.c.0.s8 %v1277
    %v1279 = vlaneseq
    %v1280 = vshrl.u32 %v1279, 7
    %v1281 = vsub.s32 %v1278, %v1280
    %v1282 = vrot.slane %v1260, %v1281
    %v1284 = vunpack.c.l.s4 1983009808
    %v1285 = vunpack.c.0.s8 %v1284
    %v1286 = vlaneseq
    %v1287 = vshrl.u32 %v1286, 7
    %v1288 = vsub.s32 %v1285, %v1287
    %v1289 = vrot.slane %v1261, %v1288
    %v1290 = vcombine.low %v1268, %v1282
    %v1291 = vcombine.high %v1268, %v1282
    %v1292 = vcombine.low %v1275, %v1289
    %v1293 = vcombine.high %v1275, %v1289
    %v1294 = vcombine.low %v117, %v119
    %v1295 = vcombine.high %v117, %v119
    %v1296 = vcombine.low %v121, %v123
    %v1297 = vcombine.high %v121, %v123
    %v1299 = vunpack.c.l.s4 1983009808
    %v1300 = vunpack.c.0.s8 %v1299
    %v1301 = vlaneseq
    %v1302 = vshrl.u32 %v1301, 7
    %v1303 = vsub.s32 %v1300, %v1302
    %v1304 = vrot.slane %v1294, %v1303
    %v1306 = vunpack.c.l.s4 1983009808
    %v1307 = vunpack.c.0.s8 %v1306
    %v1308 = vlaneseq
    %v1309 = vshrl.u32 %v1308, 7
    %v1310 = vsub.s32 %v1307, %v1309
    %v1311 = vrot.slane %v1295, %v1310
    %v1313 = vunpack.c.l.s4 1983009808
    %v1314 = vunpack.c.0.s8 %v1313
    %v1315 = vlaneseq
    %v1316 = vshrl.u32 %v1315, 7
    %v1317 = vsub.s32 %v1314, %v1316
    %v1318 = vrot.slane %v1296, %v1317
    %v1320 = vunpack.c.l.s4 1983009808
    %v1321 = vunpack.c.0.s8 %v1320
    %v1322 = vlaneseq
    %v1323 = vshrl.u32 %v1322, 7
    %v1324 = vsub.s32 %v1321, %v1323
    %v1325 = vrot.slane %v1297, %v1324
    %v1326 = vcombine.low %v1304, %v1318
    %v1327 = vcombine.high %v1304, %v1318
    %v1328 = vcombine.low %v1311, %v1325
    %v1329 = vcombine.low %v124, %v126
    %v1330 = vcombine.high %v124, %v126
    %v1331 = vcombine.low %v128, %v130
    %v1332 = vcombine.high %v128, %v130
    %v1334 = vunpack.c.l.s4 1983009808
    %v1335 = vunpack.c.0.s8 %v1334
    %v1336 = vlaneseq
    %v1337 = vshrl.u32 %v1336, 7
    %v1338 = vsub.s32 %v1335, %v1337
    %v1339 = vrot.slane %v1329, %v1338
    %v1341 = vunpack.c.l.s4 1983009808
    %v1342 = vunpack.c.0.s8 %v1341
    %v1343 = vlaneseq
    %v1344 = vshrl.u32 %v1343, 7
    %v1345 = vsub.s32 %v1342, %v1344
    %v1346 = vrot.slane %v1330, %v1345
    %v1348 = vunpack.c.l.s4 1983009808
    %v1349 = vunpack.c.0.s8 %v1348
    %v1350 = vlaneseq
    %v1351 = vshrl.u32 %v1350, 7
    %v1352 = vsub.s32 %v1349, %v1351
    %v1353 = vrot.slane %v1331, %v1352
    %v1355 = vunpack.c.l.s4 1983009808
    %v1356 = vunpack.c.0.s8 %v1355
    %v1357 = vlaneseq
    %v1358 = vshrl.u32 %v1357, 7
    %v1359 = vsub.s32 %v1356, %v1358
    %v1360 = vrot.slane %v1332, %v1359
    %v1361 = vcombine.low %v1339, %v1353
    %v1362 = vcombine.high %v1339, %v1353
    %v1363 = vcombine.low %v1346, %v1360
    %v1364 = vcombine.high %v1346, %v1360
    %v1365 = vcombine.low %v125, %v127
    %v1366 = vcombine.high %v125, %v127
    %v1367 = vcombine.low %v129, %v131
    %v1368 = vcombine.high %v129, %v131
    %v1370 = vunpack.c.l.s4 1983009808
    %v1371 = vunpack.c.0.s8 %v1370
    %v1372 = vlaneseq
    %v1373 = vshrl.u32 %v1372, 7
    %v1374 = vsub.s32 %v1371, %v1373
    %v1375 = vrot.slane %v1365, %v1374
    %v1377 = vunpack.c.l.s4 1983009808
    %v1378 = vunpack.c.0.s8 %v1377
    %v1379 = vlaneseq
    %v1380 = vshrl.u32 %v1379, 7
    %v1381 = vsub.s32 %v1378, %v1380
    %v1382 = vrot.slane %v1366, %v1381
    %v1384 = vunpack.c.l.s4 1983009808
    %v1385 = vunpack.c.0.s8 %v1384
    %v1386 = vlaneseq
    %v1387 = vshrl.u32 %v1386, 7
    %v1388 = vsub.s32 %v1385, %v1387
    %v1389 = vrot.slane %v1367, %v1388
    %v1391 = vunpack.c.l.s4 1983009808
    %v1392 = vunpack.c.0.s8 %v1391
    %v1393 = vlaneseq
    %v1394 = vshrl.u32 %v1393, 7
    %v1395 = vsub.s32 %v1392, %v1394
    %v1396 = vrot.slane %v1368, %v1395
    %v1397 = vcombine.low %v1375, %v1389
    %v1398 = vcombine.high %v1375, %v1389
    %v1399 = vcombine.low %v1382, %v1396
    %v1400 = vcombine.low %v132, %v134
    %v1401 = vcombine.high %v132, %v134
    %v1402 = vcombine.low %v136, %v138
    %v1403 = vcombine.high %v136, %v138
    %v1405 = vunpack.c.l.s4 1983009808
    %v1406 = vunpack.c.0.s8 %v1405
    %v1407 = vlaneseq
    %v1408 = vshrl.u32 %v1407, 7
    %v1409 = vsub.s32 %v1406, %v1408
    %v1410 = vrot.slane %v1400, %v1409
    %v1412 = vunpack.c.l.s4 1983009808
    %v1413 = vunpack.c.0.s8 %v1412
    %v1414 = vlaneseq
    %v1415 = vshrl.u32 %v1414, 7
    %v1416 = vsub.s32 %v1413, %v1415
    %v1417 = vrot.slane %v1401, %v1416
    %v1419 = vunpack.c.l.s4 1983009808
    %v1420 = vunpack.c.0.s8 %v1419
    %v1421 = vlaneseq
    %v1422 = vshrl.u32 %v1421, 7
    %v1423 = vsub.s32 %v1420, %v1422
    %v1424 = vrot.slane %v1402, %v1423
    %v1426 = vunpack.c.l.s4 1983009808
    %v1427 = vunpack.c.0.s8 %v1426
    %v1428 = vlaneseq
    %v1429 = vshrl.u32 %v1428, 7
    %v1430 = vsub.s32 %v1427, %v1429
    %v1431 = vrot.slane %v1403, %v1430
    %v1432 = vcombine.low %v1410, %v1424
    %v1433 = vcombine.high %v1410, %v1424
    %v1434 = vcombine.low %v1417, %v1431
    %v1435 = vcombine.high %v1417, %v1431
    %v1436 = vcombine.low %v133, %v135
    %v1437 = vcombine.high %v133, %v135
    %v1438 = vcombine.low %v137, %v139
    %v1439 = vcombine.high %v137, %v139
    %v1441 = vunpack.c.l.s4 1983009808
    %v1442 = vunpack.c.0.s8 %v1441
    %v1443 = vlaneseq
    %v1444 = vshrl.u32 %v1443, 7
    %v1445 = vsub.s32 %v1442, %v1444
    %v1446 = vrot.slane %v1436, %v1445
    %v1448 = vunpack.c.l.s4 1983009808
    %v1449 = vunpack.c.0.s8 %v1448
    %v1450 = vlaneseq
    %v1451 = vshrl.u32 %v1450, 7
    %v1452 = vsub.s32 %v1449, %v1451
    %v1453 = vrot.slane %v1437, %v1452
    %v1455 = vunpack.c.l.s4 1983009808
    %v1456 = vunpack.c.0.s8 %v1455
    %v1457 = vlaneseq
    %v1458 = vshrl.u32 %v1457, 7
    %v1459 = vsub.s32 %v1456, %v1458
    %v1460 = vrot.slane %v1438, %v1459
    %v1462 = vunpack.c.l.s4 1983009808
    %v1463 = vunpack.c.0.s8 %v1462
    %v1464 = vlaneseq
    %v1465 = vshrl.u32 %v1464, 7
    %v1466 = vsub.s32 %v1463, %v1465
    %v1467 = vrot.slane %v1439, %v1466
    %v1468 = vcombine.low %v1446, %v1460
    %v1469 = vcombine.high %v1446, %v1460
    %v1470 = vcombine.low %v1453, %v1467
    %v1471 = vcombine.low %v140, %v142
    %v1472 = vcombine.high %v140, %v142
    %v1473 = vcombine.low %v144, %v146
    %v1474 = vcombine.high %v144, %v146
    %v1476 = vunpack.c.l.s4 1983009808
    %v1477 = vunpack.c.0.s8 %v1476
    %v1478 = vlaneseq
    %v1479 = vshrl.u32 %v1478, 7
    %v1480 = vsub.s32 %v1477, %v1479
    %v1481 = vrot.slane %v1471, %v1480
    %v1483 = vunpack.c.l.s4 1983009808
    %v1484 = vunpack.c.0.s8 %v1483
    %v1485 = vlaneseq
    %v1486 = vshrl.u32 %v1485, 7
    %v1487 = vsub.s32 %v1484, %v1486
    %v1488 = vrot.slane %v1472, %v1487
    %v1490 = vunpack.c.l.s4 1983009808
    %v1491 = vunpack.c.0.s8 %v1490
    %v1492 = vlaneseq
    %v1493 = vshrl.u32 %v1492, 7
    %v1494 = vsub.s32 %v1491, %v1493
    %v1495 = vrot.slane %v1473, %v1494
    %v1497 = vunpack.c.l.s4 1983009808
    %v1498 = vunpack.c.0.s8 %v1497
    %v1499 = vlaneseq
    %v1500 = vshrl.u32 %v1499, 7
    %v1501 = vsub.s32 %v1498, %v1500
    %v1502 = vrot.slane %v1474, %v1501
    %v1503 = vcombine.low %v1481, %v1495
    %v1504 = vcombine.high %v1481, %v1495
    %v1505 = vcombine.low %v1488, %v1502
    %v1506 = vcombine.high %v1488, %v1502
    %v1507 = vcombine.low %v141, %v143
    %v1508 = vcombine.high %v141, %v143
    %v1509 = vcombine.low %v145, %v147
    %v1510 = vcombine.high %v145, %v147
    %v1512 = vunpack.c.l.s4 1983009808
    %v1513 = vunpack.c.0.s8 %v1512
    %v1514 = vlaneseq
    %v1515 = vshrl.u32 %v1514, 7
    %v1516 = vsub.s32 %v1513, %v1515
    %v1517 = vrot.slane %v1507, %v1516
    %v1519 = vunpack.c.l.s4 1983009808
    %v1520 = vunpack.c.0.s8 %v1519
    %v1521 = vlaneseq
    %v1522 = vshrl.u32 %v1521, 7
    %v1523 = vsub.s32 %v1520, %v1522
    %v1524 = vrot.slane %v1508, %v1523
    %v1526 = vunpack.c.l.s4 1983009808
    %v1527 = vunpack.c.0.s8 %v1526
    %v1528 = vlaneseq
    %v1529 = vshrl.u32 %v1528, 7
    %v1530 = vsub.s32 %v1527, %v1529
    %v1531 = vrot.slane %v1509, %v1530
    %v1533 = vunpack.c.l.s4 1983009808
    %v1534 = vunpack.c.0.s8 %v1533
    %v1535 = vlaneseq
    %v1536 = vshrl.u32 %v1535, 7
    %v1537 = vsub.s32 %v1534, %v1536
    %v1538 = vrot.slane %v1510, %v1537
    %v1539 = vcombine.low %v1517, %v1531
    %v1540 = vcombine.high %v1517, %v1531
    %v1541 = vcombine.low %v1524, %v1538
    %v1542 = vcombine.low %v148, %v150
    %v1543 = vcombine.high %v148, %v150
    %v1544 = vcombine.low %v152, %v154
    %v1545 = vcombine.high %v152, %v154
    %v1547 = vunpack.c.l.s4 1983009808
    %v1548 = vunpack.c.0.s8 %v1547
    %v1549 = vlaneseq
    %v1550 = vshrl.u32 %v1549, 7
    %v1551 = vsub.s32 %v1548, %v1550
    %v1552 = vrot.slane %v1542, %v1551
    %v1554 = vunpack.c.l.s4 1983009808
    %v1555 = vunpack.c.0.s8 %v1554
    %v1556 = vlaneseq
    %v1557 = vshrl.u32 %v1556, 7
    %v1558 = vsub.s32 %v1555, %v1557
    %v1559 = vrot.slane %v1543, %v1558
    %v1561 = vunpack.c.l.s4 1983009808
    %v1562 = vunpack.c.0.s8 %v1561
    %v1563 = vlaneseq
    %v1564 = vshrl.u32 %v1563, 7
    %v1565 = vsub.s32 %v1562, %v1564
    %v1566 = vrot.slane %v1544, %v1565
    %v1568 = vunpack.c.l.s4 1983009808
    %v1569 = vunpack.c.0.s8 %v1568
    %v1570 = vlaneseq
    %v1571 = vshrl.u32 %v1570, 7
    %v1572 = vsub.s32 %v1569, %v1571
    %v1573 = vrot.slane %v1545, %v1572
    %v1574 = vcombine.low %v1552, %v1566
    %v1575 = vcombine.high %v1552, %v1566
    %v1576 = vcombine.low %v1559, %v1573
    %v1577 = vcombine.high %v1559, %v1573
    %v1578 = vcombine.low %v149, %v151
    %v1579 = vcombine.high %v149, %v151
    %v1580 = vcombine.low %v153, %v155
    %v1581 = vcombine.high %v153, %v155
    %v1583 = vunpack.c.l.s4 1983009808
    %v1584 = vunpack.c.0.s8 %v1583
    %v1585 = vlaneseq
    %v1586 = vshrl.u32 %v1585, 7
    %v1587 = vsub.s32 %v1584, %v1586
    %v1588 = vrot.slane %v1578, %v1587
    %v1590 = vunpack.c.l.s4 1983009808
    %v1591 = vunpack.c.0.s8 %v1590
    %v1592 = vlaneseq
    %v1593 = vshrl.u32 %v1592, 7
    %v1594 = vsub.s32 %v1591, %v1593
    %v1595 = vrot.slane %v1579, %v1594
    %v1597 = vunpack.c.l.s4 1983009808
    %v1598 = vunpack.c.0.s8 %v1597
    %v1599 = vlaneseq
    %v1600 = vshrl.u32 %v1599, 7
    %v1601 = vsub.s32 %v1598, %v1600
    %v1602 = vrot.slane %v1580, %v1601
    %v1604 = vunpack.c.l.s4 1983009808
    %v1605 = vunpack.c.0.s8 %v1604
    %v1606 = vlaneseq
    %v1607 = vshrl.u32 %v1606, 7
    %v1608 = vsub.s32 %v1605, %v1607
    %v1609 = vrot.slane %v1581, %v1608
    %v1610 = vcombine.low %v1588, %v1602
    %v1611 = vcombine.high %v1588, %v1602
    %v1612 = vcombine.low %v1595, %v1609
    %v1613 = vcombine.low %v156, %v158
    %v1614 = vcombine.high %v156, %v158
    %v1615 = vcombine.low %v160, %v162
    %v1616 = vcombine.high %v160, %v162
    %v1618 = vunpack.c.l.s4 1983009808
    %v1619 = vunpack.c.0.s8 %v1618
    %v1620 = vlaneseq
    %v1621 = vshrl.u32 %v1620, 7
    %v1622 = vsub.s32 %v1619, %v1621
    %v1623 = vrot.slane %v1613, %v1622
    %v1625 = vunpack.c.l.s4 1983009808
    %v1626 = vunpack.c.0.s8 %v1625
    %v1627 = vlaneseq
    %v1628 = vshrl.u32 %v1627, 7
    %v1629 = vsub.s32 %v1626, %v1628
    %v1630 = vrot.slane %v1614, %v1629
    %v1632 = vunpack.c.l.s4 1983009808
    %v1633 = vunpack.c.0.s8 %v1632
    %v1634 = vlaneseq
    %v1635 = vshrl.u32 %v1634, 7
    %v1636 = vsub.s32 %v1633, %v1635
    %v1637 = vrot.slane %v1615, %v1636
    %v1639 = vunpack.c.l.s4 1983009808
    %v1640 = vunpack.c.0.s8 %v1639
    %v1641 = vlaneseq
    %v1642 = vshrl.u32 %v1641, 7
    %v1643 = vsub.s32 %v1640, %v1642
    %v1644 = vrot.slane %v1616, %v1643
    %v1645 = vcombine.low %v1623, %v1637
    %v1646 = vcombine.high %v1623, %v1637
    %v1647 = vcombine.low %v1630, %v1644
    %v1648 = vcombine.high %v1630, %v1644
    %v1649 = vcombine.low %v157, %v159
    %v1650 = vcombine.high %v157, %v159
    %v1651 = vcombine.low %v161, %v163
    %v1652 = vcombine.high %v161, %v163
    %v1654 = vunpack.c.l.s4 1983009808
    %v1655 = vunpack.c.0.s8 %v1654
    %v1656 = vlaneseq
    %v1657 = vshrl.u32 %v1656, 7
    %v1658 = vsub.s32 %v1655, %v1657
    %v1659 = vrot.slane %v1649, %v1658
    %v1661 = vunpack.c.l.s4 1983009808
    %v1662 = vunpack.c.0.s8 %v1661
    %v1663 = vlaneseq
    %v1664 = vshrl.u32 %v1663, 7
    %v1665 = vsub.s32 %v1662, %v1664
    %v1666 = vrot.slane %v1650, %v1665
    %v1668 = vunpack.c.l.s4 1983009808
    %v1669 = vunpack.c.0.s8 %v1668
    %v1670 = vlaneseq
    %v1671 = vshrl.u32 %v1670, 7
    %v1672 = vsub.s32 %v1669, %v1671
    %v1673 = vrot.slane %v1651, %v1672
    %v1675 = vunpack.c.l.s4 1983009808
    %v1676 = vunpack.c.0.s8 %v1675
    %v1677 = vlaneseq
    %v1678 = vshrl.u32 %v1677, 7
    %v1679 = vsub.s32 %v1676, %v1678
    %v1680 = vrot.slane %v1652, %v1679
    %v1681 = vcombine.low %v1659, %v1673
    %v1682 = vcombine.high %v1659, %v1673
    %v1683 = vcombine.low %v1666, %v1680
    %v1684 = vcombine.low %v164, %v166
    %v1685 = vcombine.high %v164, %v166
    %v1686 = vcombine.low %v168, %v170
    %v1687 = vcombine.high %v168, %v170
    %v1689 = vunpack.c.l.s4 1983009808
    %v1690 = vunpack.c.0.s8 %v1689
    %v1691 = vlaneseq
    %v1692 = vshrl.u32 %v1691, 7
    %v1693 = vsub.s32 %v1690, %v1692
    %v1694 = vrot.slane %v1684, %v1693
    %v1696 = vunpack.c.l.s4 1983009808
    %v1697 = vunpack.c.0.s8 %v1696
    %v1698 = vlaneseq
    %v1699 = vshrl.u32 %v1698, 7
    %v1700 = vsub.s32 %v1697, %v1699
    %v1701 = vrot.slane %v1685, %v1700
    %v1703 = vunpack.c.l.s4 1983009808
    %v1704 = vunpack.c.0.s8 %v1703
    %v1705 = vlaneseq
    %v1706 = vshrl.u32 %v1705, 7
    %v1707 = vsub.s32 %v1704, %v1706
    %v1708 = vrot.slane %v1686, %v1707
    %v1710 = vunpack.c.l.s4 1983009808
    %v1711 = vunpack.c.0.s8 %v1710
    %v1712 = vlaneseq
    %v1713 = vshrl.u32 %v1712, 7
    %v1714 = vsub.s32 %v1711, %v1713
    %v1715 = vrot.slane %v1687, %v1714
    %v1716 = vcombine.low %v1694, %v1708
    %v1717 = vcombine.high %v1694, %v1708
    %v1718 = vcombine.low %v1701, %v1715
    %v1719 = vcombine.high %v1701, %v1715
    %v1720 = vcombine.low %v165, %v167
    %v1721 = vcombine.high %v165, %v167
    %v1722 = vcombine.low %v169, %v171
    %v1723 = vcombine.high %v169, %v171
    %v1725 = vunpack.c.l.s4 1983009808
    %v1726 = vunpack.c.0.s8 %v1725
    %v1727 = vlaneseq
    %v1728 = vshrl.u32 %v1727, 7
    %v1729 = vsub.s32 %v1726, %v1728
    %v1730 = vrot.slane %v1720, %v1729
    %v1732 = vunpack.c.l.s4 1983009808
    %v1733 = vunpack.c.0.s8 %v1732
    %v1734 = vlaneseq
    %v1735 = vshrl.u32 %v1734, 7
    %v1736 = vsub.s32 %v1733, %v1735
    %v1737 = vrot.slane %v1721, %v1736
    %v1739 = vunpack.c.l.s4 1983009808
    %v1740 = vunpack.c.0.s8 %v1739
    %v1741 = vlaneseq
    %v1742 = vshrl.u32 %v1741, 7
    %v1743 = vsub.s32 %v1740, %v1742
    %v1744 = vrot.slane %v1722, %v1743
    %v1746 = vunpack.c.l.s4 1983009808
    %v1747 = vunpack.c.0.s8 %v1746
    %v1748 = vlaneseq
    %v1749 = vshrl.u32 %v1748, 7
    %v1750 = vsub.s32 %v1747, %v1749
    %v1751 = vrot.slane %v1723, %v1750
    %v1752 = vcombine.low %v1730, %v1744
    %v1753 = vcombine.high %v1730, %v1744
    %v1754 = vcombine.low %v1737, %v1751
    %v1755 = vcombine.low %v172, %v174
    %v1756 = vcombine.high %v172, %v174
    %v1757 = vcombine.low %v176, %v178
    %v1758 = vcombine.high %v176, %v178
    %v1760 = vunpack.c.l.s4 1983009808
    %v1761 = vunpack.c.0.s8 %v1760
    %v1762 = vlaneseq
    %v1763 = vshrl.u32 %v1762, 7
    %v1764 = vsub.s32 %v1761, %v1763
    %v1765 = vrot.slane %v1755, %v1764
    %v1767 = vunpack.c.l.s4 1983009808
    %v1768 = vunpack.c.0.s8 %v1767
    %v1769 = vlaneseq
    %v1770 = vshrl.u32 %v1769, 7
    %v1771 = vsub.s32 %v1768, %v1770
    %v1772 = vrot.slane %v1756, %v1771
    %v1774 = vunpack.c.l.s4 1983009808
    %v1775 = vunpack.c.0.s8 %v1774
    %v1776 = vlaneseq
    %v1777 = vshrl.u32 %v1776, 7
    %v1778 = vsub.s32 %v1775, %v1777
    %v1779 = vrot.slane %v1757, %v1778
    %v1781 = vunpack.c.l.s4 1983009808
    %v1782 = vunpack.c.0.s8 %v1781
    %v1783 = vlaneseq
    %v1784 = vshrl.u32 %v1783, 7
    %v1785 = vsub.s32 %v1782, %v1784
    %v1786 = vrot.slane %v1758, %v1785
    %v1787 = vcombine.low %v1765, %v1779
    %v1788 = vcombine.high %v1765, %v1779
    %v1789 = vcombine.low %v1772, %v1786
    %v1790 = vcombine.high %v1772, %v1786
    %v1791 = vcombine.low %v173, %v175
    %v1792 = vcombine.high %v173, %v175
    %v1793 = vcombine.low %v177, %v179
    %v1794 = vcombine.high %v177, %v179
    %v1796 = vunpack.c.l.s4 1983009808
    %v1797 = vunpack.c.0.s8 %v1796
    %v1798 = vlaneseq
    %v1799 = vshrl.u32 %v1798, 7
    %v1800 = vsub.s32 %v1797, %v1799
    %v1801 = vrot.slane %v1791, %v1800
    %v1803 = vunpack.c.l.s4 1983009808
    %v1804 = vunpack.c.0.s8 %v1803
    %v1805 = vlaneseq
    %v1806 = vshrl.u32 %v1805, 7
    %v1807 = vsub.s32 %v1804, %v1806
    %v1808 = vrot.slane %v1792, %v1807
    %v1810 = vunpack.c.l.s4 1983009808
    %v1811 = vunpack.c.0.s8 %v1810
    %v1812 = vlaneseq
    %v1813 = vshrl.u32 %v1812, 7
    %v1814 = vsub.s32 %v1811, %v1813
    %v1815 = vrot.slane %v1793, %v1814
    %v1817 = vunpack.c.l.s4 1983009808
    %v1818 = vunpack.c.0.s8 %v1817
    %v1819 = vlaneseq
    %v1820 = vshrl.u32 %v1819, 7
    %v1821 = vsub.s32 %v1818, %v1820
    %v1822 = vrot.slane %v1794, %v1821
    %v1823 = vcombine.low %v1801, %v1815
    %v1824 = vcombine.high %v1801, %v1815
    %v1825 = vcombine.low %v1808, %v1822
    %v1826 = vcombine.low %v180, %v182
    %v1827 = vcombine.high %v180, %v182
    %v1828 = vcombine.low %v184, %v186
    %v1829 = vcombine.high %v184, %v186
    %v1831 = vunpack.c.l.s4 1983009808
    %v1832 = vunpack.c.0.s8 %v1831
    %v1833 = vlaneseq
    %v1834 = vshrl.u32 %v1833, 7
    %v1835 = vsub.s32 %v1832, %v1834
    %v1836 = vrot.slane %v1826, %v1835
    %v1838 = vunpack.c.l.s4 1983009808
    %v1839 = vunpack.c.0.s8 %v1838
    %v1840 = vlaneseq
    %v1841 = vshrl.u32 %v1840, 7
    %v1842 = vsub.s32 %v1839, %v1841
    %v1843 = vrot.slane %v1827, %v1842
    %v1845 = vunpack.c.l.s4 1983009808
    %v1846 = vunpack.c.0.s8 %v1845
    %v1847 = vlaneseq
    %v1848 = vshrl.u32 %v1847, 7
    %v1849 = vsub.s32 %v1846, %v1848
    %v1850 = vrot.slane %v1828, %v1849
    %v1852 = vunpack.c.l.s4 1983009808
    %v1853 = vunpack.c.0.s8 %v1852
    %v1854 = vlaneseq
    %v1855 = vshrl.u32 %v1854, 7
    %v1856 = vsub.s32 %v1853, %v1855
    %v1857 = vrot.slane %v1829, %v1856
    %v1858 = vcombine.low %v1836, %v1850
    %v1859 = vcombine.high %v1836, %v1850
    %v1860 = vcombine.low %v1843, %v1857
    %v1861 = vcombine.high %v1843, %v1857
    %v1862 = vcombine.low %v181, %v183
    %v1863 = vcombine.high %v181, %v183
    %v1864 = vcombine.low %v185, %v187
    %v1865 = vcombine.high %v185, %v187
    %v1867 = vunpack.c.l.s4 1983009808
    %v1868 = vunpack.c.0.s8 %v1867
    %v1869 = vlaneseq
    %v1870 = vshrl.u32 %v1869, 7
    %v1871 = vsub.s32 %v1868, %v1870
    %v1872 = vrot.slane %v1862, %v1871
    %v1874 = vunpack.c.l.s4 1983009808
    %v1875 = vunpack.c.0.s8 %v1874
    %v1876 = vlaneseq
    %v1877 = vshrl.u32 %v1876, 7
    %v1878 = vsub.s32 %v1875, %v1877
    %v1879 = vrot.slane %v1863, %v1878
    %v1881 = vunpack.c.l.s4 1983009808
    %v1882 = vunpack.c.0.s8 %v1881
    %v1883 = vlaneseq
    %v1884 = vshrl.u32 %v1883, 7
    %v1885 = vsub.s32 %v1882, %v1884
    %v1886 = vrot.slane %v1864, %v1885
    %v1888 = vunpack.c.l.s4 1983009808
    %v1889 = vunpack.c.0.s8 %v1888
    %v1890 = vlaneseq
    %v1891 = vshrl.u32 %v1890, 7
    %v1892 = vsub.s32 %v1889, %v1891
    %v1893 = vrot.slane %v1865, %v1892
    %v1894 = vcombine.low %v1872, %v1886
    %v1895 = vcombine.high %v1872, %v1886
    %v1896 = vcombine.low %v1879, %v1893
    %v1897 = vcombine.low %v188, %v190
    %v1898 = vcombine.high %v188, %v190
    %v1899 = vcombine.low %v192, %v194
    %v1900 = vcombine.high %v192, %v194
    %v1902 = vunpack.c.l.s4 1983009808
    %v1903 = vunpack.c.0.s8 %v1902
    %v1904 = vlaneseq
    %v1905 = vshrl.u32 %v1904, 7
    %v1906 = vsub.s32 %v1903, %v1905
    %v1907 = vrot.slane %v1897, %v1906
    %v1909 = vunpack.c.l.s4 1983009808
    %v1910 = vunpack.c.0.s8 %v1909
    %v1911 = vlaneseq
    %v1912 = vshrl.u32 %v1911, 7
    %v1913 = vsub.s32 %v1910, %v1912
    %v1914 = vrot.slane %v1898, %v1913
    %v1916 = vunpack.c.l.s4 1983009808
    %v1917 = vunpack.c.0.s8 %v1916
    %v1918 = vlaneseq
    %v1919 = vshrl.u32 %v1918, 7
    %v1920 = vsub.s32 %v1917, %v1919
    %v1921 = vrot.slane %v1899, %v1920
    %v1923 = vunpack.c.l.s4 1983009808
    %v1924 = vunpack.c.0.s8 %v1923
    %v1925 = vlaneseq
    %v1926 = vshrl.u32 %v1925, 7
    %v1927 = vsub.s32 %v1924, %v1926
    %v1928 = vrot.slane %v1900, %v1927
    %v1929 = vcombine.low %v1907, %v1921
    %v1930 = vcombine.high %v1907, %v1921
    %v1931 = vcombine.low %v1914, %v1928
    %v1932 = vcombine.high %v1914, %v1928
    %v1933 = vcombine.low %v189, %v191
    %v1934 = vcombine.high %v189, %v191
    %v1935 = vcombine.low %v193, %v195
    %v1936 = vcombine.high %v193, %v195
    %v1938 = vunpack.c.l.s4 1983009808
    %v1939 = vunpack.c.0.s8 %v1938
    %v1940 = vlaneseq
    %v1941 = vshrl.u32 %v1940, 7
    %v1942 = vsub.s32 %v1939, %v1941
    %v1943 = vrot.slane %v1933, %v1942
    %v1945 = vunpack.c.l.s4 1983009808
    %v1946 = vunpack.c.0.s8 %v1945
    %v1947 = vlaneseq
    %v1948 = vshrl.u32 %v1947, 7
    %v1949 = vsub.s32 %v1946, %v1948
    %v1950 = vrot.slane %v1934, %v1949
    %v1952 = vunpack.c.l.s4 1983009808
    %v1953 = vunpack.c.0.s8 %v1952
    %v1954 = vlaneseq
    %v1955 = vshrl.u32 %v1954, 7
    %v1956 = vsub.s32 %v1953, %v1955
    %v1957 = vrot.slane %v1935, %v1956
    %v1959 = vunpack.c.l.s4 1983009808
    %v1960 = vunpack.c.0.s8 %v1959
    %v1961 = vlaneseq
    %v1962 = vshrl.u32 %v1961, 7
    %v1963 = vsub.s32 %v1960, %v1962
    %v1964 = vrot.slane %v1936, %v1963
    %v1965 = vcombine.low %v1943, %v1957
    %v1966 = vcombine.high %v1943, %v1957
    %v1967 = vcombine.low %v1950, %v1964
    %v1968 = vcombine.low %v196, %v198
    %v1969 = vcombine.high %v196, %v198
    %v1970 = vcombine.low %v200, %v202
    %v1971 = vcombine.high %v200, %v202
    %v1973 = vunpack.c.l.s4 1983009808
    %v1974 = vunpack.c.0.s8 %v1973
    %v1975 = vlaneseq
    %v1976 = vshrl.u32 %v1975, 7
    %v1977 = vsub.s32 %v1974, %v1976
    %v1978 = vrot.slane %v1968, %v1977
    %v1980 = vunpack.c.l.s4 1983009808
    %v1981 = vunpack.c.0.s8 %v1980
    %v1982 = vlaneseq
    %v1983 = vshrl.u32 %v1982, 7
    %v1984 = vsub.s32 %v1981, %v1983
    %v1985 = vrot.slane %v1969, %v1984
    %v1987 = vunpack.c.l.s4 1983009808
    %v1988 = vunpack.c.0.s8 %v1987
    %v1989 = vlaneseq
    %v1990 = vshrl.u32 %v1989, 7
    %v1991 = vsub.s32 %v1988, %v1990
    %v1992 = vrot.slane %v1970, %v1991
    %v1994 = vunpack.c.l.s4 1983009808
    %v1995 = vunpack.c.0.s8 %v1994
    %v1996 = vlaneseq
    %v1997 = vshrl.u32 %v1996, 7
    %v1998 = vsub.s32 %v1995, %v1997
    %v1999 = vrot.slane %v1971, %v1998
    %v2000 = vcombine.low %v1978, %v1992
    %v2001 = vcombine.high %v1978, %v1992
    %v2002 = vcombine.low %v1985, %v1999
    %v2003 = vcombine.high %v1985, %v1999
    %v2004 = vcombine.low %v197, %v199
    %v2005 = vcombine.high %v197, %v199
    %v2006 = vcombine.low %v201, %v203
    %v2007 = vcombine.high %v201, %v203
    %v2009 = vunpack.c.l.s4 1983009808
    %v2010 = vunpack.c.0.s8 %v2009
    %v2011 = vlaneseq
    %v2012 = vshrl.u32 %v2011, 7
    %v2013 = vsub.s32 %v2010, %v2012
    %v2014 = vrot.slane %v2004, %v2013
    %v2016 = vunpack.c.l.s4 1983009808
    %v2017 = vunpack.c.0.s8 %v2016
    %v2018 = vlaneseq
    %v2019 = vshrl.u32 %v2018, 7
    %v2020 = vsub.s32 %v2017, %v2019
    %v2021 = vrot.slane %v2005, %v2020
    %v2023 = vunpack.c.l.s4 1983009808
    %v2024 = vunpack.c.0.s8 %v2023
    %v2025 = vlaneseq
    %v2026 = vshrl.u32 %v2025, 7
    %v2027 = vsub.s32 %v2024, %v2026
    %v2028 = vrot.slane %v2006, %v2027
    %v2030 = vunpack.c.l.s4 1983009808
    %v2031 = vunpack.c.0.s8 %v2030
    %v2032 = vlaneseq
    %v2033 = vshrl.u32 %v2032, 7
    %v2034 = vsub.s32 %v2031, %v2033
    %v2035 = vrot.slane %v2007, %v2034
    %v2036 = vcombine.low %v2014, %v2028
    %v2037 = vcombine.high %v2014, %v2028
    %v2038 = vcombine.low %v2021, %v2035
    %v2039 = vcombine.low %v204, %v206
    %v2040 = vcombine.high %v204, %v206
    %v2041 = vcombine.low %v208, %v210
    %v2042 = vcombine.high %v208, %v210
    %v2044 = vunpack.c.l.s4 1983009808
    %v2045 = vunpack.c.0.s8 %v2044
    %v2046 = vlaneseq
    %v2047 = vshrl.u32 %v2046, 7
    %v2048 = vsub.s32 %v2045, %v2047
    %v2049 = vrot.slane %v2039, %v2048
    %v2051 = vunpack.c.l.s4 1983009808
    %v2052 = vunpack.c.0.s8 %v2051
    %v2053 = vlaneseq
    %v2054 = vshrl.u32 %v2053, 7
    %v2055 = vsub.s32 %v2052, %v2054
    %v2056 = vrot.slane %v2040, %v2055
    %v2058 = vunpack.c.l.s4 1983009808
    %v2059 = vunpack.c.0.s8 %v2058
    %v2060 = vlaneseq
    %v2061 = vshrl.u32 %v2060, 7
    %v2062 = vsub.s32 %v2059, %v2061
    %v2063 = vrot.slane %v2041, %v2062
    %v2065 = vunpack.c.l.s4 1983009808
    %v2066 = vunpack.c.0.s8 %v2065
    %v2067 = vlaneseq
    %v2068 = vshrl.u32 %v2067, 7
    %v2069 = vsub.s32 %v2066, %v2068
    %v2070 = vrot.slane %v2042, %v2069
    %v2071 = vcombine.low %v2049, %v2063
    %v2072 = vcombine.high %v2049, %v2063
    %v2073 = vcombine.low %v2056, %v2070
    %v2074 = vcombine.high %v2056, %v2070
    %v2075 = vcombine.low %v205, %v207
    %v2076 = vcombine.high %v205, %v207
    %v2077 = vcombine.low %v209, %v211
    %v2078 = vcombine.high %v209, %v211
    %v2080 = vunpack.c.l.s4 1983009808
    %v2081 = vunpack.c.0.s8 %v2080
    %v2082 = vlaneseq
    %v2083 = vshrl.u32 %v2082, 7
    %v2084 = vsub.s32 %v2081, %v2083
    %v2085 = vrot.slane %v2075, %v2084
    %v2087 = vunpack.c.l.s4 1983009808
    %v2088 = vunpack.c.0.s8 %v2087
    %v2089 = vlaneseq
    %v2090 = vshrl.u32 %v2089, 7
    %v2091 = vsub.s32 %v2088, %v2090
    %v2092 = vrot.slane %v2076, %v2091
    %v2094 = vunpack.c.l.s4 1983009808
    %v2095 = vunpack.c.0.s8 %v2094
    %v2096 = vlaneseq
    %v2097 = vshrl.u32 %v2096, 7
    %v2098 = vsub.s32 %v2095, %v2097
    %v2099 = vrot.slane %v2077, %v2098
    %v2101 = vunpack.c.l.s4 1983009808
    %v2102 = vunpack.c.0.s8 %v2101
    %v2103 = vlaneseq
    %v2104 = vshrl.u32 %v2103, 7
    %v2105 = vsub.s32 %v2102, %v2104
    %v2106 = vrot.slane %v2078, %v2105
    %v2107 = vcombine.low %v2085, %v2099
    %v2108 = vcombine.high %v2085, %v2099
    %v2109 = vcombine.low %v2092, %v2106
    %v2110 = vcombine.low %v212, %v214
    %v2111 = vcombine.high %v212, %v214
    %v2112 = vcombine.low %v216, %v218
    %v2113 = vcombine.high %v216, %v218
    %v2115 = vunpack.c.l.s4 1983009808
    %v2116 = vunpack.c.0.s8 %v2115
    %v2117 = vlaneseq
    %v2118 = vshrl.u32 %v2117, 7
    %v2119 = vsub.s32 %v2116, %v2118
    %v2120 = vrot.slane %v2110, %v2119
    %v2122 = vunpack.c.l.s4 1983009808
    %v2123 = vunpack.c.0.s8 %v2122
    %v2124 = vlaneseq
    %v2125 = vshrl.u32 %v2124, 7
    %v2126 = vsub.s32 %v2123, %v2125
    %v2127 = vrot.slane %v2111, %v2126
    %v2129 = vunpack.c.l.s4 1983009808
    %v2130 = vunpack.c.0.s8 %v2129
    %v2131 = vlaneseq
    %v2132 = vshrl.u32 %v2131, 7
    %v2133 = vsub.s32 %v2130, %v2132
    %v2134 = vrot.slane %v2112, %v2133
    %v2136 = vunpack.c.l.s4 1983009808
    %v2137 = vunpack.c.0.s8 %v2136
    %v2138 = vlaneseq
    %v2139 = vshrl.u32 %v2138, 7
    %v2140 = vsub.s32 %v2137, %v2139
    %v2141 = vrot.slane %v2113, %v2140
    %v2142 = vcombine.low %v2120, %v2134
    %v2143 = vcombine.high %v2120, %v2134
    %v2144 = vcombine.low %v2127, %v2141
    %v2145 = vcombine.high %v2127, %v2141
    %v2146 = vcombine.low %v213, %v215
    %v2147 = vcombine.high %v213, %v215
    %v2148 = vcombine.low %v217, %v219
    %v2149 = vcombine.high %v217, %v219
    %v2151 = vunpack.c.l.s4 1983009808
    %v2152 = vunpack.c.0.s8 %v2151
    %v2153 = vlaneseq
    %v2154 = vshrl.u32 %v2153, 7
    %v2155 = vsub.s32 %v2152, %v2154
    %v2156 = vrot.slane %v2146, %v2155
    %v2158 = vunpack.c.l.s4 1983009808
    %v2159 = vunpack.c.0.s8 %v2158
    %v2160 = vlaneseq
    %v2161 = vshrl.u32 %v2160, 7
    %v2162 = vsub.s32 %v2159, %v2161
    %v2163 = vrot.slane %v2147, %v2162
    %v2165 = vunpack.c.l.s4 1983009808
    %v2166 = vunpack.c.0.s8 %v2165
    %v2167 = vlaneseq
    %v2168 = vshrl.u32 %v2167, 7
    %v2169 = vsub.s32 %v2166, %v2168
    %v2170 = vrot.slane %v2148, %v2169
    %v2172 = vunpack.c.l.s4 1983009808
    %v2173 = vunpack.c.0.s8 %v2172
    %v2174 = vlaneseq
    %v2175 = vshrl.u32 %v2174, 7
    %v2176 = vsub.s32 %v2173, %v2175
    %v2177 = vrot.slane %v2149, %v2176
    %v2178 = vcombine.low %v2156, %v2170
    %v2179 = vcombine.high %v2156, %v2170
    %v2180 = vcombine.low %v2163, %v2177
    %v2181 = vcombine.low %v220, %v222
    %v2182 = vcombine.high %v220, %v222
    %v2183 = vcombine.low %v224, %v226
    %v2184 = vcombine.high %v224, %v226
    %v2186 = vunpack.c.l.s4 1983009808
    %v2187 = vunpack.c.0.s8 %v2186
    %v2188 = vlaneseq
    %v2189 = vshrl.u32 %v2188, 7
    %v2190 = vsub.s32 %v2187, %v2189
    %v2191 = vrot.slane %v2181, %v2190
    %v2193 = vunpack.c.l.s4 1983009808
    %v2194 = vunpack.c.0.s8 %v2193
    %v2195 = vlaneseq
    %v2196 = vshrl.u32 %v2195, 7
    %v2197 = vsub.s32 %v2194, %v2196
    %v2198 = vrot.slane %v2182, %v2197
    %v2200 = vunpack.c.l.s4 1983009808
    %v2201 = vunpack.c.0.s8 %v2200
    %v2202 = vlaneseq
    %v2203 = vshrl.u32 %v2202, 7
    %v2204 = vsub.s32 %v2201, %v2203
    %v2205 = vrot.slane %v2183, %v2204
    %v2207 = vunpack.c.l.s4 1983009808
    %v2208 = vunpack.c.0.s8 %v2207
    %v2209 = vlaneseq
    %v2210 = vshrl.u32 %v2209, 7
    %v2211 = vsub.s32 %v2208, %v2210
    %v2212 = vrot.slane %v2184, %v2211
    %v2213 = vcombine.low %v2191, %v2205
    %v2214 = vcombine.high %v2191, %v2205
    %v2215 = vcombine.low %v2198, %v2212
    %v2216 = vcombine.high %v2198, %v2212
    %v2217 = vcombine.low %v221, %v223
    %v2218 = vcombine.high %v221, %v223
    %v2219 = vcombine.low %v225, %v227
    %v2220 = vcombine.high %v225, %v227
    %v2222 = vunpack.c.l.s4 1983009808
    %v2223 = vunpack.c.0.s8 %v2222
    %v2224 = vlaneseq
    %v2225 = vshrl.u32 %v2224, 7
    %v2226 = vsub.s32 %v2223, %v2225
    %v2227 = vrot.slane %v2217, %v2226
    %v2229 = vunpack.c.l.s4 1983009808
    %v2230 = vunpack.c.0.s8 %v2229
    %v2231 = vlaneseq
    %v2232 = vshrl.u32 %v2231, 7
    %v2233 = vsub.s32 %v2230, %v2232
    %v2234 = vrot.slane %v2218, %v2233
    %v2236 = vunpack.c.l.s4 1983009808
    %v2237 = vunpack.c.0.s8 %v2236
    %v2238 = vlaneseq
    %v2239 = vshrl.u32 %v2238, 7
    %v2240 = vsub.s32 %v2237, %v2239
    %v2241 = vrot.slane %v2219, %v2240
    %v2243 = vunpack.c.l.s4 1983009808
    %v2244 = vunpack.c.0.s8 %v2243
    %v2245 = vlaneseq
    %v2246 = vshrl.u32 %v2245, 7
    %v2247 = vsub.s32 %v2244, %v2246
    %v2248 = vrot.slane %v2220, %v2247
    %v2249 = vcombine.low %v2227, %v2241
    %v2250 = vcombine.high %v2227, %v2241
    %v2251 = vcombine.low %v2234, %v2248
    %v2252 = vcombine.low %v228, %v230
    %v2253 = vcombine.high %v228, %v230
    %v2254 = vcombine.low %v232, %v234
    %v2255 = vcombine.high %v232, %v234
    %v2257 = vunpack.c.l.s4 1983009808
    %v2258 = vunpack.c.0.s8 %v2257
    %v2259 = vlaneseq
    %v2260 = vshrl.u32 %v2259, 7
    %v2261 = vsub.s32 %v2258, %v2260
    %v2262 = vrot.slane %v2252, %v2261
    %v2264 = vunpack.c.l.s4 1983009808
    %v2265 = vunpack.c.0.s8 %v2264
    %v2266 = vlaneseq
    %v2267 = vshrl.u32 %v2266, 7
    %v2268 = vsub.s32 %v2265, %v2267
    %v2269 = vrot.slane %v2253, %v2268
    %v2271 = vunpack.c.l.s4 1983009808
    %v2272 = vunpack.c.0.s8 %v2271
    %v2273 = vlaneseq
    %v2274 = vshrl.u32 %v2273, 7
    %v2275 = vsub.s32 %v2272, %v2274
    %v2276 = vrot.slane %v2254, %v2275
    %v2278 = vunpack.c.l.s4 1983009808
    %v2279 = vunpack.c.0.s8 %v2278
    %v2280 = vlaneseq
    %v2281 = vshrl.u32 %v2280, 7
    %v2282 = vsub.s32 %v2279, %v2281
    %v2283 = vrot.slane %v2255, %v2282
    %v2284 = vcombine.low %v2262, %v2276
    %v2285 = vcombine.high %v2262, %v2276
    %v2286 = vcombine.low %v2269, %v2283
    %v2287 = vcombine.high %v2269, %v2283
    %v2288 = vcombine.low %v229, %v231
    %v2289 = vcombine.high %v229, %v231
    %v2290 = vcombine.low %v233, %v235
    %v2291 = vcombine.high %v233, %v235
    %v2293 = vunpack.c.l.s4 1983009808
    %v2294 = vunpack.c.0.s8 %v2293
    %v2295 = vlaneseq
    %v2296 = vshrl.u32 %v2295, 7
    %v2297 = vsub.s32 %v2294, %v2296
    %v2298 = vrot.slane %v2288, %v2297
    %v2300 = vunpack.c.l.s4 1983009808
    %v2301 = vunpack.c.0.s8 %v2300
    %v2302 = vlaneseq
    %v2303 = vshrl.u32 %v2302, 7
    %v2304 = vsub.s32 %v2301, %v2303
    %v2305 = vrot.slane %v2289, %v2304
    %v2307 = vunpack.c.l.s4 1983009808
    %v2308 = vunpack.c.0.s8 %v2307
    %v2309 = vlaneseq
    %v2310 = vshrl.u32 %v2309, 7
    %v2311 = vsub.s32 %v2308, %v2310
    %v2312 = vrot.slane %v2290, %v2311
    %v2314 = vunpack.c.l.s4 1983009808
    %v2315 = vunpack.c.0.s8 %v2314
    %v2316 = vlaneseq
    %v2317 = vshrl.u32 %v2316, 7
    %v2318 = vsub.s32 %v2315, %v2317
    %v2319 = vrot.slane %v2291, %v2318
    %v2320 = vcombine.low %v2298, %v2312
    %v2321 = vcombine.high %v2298, %v2312
    %v2322 = vcombine.low %v2305, %v2319
    %v2323 = vcombine.low %v236, %v238
    %v2324 = vcombine.high %v236, %v238
    %v2325 = vcombine.low %v240, %v242
    %v2326 = vcombine.high %v240, %v242
    %v2328 = vunpack.c.l.s4 1983009808
    %v2329 = vunpack.c.0.s8 %v2328
    %v2330 = vlaneseq
    %v2331 = vshrl.u32 %v2330, 7
    %v2332 = vsub.s32 %v2329, %v2331
    %v2333 = vrot.slane %v2323, %v2332
    %v2335 = vunpack.c.l.s4 1983009808
    %v2336 = vunpack.c.0.s8 %v2335
    %v2337 = vlaneseq
    %v2338 = vshrl.u32 %v2337, 7
    %v2339 = vsub.s32 %v2336, %v2338
    %v2340 = vrot.slane %v2324, %v2339
    %v2342 = vunpack.c.l.s4 1983009808
    %v2343 = vunpack.c.0.s8 %v2342
    %v2344 = vlaneseq
    %v2345 = vshrl.u32 %v2344, 7
    %v2346 = vsub.s32 %v2343, %v2345
    %v2347 = vrot.slane %v2325, %v2346
    %v2349 = vunpack.c.l.s4 1983009808
    %v2350 = vunpack.c.0.s8 %v2349
    %v2351 = vlaneseq
    %v2352 = vshrl.u32 %v2351, 7
    %v2353 = vsub.s32 %v2350, %v2352
    %v2354 = vrot.slane %v2326, %v2353
    %v2355 = vcombine.low %v2333, %v2347
    %v2356 = vcombine.high %v2333, %v2347
    %v2357 = vcombine.low %v2340, %v2354
    %v2358 = vcombine.high %v2340, %v2354
    %v2359 = vcombine.low %v237, %v239
    %v2360 = vcombine.high %v237, %v239
    %v2361 = vcombine.low %v241, %v243
    %v2362 = vcombine.high %v241, %v243
    %v2364 = vunpack.c.l.s4 1983009808
    %v2365 = vunpack.c.0.s8 %v2364
    %v2366 = vlaneseq
    %v2367 = vshrl.u32 %v2366, 7
    %v2368 = vsub.s32 %v2365, %v2367
    %v2369 = vrot.slane %v2359, %v2368
    %v2371 = vunpack.c.l.s4 1983009808
    %v2372 = vunpack.c.0.s8 %v2371
    %v2373 = vlaneseq
    %v2374 = vshrl.u32 %v2373, 7
    %v2375 = vsub.s32 %v2372, %v2374
    %v2376 = vrot.slane %v2360, %v2375
    %v2378 = vunpack.c.l.s4 1983009808
    %v2379 = vunpack.c.0.s8 %v2378
    %v2380 = vlaneseq
    %v2381 = vshrl.u32 %v2380, 7
    %v2382 = vsub.s32 %v2379, %v2381
    %v2383 = vrot.slane %v2361, %v2382
    %v2385 = vunpack.c.l.s4 1983009808
    %v2386 = vunpack.c.0.s8 %v2385
    %v2387 = vlaneseq
    %v2388 = vshrl.u32 %v2387, 7
    %v2389 = vsub.s32 %v2386, %v2388
    %v2390 = vrot.slane %v2362, %v2389
    %v2391 = vcombine.low %v2369, %v2383
    %v2392 = vcombine.high %v2369, %v2383
    %v2393 = vcombine.low %v2376, %v2390
    %v2394 = vcombine.low %v244, %v246
    %v2395 = vcombine.high %v244, %v246
    %v2396 = vcombine.low %v248, %v250
    %v2397 = vcombine.high %v248, %v250
    %v2399 = vunpack.c.l.s4 1983009808
    %v2400 = vunpack.c.0.s8 %v2399
    %v2401 = vlaneseq
    %v2402 = vshrl.u32 %v2401, 7
    %v2403 = vsub.s32 %v2400, %v2402
    %v2404 = vrot.slane %v2394, %v2403
    %v2406 = vunpack.c.l.s4 1983009808
    %v2407 = vunpack.c.0.s8 %v2406
    %v2408 = vlaneseq
    %v2409 = vshrl.u32 %v2408, 7
    %v2410 = vsub.s32 %v2407, %v2409
    %v2411 = vrot.slane %v2395, %v2410
    %v2413 = vunpack.c.l.s4 1983009808
    %v2414 = vunpack.c.0.s8 %v2413
    %v2415 = vlaneseq
    %v2416 = vshrl.u32 %v2415, 7
    %v2417 = vsub.s32 %v2414, %v2416
    %v2418 = vrot.slane %v2396, %v2417
    %v2420 = vunpack.c.l.s4 1983009808
    %v2421 = vunpack.c.0.s8 %v2420
    %v2422 = vlaneseq
    %v2423 = vshrl.u32 %v2422, 7
    %v2424 = vsub.s32 %v2421, %v2423
    %v2425 = vrot.slane %v2397, %v2424
    %v2426 = vcombine.low %v2404, %v2418
    %v2427 = vcombine.high %v2404, %v2418
    %v2428 = vcombine.low %v2411, %v2425
    %v2429 = vcombine.high %v2411, %v2425
    %v2430 = vcombine.low %v245, %v247
    %v2431 = vcombine.high %v245, %v247
    %v2432 = vcombine.low %v249, %v251
    %v2433 = vcombine.high %v249, %v251
    %v2435 = vunpack.c.l.s4 1983009808
    %v2436 = vunpack.c.0.s8 %v2435
    %v2437 = vlaneseq
    %v2438 = vshrl.u32 %v2437, 7
    %v2439 = vsub.s32 %v2436, %v2438
    %v2440 = vrot.slane %v2430, %v2439
    %v2442 = vunpack.c.l.s4 1983009808
    %v2443 = vunpack.c.0.s8 %v2442
    %v2444 = vlaneseq
    %v2445 = vshrl.u32 %v2444, 7
    %v2446 = vsub.s32 %v2443, %v2445
    %v2447 = vrot.slane %v2431, %v2446
    %v2449 = vunpack.c.l.s4 1983009808
    %v2450 = vunpack.c.0.s8 %v2449
    %v2451 = vlaneseq
    %v2452 = vshrl.u32 %v2451, 7
    %v2453 = vsub.s32 %v2450, %v2452
    %v2454 = vrot.slane %v2432, %v2453
    %v2456 = vunpack.c.l.s4 1983009808
    %v2457 = vunpack.c.0.s8 %v2456
    %v2458 = vlaneseq
    %v2459 = vshrl.u32 %v2458, 7
    %v2460 = vsub.s32 %v2457, %v2459
    %v2461 = vrot.slane %v2433, %v2460
    %v2462 = vcombine.low %v2440, %v2454
    %v2463 = vcombine.high %v2440, %v2454
    %v2464 = vcombine.low %v2447, %v2461
    %v2465 = vcombine.low %v252, %v254
    %v2466 = vcombine.high %v252, %v254
    %v2467 = vcombine.low %v256, %v258
    %v2468 = vcombine.high %v256, %v258
    %v2470 = vunpack.c.l.s4 1983009808
    %v2471 = vunpack.c.0.s8 %v2470
    %v2472 = vlaneseq
    %v2473 = vshrl.u32 %v2472, 7
    %v2474 = vsub.s32 %v2471, %v2473
    %v2475 = vrot.slane %v2465, %v2474
    %v2477 = vunpack.c.l.s4 1983009808
    %v2478 = vunpack.c.0.s8 %v2477
    %v2479 = vlaneseq
    %v2480 = vshrl.u32 %v2479, 7
    %v2481 = vsub.s32 %v2478, %v2480
    %v2482 = vrot.slane %v2466, %v2481
    %v2484 = vunpack.c.l.s4 1983009808
    %v2485 = vunpack.c.0.s8 %v2484
    %v2486 = vlaneseq
    %v2487 = vshrl.u32 %v2486, 7
    %v2488 = vsub.s32 %v2485, %v2487
    %v2489 = vrot.slane %v2467, %v2488
    %v2491 = vunpack.c.l.s4 1983009808
    %v2492 = vunpack.c.0.s8 %v2491
    %v2493 = vlaneseq
    %v2494 = vshrl.u32 %v2493, 7
    %v2495 = vsub.s32 %v2492, %v2494
    %v2496 = vrot.slane %v2468, %v2495
    %v2497 = vcombine.low %v2475, %v2489
    %v2498 = vcombine.high %v2475, %v2489
    %v2499 = vcombine.low %v2482, %v2496
    %v2500 = vcombine.high %v2482, %v2496
    %v2501 = vcombine.low %v253, %v255
    %v2502 = vcombine.high %v253, %v255
    %v2503 = vcombine.low %v257, %v259
    %v2504 = vcombine.high %v257, %v259
    %v2506 = vunpack.c.l.s4 1983009808
    %v2507 = vunpack.c.0.s8 %v2506
    %v2508 = vlaneseq
    %v2509 = vshrl.u32 %v2508, 7
    %v2510 = vsub.s32 %v2507, %v2509
    %v2511 = vrot.slane %v2501, %v2510
    %v2513 = vunpack.c.l.s4 1983009808
    %v2514 = vunpack.c.0.s8 %v2513
    %v2515 = vlaneseq
    %v2516 = vshrl.u32 %v2515, 7
    %v2517 = vsub.s32 %v2514, %v2516
    %v2518 = vrot.slane %v2502, %v2517
    %v2520 = vunpack.c.l.s4 1983009808
    %v2521 = vunpack.c.0.s8 %v2520
    %v2522 = vlaneseq
    %v2523 = vshrl.u32 %v2522, 7
    %v2524 = vsub.s32 %v2521, %v2523
    %v2525 = vrot.slane %v2503, %v2524
    %v2527 = vunpack.c.l.s4 1983009808
    %v2528 = vunpack.c.0.s8 %v2527
    %v2529 = vlaneseq
    %v2530 = vshrl.u32 %v2529, 7
    %v2531 = vsub.s32 %v2528, %v2530
    %v2532 = vrot.slane %v2504, %v2531
    %v2533 = vcombine.low %v2511, %v2525
    %v2534 = vcombine.high %v2511, %v2525
    %v2535 = vcombine.low %v2518, %v2532
    %v2536 = vcombine.low %v260, %v262
    %v2537 = vcombine.high %v260, %v262
    %v2538 = vcombine.low %v264, %v266
    %v2539 = vcombine.high %v264, %v266
    %v2541 = vunpack.c.l.s4 1983009808
    %v2542 = vunpack.c.0.s8 %v2541
    %v2543 = vlaneseq
    %v2544 = vshrl.u32 %v2543, 7
    %v2545 = vsub.s32 %v2542, %v2544
    %v2546 = vrot.slane %v2536, %v2545
    %v2548 = vunpack.c.l.s4 1983009808
    %v2549 = vunpack.c.0.s8 %v2548
    %v2550 = vlaneseq
    %v2551 = vshrl.u32 %v2550, 7
    %v2552 = vsub.s32 %v2549, %v2551
    %v2553 = vrot.slane %v2537, %v2552
    %v2555 = vunpack.c.l.s4 1983009808
    %v2556 = vunpack.c.0.s8 %v2555
    %v2557 = vlaneseq
    %v2558 = vshrl.u32 %v2557, 7
    %v2559 = vsub.s32 %v2556, %v2558
    %v2560 = vrot.slane %v2538, %v2559
    %v2562 = vunpack.c.l.s4 1983009808
    %v2563 = vunpack.c.0.s8 %v2562
    %v2564 = vlaneseq
    %v2565 = vshrl.u32 %v2564, 7
    %v2566 = vsub.s32 %v2563, %v2565
    %v2567 = vrot.slane %v2539, %v2566
    %v2568 = vcombine.low %v2546, %v2560
    %v2569 = vcombine.high %v2546, %v2560
    %v2570 = vcombine.low %v2553, %v2567
    %v2571 = vcombine.high %v2553, %v2567
    %v2572 = vcombine.low %v261, %v263
    %v2573 = vcombine.high %v261, %v263
    %v2574 = vcombine.low %v265, %v267
    %v2575 = vcombine.high %v265, %v267
    %v2577 = vunpack.c.l.s4 1983009808
    %v2578 = vunpack.c.0.s8 %v2577
    %v2579 = vlaneseq
    %v2580 = vshrl.u32 %v2579, 7
    %v2581 = vsub.s32 %v2578, %v2580
    %v2582 = vrot.slane %v2572, %v2581
    %v2584 = vunpack.c.l.s4 1983009808
    %v2585 = vunpack.c.0.s8 %v2584
    %v2586 = vlaneseq
    %v2587 = vshrl.u32 %v2586, 7
    %v2588 = vsub.s32 %v2585, %v2587
    %v2589 = vrot.slane %v2573, %v2588
    %v2591 = vunpack.c.l.s4 1983009808
    %v2592 = vunpack.c.0.s8 %v2591
    %v2593 = vlaneseq
    %v2594 = vshrl.u32 %v2593, 7
    %v2595 = vsub.s32 %v2592, %v2594
    %v2596 = vrot.slane %v2574, %v2595
    %v2598 = vunpack.c.l.s4 1983009808
    %v2599 = vunpack.c.0.s8 %v2598
    %v2600 = vlaneseq
    %v2601 = vshrl.u32 %v2600, 7
    %v2602 = vsub.s32 %v2599, %v2601
    %v2603 = vrot.slane %v2575, %v2602
    %v2604 = vcombine.low %v2582, %v2596
    %v2605 = vcombine.high %v2582, %v2596
    %v2606 = vcombine.low %v2589, %v2603
    %v2607 = vcombine.low %v268, %v270
    %v2608 = vcombine.high %v268, %v270
    %v2609 = vcombine.low %v272, %v274
    %v2610 = vcombine.high %v272, %v274
    %v2612 = vunpack.c.l.s4 1983009808
    %v2613 = vunpack.c.0.s8 %v2612
    %v2614 = vlaneseq
    %v2615 = vshrl.u32 %v2614, 7
    %v2616 = vsub.s32 %v2613, %v2615
    %v2617 = vrot.slane %v2607, %v2616
    %v2619 = vunpack.c.l.s4 1983009808
    %v2620 = vunpack.c.0.s8 %v2619
    %v2621 = vlaneseq
    %v2622 = vshrl.u32 %v2621, 7
    %v2623 = vsub.s32 %v2620, %v2622
    %v2624 = vrot.slane %v2608, %v2623
    %v2626 = vunpack.c.l.s4 1983009808
    %v2627 = vunpack.c.0.s8 %v2626
    %v2628 = vlaneseq
    %v2629 = vshrl.u32 %v2628, 7
    %v2630 = vsub.s32 %v2627, %v2629
    %v2631 = vrot.slane %v2609, %v2630
    %v2633 = vunpack.c.l.s4 1983009808
    %v2634 = vunpack.c.0.s8 %v2633
    %v2635 = vlaneseq
    %v2636 = vshrl.u32 %v2635, 7
    %v2637 = vsub.s32 %v2634, %v2636
    %v2638 = vrot.slane %v2610, %v2637
    %v2639 = vcombine.low %v2617, %v2631
    %v2640 = vcombine.high %v2617, %v2631
    %v2641 = vcombine.low %v2624, %v2638
    %v2642 = vcombine.high %v2624, %v2638
    %v2643 = vcombine.low %v269, %v271
    %v2644 = vcombine.high %v269, %v271
    %v2645 = vcombine.low %v273, %v275
    %v2646 = vcombine.high %v273, %v275
    %v2648 = vunpack.c.l.s4 1983009808
    %v2649 = vunpack.c.0.s8 %v2648
    %v2650 = vlaneseq
    %v2651 = vshrl.u32 %v2650, 7
    %v2652 = vsub.s32 %v2649, %v2651
    %v2653 = vrot.slane %v2643, %v2652
    %v2655 = vunpack.c.l.s4 1983009808
    %v2656 = vunpack.c.0.s8 %v2655
    %v2657 = vlaneseq
    %v2658 = vshrl.u32 %v2657, 7
    %v2659 = vsub.s32 %v2656, %v2658
    %v2660 = vrot.slane %v2644, %v2659
    %v2662 = vunpack.c.l.s4 1983009808
    %v2663 = vunpack.c.0.s8 %v2662
    %v2664 = vlaneseq
    %v2665 = vshrl.u32 %v2664, 7
    %v2666 = vsub.s32 %v2663, %v2665
    %v2667 = vrot.slane %v2645, %v2666
    %v2669 = vunpack.c.l.s4 1983009808
    %v2670 = vunpack.c.0.s8 %v2669
    %v2671 = vlaneseq
    %v2672 = vshrl.u32 %v2671, 7
    %v2673 = vsub.s32 %v2670, %v2672
    %v2674 = vrot.slane %v2646, %v2673
    %v2675 = vcombine.low %v2653, %v2667
    %v2676 = vcombine.high %v2653, %v2667
    %v2677 = vcombine.low %v2660, %v2674
    %v2678 = vcombine.low %v276, %v278
    %v2679 = vcombine.high %v276, %v278
    %v2680 = vcombine.low %v280, %v282
    %v2681 = vcombine.high %v280, %v282
    %v2683 = vunpack.c.l.s4 1983009808
    %v2684 = vunpack.c.0.s8 %v2683
    %v2685 = vlaneseq
    %v2686 = vshrl.u32 %v2685, 7
    %v2687 = vsub.s32 %v2684, %v2686
    %v2688 = vrot.slane %v2678, %v2687
    %v2690 = vunpack.c.l.s4 1983009808
    %v2691 = vunpack.c.0.s8 %v2690
    %v2692 = vlaneseq
    %v2693 = vshrl.u32 %v2692, 7
    %v2694 = vsub.s32 %v2691, %v2693
    %v2695 = vrot.slane %v2679, %v2694
    %v2697 = vunpack.c.l.s4 1983009808
    %v2698 = vunpack.c.0.s8 %v2697
    %v2699 = vlaneseq
    %v2700 = vshrl.u32 %v2699, 7
    %v2701 = vsub.s32 %v2698, %v2700
    %v2702 = vrot.slane %v2680, %v2701
    %v2704 = vunpack.c.l.s4 1983009808
    %v2705 = vunpack.c.0.s8 %v2704
    %v2706 = vlaneseq
    %v2707 = vshrl.u32 %v2706, 7
    %v2708 = vsub.s32 %v2705, %v2707
    %v2709 = vrot.slane %v2681, %v2708
    %v2710 = vcombine.low %v2688, %v2702
    %v2711 = vcombine.high %v2688, %v2702
    %v2712 = vcombine.low %v2695, %v2709
    %v2713 = vcombine.high %v2695, %v2709
    %v2714 = vcombine.low %v277, %v279
    %v2715 = vcombine.high %v277, %v279
    %v2716 = vcombine.low %v281, %v283
    %v2717 = vcombine.high %v281, %v283
    %v2719 = vunpack.c.l.s4 1983009808
    %v2720 = vunpack.c.0.s8 %v2719
    %v2721 = vlaneseq
    %v2722 = vshrl.u32 %v2721, 7
    %v2723 = vsub.s32 %v2720, %v2722
    %v2724 = vrot.slane %v2714, %v2723
    %v2726 = vunpack.c.l.s4 1983009808
    %v2727 = vunpack.c.0.s8 %v2726
    %v2728 = vlaneseq
    %v2729 = vshrl.u32 %v2728, 7
    %v2730 = vsub.s32 %v2727, %v2729
    %v2731 = vrot.slane %v2715, %v2730
    %v2733 = vunpack.c.l.s4 1983009808
    %v2734 = vunpack.c.0.s8 %v2733
    %v2735 = vlaneseq
    %v2736 = vshrl.u32 %v2735, 7
    %v2737 = vsub.s32 %v2734, %v2736
    %v2738 = vrot.slane %v2716, %v2737
    %v2740 = vunpack.c.l.s4 1983009808
    %v2741 = vunpack.c.0.s8 %v2740
    %v2742 = vlaneseq
    %v2743 = vshrl.u32 %v2742, 7
    %v2744 = vsub.s32 %v2741, %v2743
    %v2745 = vrot.slane %v2717, %v2744
    %v2746 = vcombine.low %v2724, %v2738
    %v2747 = vcombine.high %v2724, %v2738
    %v2748 = vcombine.low %v2731, %v2745
    %v2749 = vcombine.low %v284, %v286
    %v2750 = vcombine.high %v284, %v286
    %v2751 = vcombine.low %v288, %v290
    %v2752 = vcombine.high %v288, %v290
    %v2754 = vunpack.c.l.s4 1983009808
    %v2755 = vunpack.c.0.s8 %v2754
    %v2756 = vlaneseq
    %v2757 = vshrl.u32 %v2756, 7
    %v2758 = vsub.s32 %v2755, %v2757
    %v2759 = vrot.slane %v2749, %v2758
    %v2761 = vunpack.c.l.s4 1983009808
    %v2762 = vunpack.c.0.s8 %v2761
    %v2763 = vlaneseq
    %v2764 = vshrl.u32 %v2763, 7
    %v2765 = vsub.s32 %v2762, %v2764
    %v2766 = vrot.slane %v2750, %v2765
    %v2768 = vunpack.c.l.s4 1983009808
    %v2769 = vunpack.c.0.s8 %v2768
    %v2770 = vlaneseq
    %v2771 = vshrl.u32 %v2770, 7
    %v2772 = vsub.s32 %v2769, %v2771
    %v2773 = vrot.slane %v2751, %v2772
    %v2775 = vunpack.c.l.s4 1983009808
    %v2776 = vunpack.c.0.s8 %v2775
    %v2777 = vlaneseq
    %v2778 = vshrl.u32 %v2777, 7
    %v2779 = vsub.s32 %v2776, %v2778
    %v2780 = vrot.slane %v2752, %v2779
    %v2781 = vcombine.low %v2759, %v2773
    %v2782 = vcombine.high %v2759, %v2773
    %v2783 = vcombine.low %v2766, %v2780
    %v2784 = vcombine.high %v2766, %v2780
    %v2785 = vcombine.low %v285, %v287
    %v2786 = vcombine.high %v285, %v287
    %v2787 = vcombine.low %v289, %v291
    %v2788 = vcombine.high %v289, %v291
    %v2790 = vunpack.c.l.s4 1983009808
    %v2791 = vunpack.c.0.s8 %v2790
    %v2792 = vlaneseq
    %v2793 = vshrl.u32 %v2792, 7
    %v2794 = vsub.s32 %v2791, %v2793
    %v2795 = vrot.slane %v2785, %v2794
    %v2797 = vunpack.c.l.s4 1983009808
    %v2798 = vunpack.c.0.s8 %v2797
    %v2799 = vlaneseq
    %v2800 = vshrl.u32 %v2799, 7
    %v2801 = vsub.s32 %v2798, %v2800
    %v2802 = vrot.slane %v2786, %v2801
    %v2804 = vunpack.c.l.s4 1983009808
    %v2805 = vunpack.c.0.s8 %v2804
    %v2806 = vlaneseq
    %v2807 = vshrl.u32 %v2806, 7
    %v2808 = vsub.s32 %v2805, %v2807
    %v2809 = vrot.slane %v2787, %v2808
    %v2811 = vunpack.c.l.s4 1983009808
    %v2812 = vunpack.c.0.s8 %v2811
    %v2813 = vlaneseq
    %v2814 = vshrl.u32 %v2813, 7
    %v2815 = vsub.s32 %v2812, %v2814
    %v2816 = vrot.slane %v2788, %v2815
    %v2817 = vcombine.low %v2795, %v2809
    %v2818 = vcombine.high %v2795, %v2809
    %v2819 = vcombine.low %v2802, %v2816
    %v3044 = vpack.c.bf16 %v651, %v580
    %v3045 = vpack.c.bf16 %v652, %v581
    %v3046 = vpack.c.bf16 %v653, %v582
    %v3047 = vpack.c.bf16 %v654, %v583
    %v3048 = vpack.c.bf16 %v687, %v616
    %v3049 = vpack.c.bf16 %v688, %v617
    %v3050 = vpack.c.bf16 %v689, %v618
    %v3051 = vpack.c.bf16 %v793, %v722
    %v3052 = vpack.c.bf16 %v794, %v723
    %v3053 = vpack.c.bf16 %v795, %v724
    %v3054 = vpack.c.bf16 %v796, %v725
    %v3055 = vpack.c.bf16 %v829, %v758
    %v3056 = vpack.c.bf16 %v830, %v759
    %v3057 = vpack.c.bf16 %v831, %v760
    %v3058 = vpack.c.bf16 %v935, %v864
    %v3059 = vpack.c.bf16 %v936, %v865
    %v3060 = vpack.c.bf16 %v937, %v866
    %v3061 = vpack.c.bf16 %v938, %v867
    %v3062 = vpack.c.bf16 %v971, %v900
    %v3063 = vpack.c.bf16 %v972, %v901
    %v3064 = vpack.c.bf16 %v973, %v902
    %v3065 = vpack.c.bf16 %v1077, %v1006
    %v3066 = vpack.c.bf16 %v1078, %v1007
    %v3067 = vpack.c.bf16 %v1079, %v1008
    %v3068 = vpack.c.bf16 %v1080, %v1009
    %v3069 = vpack.c.bf16 %v1113, %v1042
    %v3070 = vpack.c.bf16 %v1114, %v1043
    %v3071 = vpack.c.bf16 %v1115, %v1044
    %v3072 = vpack.c.bf16 %v1219, %v1148
    %v3073 = vpack.c.bf16 %v1220, %v1149
    %v3074 = vpack.c.bf16 %v1221, %v1150
    %v3075 = vpack.c.bf16 %v1222, %v1151
    %v3076 = vpack.c.bf16 %v1255, %v1184
    %v3077 = vpack.c.bf16 %v1256, %v1185
    %v3078 = vpack.c.bf16 %v1257, %v1186
    %v3079 = vpack.c.bf16 %v1361, %v1290
    %v3080 = vpack.c.bf16 %v1362, %v1291
    %v3081 = vpack.c.bf16 %v1363, %v1292
    %v3082 = vpack.c.bf16 %v1364, %v1293
    %v3083 = vpack.c.bf16 %v1397, %v1326
    %v3084 = vpack.c.bf16 %v1398, %v1327
    %v3085 = vpack.c.bf16 %v1399, %v1328
    %v3086 = vpack.c.bf16 %v1503, %v1432
    %v3087 = vpack.c.bf16 %v1504, %v1433
    %v3088 = vpack.c.bf16 %v1505, %v1434
    %v3089 = vpack.c.bf16 %v1506, %v1435
    %v3090 = vpack.c.bf16 %v1539, %v1468
    %v3091 = vpack.c.bf16 %v1540, %v1469
    %v3092 = vpack.c.bf16 %v1541, %v1470
    %v3093 = vpack.c.bf16 %v1645, %v1574
    %v3094 = vpack.c.bf16 %v1646, %v1575
    %v3095 = vpack.c.bf16 %v1647, %v1576
    %v3096 = vpack.c.bf16 %v1648, %v1577
    %v3097 = vpack.c.bf16 %v1681, %v1610
    %v3098 = vpack.c.bf16 %v1682, %v1611
    %v3099 = vpack.c.bf16 %v1683, %v1612
    %v3100 = vpack.c.bf16 %v1787, %v1716
    %v3101 = vpack.c.bf16 %v1788, %v1717
    %v3102 = vpack.c.bf16 %v1789, %v1718
    %v3103 = vpack.c.bf16 %v1790, %v1719
    %v3104 = vpack.c.bf16 %v1823, %v1752
    %v3105 = vpack.c.bf16 %v1824, %v1753
    %v3106 = vpack.c.bf16 %v1825, %v1754
    %v3107 = vpack.c.bf16 %v1929, %v1858
    %v3108 = vpack.c.bf16 %v1930, %v1859
    %v3109 = vpack.c.bf16 %v1931, %v1860
    %v3110 = vpack.c.bf16 %v1932, %v1861
    %v3111 = vpack.c.bf16 %v1965, %v1894
    %v3112 = vpack.c.bf16 %v1966, %v1895
    %v3113 = vpack.c.bf16 %v1967, %v1896
    %v3114 = vpack.c.bf16 %v2071, %v2000
    %v3115 = vpack.c.bf16 %v2072, %v2001
    %v3116 = vpack.c.bf16 %v2073, %v2002
    %v3117 = vpack.c.bf16 %v2074, %v2003
    %v3118 = vpack.c.bf16 %v2107, %v2036
    %v3119 = vpack.c.bf16 %v2108, %v2037
    %v3120 = vpack.c.bf16 %v2109, %v2038
    %v3121 = vpack.c.bf16 %v2213, %v2142
    %v3122 = vpack.c.bf16 %v2214, %v2143
    %v3123 = vpack.c.bf16 %v2215, %v2144
    %v3124 = vpack.c.bf16 %v2216, %v2145
    %v3125 = vpack.c.bf16 %v2249, %v2178
    %v3126 = vpack.c.bf16 %v2250, %v2179
    %v3127 = vpack.c.bf16 %v2251, %v2180
    %v3128 = vpack.c.bf16 %v2355, %v2284
    %v3129 = vpack.c.bf16 %v2356, %v2285
    %v3130 = vpack.c.bf16 %v2357, %v2286
    %v3131 = vpack.c.bf16 %v2358, %v2287
    %v3132 = vpack.c.bf16 %v2391, %v2320
    %v3133 = vpack.c.bf16 %v2392, %v2321
    %v3134 = vpack.c.bf16 %v2393, %v2322
    %v3135 = vpack.c.bf16 %v2497, %v2426
    %v3136 = vpack.c.bf16 %v2498, %v2427
    %v3137 = vpack.c.bf16 %v2499, %v2428
    %v3138 = vpack.c.bf16 %v2500, %v2429
    %v3139 = vpack.c.bf16 %v2533, %v2462
    %v3140 = vpack.c.bf16 %v2534, %v2463
    %v3141 = vpack.c.bf16 %v2535, %v2464
    %v3142 = vpack.c.bf16 %v2639, %v2568
    %v3143 = vpack.c.bf16 %v2640, %v2569
    %v3144 = vpack.c.bf16 %v2641, %v2570
    %v3145 = vpack.c.bf16 %v2642, %v2571
    %v3146 = vpack.c.bf16 %v2675, %v2604
    %v3147 = vpack.c.bf16 %v2676, %v2605
    %v3148 = vpack.c.bf16 %v2677, %v2606
    %v3149 = vpack.c.bf16 %v2781, %v2710
    %v3150 = vpack.c.bf16 %v2782, %v2711
    %v3151 = vpack.c.bf16 %v2783, %v2712
    %v3152 = vpack.c.bf16 %v2784, %v2713
    %v3153 = vpack.c.bf16 %v2817, %v2746
    %v3154 = vpack.c.bf16 %v2818, %v2747
    %v3155 = vpack.c.bf16 %v2819, %v2748
    %v3156 = vld [vmem:[#allocation2] sm:$0xf]
    %v3157 = vld [vmem:[#allocation2 + $0x4] sm:$0xf]
    %v3158 = vld [vmem:[#allocation2 + $0x8] sm:$0xf]
    %v3159 = vld [vmem:[#allocation2 + $0xc] sm:$0xf]
    %v3160 = vld [vmem:[#allocation2 + $0x10] sm:$0xf]
    %v3161 = vld [vmem:[#allocation2 + $0x14] sm:$0xf]
    %v3162 = vld [vmem:[#allocation2 + $0x18] sm:$0xf]
    %v3163 = vld [vmem:[#allocation2 + $0x1c] sm:$0xf]
    %v3164 = vld [vmem:[#allocation2 + $0x20] sm:$0xf]
    %v3165 = vld [vmem:[#allocation2 + $0x24] sm:$0xf]
    %v3166 = vld [vmem:[#allocation2 + $0x28] sm:$0xf]
    %v3167 = vld [vmem:[#allocation2 + $0x2c] sm:$0xf]
    %v3168 = vld [vmem:[#allocation2 + $0x30] sm:$0xf]
    %v3169 = vld [vmem:[#allocation2 + $0x34] sm:$0xf]
    %v3170 = vld [vmem:[#allocation2 + $0x38] sm:$0xf]
    %v3171 = vld [vmem:[#allocation2 + $0x3c] sm:$0xf]
    %v3172 = vld [vmem:[#allocation2 + $0x40] sm:$0xf]
    %v3173 = vld [vmem:[#allocation2 + $0x44] sm:$0xf]
    %v3174 = vld [vmem:[#allocation2 + $0x48] sm:$0xf]
    %v3175 = vld [vmem:[#allocation2 + $0x4c] sm:$0xf]
    %v3176 = vld [vmem:[#allocation2 + $0x50] sm:$0xf]
    %v3177 = vld [vmem:[#allocation2 + $0x54] sm:$0xf]
    %v3178 = vld [vmem:[#allocation2 + $0x58] sm:$0xf]
    %v3179 = vld [vmem:[#allocation2 + $0x5c] sm:$0xf]
    %v3180 = vld [vmem:[#allocation2 + $0x60] sm:$0xf]
    %v3181 = vld [vmem:[#allocation2 + $0x64] sm:$0xf]
    %v3182 = vld [vmem:[#allocation2 + $0x68] sm:$0xf]
    %v3183 = vld [vmem:[#allocation2 + $0x6c] sm:$0xf]
    %v3184 = vld [vmem:[#allocation2 + $0x70] sm:$0xf]
    %v3185 = vld [vmem:[#allocation2 + $0x74] sm:$0xf]
    %v3186 = vld [vmem:[#allocation2 + $0x78] sm:$0xf]
    %v3187 = vld [vmem:[#allocation2 + $0x7c] sm:$0xf]
    %v3188 = vld [vmem:[#allocation2 + $0x80] sm:$0xf]
    %v3189 = vld [vmem:[#allocation2 + $0x84] sm:$0xf]
    %v3190 = vld [vmem:[#allocation2 + $0x88] sm:$0xf]
    %v3191 = vld [vmem:[#allocation2 + $0x8c] sm:$0xf]
    %v3192 = vld [vmem:[#allocation2 + $0x90] sm:$0xf]
    %v3193 = vld [vmem:[#allocation2 + $0x94] sm:$0xf]
    %v3194 = vld [vmem:[#allocation2 + $0x98] sm:$0xf]
    %v3195 = vld [vmem:[#allocation2 + $0x9c] sm:$0xf]
    %v3196 = vld [vmem:[#allocation2 + $0xa0] sm:$0xf]
    %v3197 = vld [vmem:[#allocation2 + $0xa4] sm:$0xf]
    %v3198 = vld [vmem:[#allocation2 + $0xa8] sm:$0xf]
    %v3199 = vld [vmem:[#allocation2 + $0xac] sm:$0xf]
    %v3200 = vld [vmem:[#allocation2 + $0xb0] sm:$0xf]
    %v3201 = vld [vmem:[#allocation2 + $0xb4] sm:$0xf]
    %v3202 = vld [vmem:[#allocation2 + $0xb8] sm:$0xf]
    %v3203 = vld [vmem:[#allocation2 + $0xbc] sm:$0xf]
    %v3204 = vld [vmem:[#allocation2 + $0xc0] sm:$0xf]
    %v3205 = vld [vmem:[#allocation2 + $0xc4] sm:$0xf]
    %v3206 = vld [vmem:[#allocation2 + $0xc8] sm:$0xf]
    %v3207 = vld [vmem:[#allocation2 + $0xcc] sm:$0xf]
    %v3208 = vld [vmem:[#allocation2 + $0xd0] sm:$0xf]
    %v3209 = vld [vmem:[#allocation2 + $0xd4] sm:$0xf]
    %v3210 = vld [vmem:[#allocation2 + $0xd8] sm:$0xf]
    %v3211 = vld [vmem:[#allocation2 + $0xdc] sm:$0xf]
    %v3212 = vld [vmem:[#allocation2 + $0xe0] sm:$0xf]
    %v3213 = vld [vmem:[#allocation2 + $0xe4] sm:$0xf]
    %v3214 = vld [vmem:[#allocation2 + $0xe8] sm:$0xf]
    %v3215 = vld [vmem:[#allocation2 + $0xec] sm:$0xf]
    %v3216 = vld [vmem:[#allocation2 + $0xf0] sm:$0xf]
    %v3217 = vld [vmem:[#allocation2 + $0xf4] sm:$0xf]
    %v3218 = vld [vmem:[#allocation2 + $0xf8] sm:$0xf]
    %v3219 = vld [vmem:[#allocation2 + $0xfc] sm:$0xf]
    %v3220 = vld [vmem:[#allocation2 + $0x100] sm:$0xf]
    %v3221 = vld [vmem:[#allocation2 + $0x104] sm:$0xf]
    %v3222 = vld [vmem:[#allocation2 + $0x108] sm:$0xf]
    %v3223 = vld [vmem:[#allocation2 + $0x10c] sm:$0xf]
    %v3224 = vld [vmem:[#allocation2 + $0x110] sm:$0xf]
    %v3225 = vld [vmem:[#allocation2 + $0x114] sm:$0xf]
    %v3226 = vld [vmem:[#allocation2 + $0x118] sm:$0xf]
    %v3227 = vld [vmem:[#allocation2 + $0x11c] sm:$0xf]
    %v3228 = vld [vmem:[#allocation2 + $0x120] sm:$0xf]
    %v3229 = vld [vmem:[#allocation2 + $0x124] sm:$0xf]
    %v3230 = vld [vmem:[#allocation2 + $0x128] sm:$0xf]
    %v3231 = vld [vmem:[#allocation2 + $0x12c] sm:$0xf]
    %v3232 = vld [vmem:[#allocation2 + $0x130] sm:$0xf]
    %v3233 = vld [vmem:[#allocation2 + $0x134] sm:$0xf]
    %v3234 = vld [vmem:[#allocation2 + $0x138] sm:$0xf]
    %v3235 = vld [vmem:[#allocation2 + $0x13c] sm:$0xf]
    %v3236 = vld [vmem:[#allocation2 + $0x140] sm:$0xf]
    %v3237 = vld [vmem:[#allocation2 + $0x144] sm:$0xf]
    %v3238 = vld [vmem:[#allocation2 + $0x148] sm:$0xf]
    %v3239 = vld [vmem:[#allocation2 + $0x14c] sm:$0xf]
    %v3240 = vld [vmem:[#allocation2 + $0x150] sm:$0xf]
    %v3241 = vld [vmem:[#allocation2 + $0x154] sm:$0xf]
    %v3242 = vld [vmem:[#allocation2 + $0x158] sm:$0xf]
    %v3243 = vld [vmem:[#allocation2 + $0x15c] sm:$0xf]
    %v3244 = vld [vmem:[#allocation2 + $0x160] sm:$0xf]
    %v3245 = vld [vmem:[#allocation2 + $0x164] sm:$0xf]
    %v3246 = vld [vmem:[#allocation2 + $0x168] sm:$0xf]
    %v3247 = vld [vmem:[#allocation2 + $0x16c] sm:$0xf]
    %v3248 = vld [vmem:[#allocation2 + $0x170] sm:$0xf]
    %v3249 = vld [vmem:[#allocation2 + $0x174] sm:$0xf]
    %v3250 = vld [vmem:[#allocation2 + $0x178] sm:$0xf]
    %v3251 = vld [vmem:[#allocation2 + $0x17c] sm:$0xf]
    %v3252 = vld [vmem:[#allocation2 + $0x180] sm:$0xf]
    %v3253 = vld [vmem:[#allocation2 + $0x184] sm:$0xf]
    %v3254 = vld [vmem:[%s2] sm:$0x1]
    %v3256 = vlaneseq
    %v3257 = vshrl.u32 %v3256, 7
    %v3258 = vsub.s32 0, %v3257
    %v3259 = vrot.slane %v3254, %v3258
    %v3359 = vunpack.c.l.b16 %v3156
    %v3360 = vunpack.c.l.b16 %v3157
    %v3361 = vunpack.c.l.b16 %v3158
    %v3362 = vunpack.c.l.b16 %v3159
    %v3363 = vunpack.c.l.b16 %v3160
    %v3364 = vunpack.c.l.b16 %v3161
    %v3365 = vunpack.c.l.b16 %v3162
    %v3366 = vunpack.c.l.b16 %v3163
    %v3367 = vunpack.c.l.b16 %v3164
    %v3368 = vunpack.c.l.b16 %v3165
    %v3369 = vunpack.c.l.b16 %v3166
    %v3370 = vunpack.c.l.b16 %v3167
    %v3371 = vunpack.c.l.b16 %v3168
    %v3372 = vunpack.c.l.b16 %v3169
    %v3373 = vunpack.c.l.b16 %v3170
    %v3374 = vunpack.c.l.b16 %v3171
    %v3375 = vunpack.c.l.b16 %v3172
    %v3376 = vunpack.c.l.b16 %v3173
    %v3377 = vunpack.c.l.b16 %v3174
    %v3378 = vunpack.c.l.b16 %v3175
    %v3379 = vunpack.c.l.b16 %v3176
    %v3380 = vunpack.c.l.b16 %v3177
    %v3381 = vunpack.c.l.b16 %v3178
    %v3382 = vunpack.c.l.b16 %v3179
    %v3383 = vunpack.c.l.b16 %v3180
    %v3384 = vunpack.c.l.b16 %v3181
    %v3385 = vunpack.c.l.b16 %v3182
    %v3386 = vunpack.c.l.b16 %v3183
    %v3387 = vunpack.c.l.b16 %v3184
    %v3388 = vunpack.c.l.b16 %v3185
    %v3389 = vunpack.c.l.b16 %v3186
    %v3390 = vunpack.c.l.b16 %v3187
    %v3391 = vunpack.c.l.b16 %v3188
    %v3392 = vunpack.c.l.b16 %v3189
    %v3393 = vunpack.c.l.b16 %v3190
    %v3394 = vunpack.c.l.b16 %v3191
    %v3395 = vunpack.c.l.b16 %v3192
    %v3396 = vunpack.c.l.b16 %v3193
    %v3397 = vunpack.c.l.b16 %v3194
    %v3398 = vunpack.c.l.b16 %v3195
    %v3399 = vunpack.c.l.b16 %v3196
    %v3400 = vunpack.c.l.b16 %v3197
    %v3401 = vunpack.c.l.b16 %v3198
    %v3402 = vunpack.c.l.b16 %v3199
    %v3403 = vunpack.c.l.b16 %v3200
    %v3404 = vunpack.c.l.b16 %v3201
    %v3405 = vunpack.c.l.b16 %v3202
    %v3406 = vunpack.c.l.b16 %v3203
    %v3407 = vunpack.c.l.b16 %v3204
    %v3408 = vunpack.c.l.b16 %v3205
    %v3409 = vunpack.c.l.b16 %v3206
    %v3410 = vunpack.c.l.b16 %v3207
    %v3411 = vunpack.c.l.b16 %v3208
    %v3412 = vunpack.c.l.b16 %v3209
    %v3413 = vunpack.c.l.b16 %v3210
    %v3414 = vunpack.c.l.b16 %v3211
    %v3415 = vunpack.c.l.b16 %v3212
    %v3416 = vunpack.c.l.b16 %v3213
    %v3417 = vunpack.c.l.b16 %v3214
    %v3418 = vunpack.c.l.b16 %v3215
    %v3419 = vunpack.c.l.b16 %v3216
    %v3420 = vunpack.c.l.b16 %v3217
    %v3421 = vunpack.c.l.b16 %v3218
    %v3422 = vunpack.c.l.b16 %v3219
    %v3423 = vunpack.c.l.b16 %v3220
    %v3424 = vunpack.c.l.b16 %v3221
    %v3425 = vunpack.c.l.b16 %v3222
    %v3426 = vunpack.c.l.b16 %v3223
    %v3427 = vunpack.c.l.b16 %v3224
    %v3428 = vunpack.c.l.b16 %v3225
    %v3429 = vunpack.c.l.b16 %v3226
    %v3430 = vunpack.c.l.b16 %v3227
    %v3431 = vunpack.c.l.b16 %v3228
    %v3432 = vunpack.c.l.b16 %v3229
    %v3433 = vunpack.c.l.b16 %v3230
    %v3434 = vunpack.c.l.b16 %v3231
    %v3435 = vunpack.c.l.b16 %v3232
    %v3436 = vunpack.c.l.b16 %v3233
    %v3437 = vunpack.c.l.b16 %v3234
    %v3438 = vunpack.c.l.b16 %v3235
    %v3439 = vunpack.c.l.b16 %v3236
    %v3440 = vunpack.c.l.b16 %v3237
    %v3441 = vunpack.c.l.b16 %v3238
    %v3442 = vunpack.c.l.b16 %v3239
    %v3443 = vunpack.c.l.b16 %v3240
    %v3444 = vunpack.c.l.b16 %v3241
    %v3445 = vunpack.c.l.b16 %v3242
    %v3446 = vunpack.c.l.b16 %v3243
    %v3447 = vunpack.c.l.b16 %v3244
    %v3448 = vunpack.c.l.b16 %v3245
    %v3449 = vunpack.c.l.b16 %v3246
    %v3450 = vunpack.c.l.b16 %v3247
    %v3451 = vunpack.c.l.b16 %v3248
    %v3452 = vunpack.c.l.b16 %v3249
    %v3453 = vunpack.c.l.b16 %v3250
    %v3454 = vunpack.c.l.b16 %v3251
    %v3455 = vunpack.c.l.b16 %v3252
    %v3456 = vunpack.c.l.b16 %v3253
    %v3457 = vpack.c.b16 %v3360, %v3359
    %v3458 = vpack.c.b16 %v3362, %v3361
    %v3459 = vpack.c.b16 %v3364, %v3363
    %v3460 = vpack.c.b16 %v3366, %v3365
    %v3461 = vpack.c.b16 %v3368, %v3367
    %v3462 = vpack.c.b16 %v3370, %v3369
    %v3463 = vpack.c.b16 %v3372, %v3371
    %v3464 = vpack.c.b16 %v3374, %v3373
    %v3465 = vpack.c.b16 %v3376, %v3375
    %v3466 = vpack.c.b16 %v3378, %v3377
    %v3467 = vpack.c.b16 %v3380, %v3379
    %v3468 = vpack.c.b16 %v3382, %v3381
    %v3469 = vpack.c.b16 %v3384, %v3383
    %v3470 = vpack.c.b16 %v3386, %v3385
    %v3471 = vpack.c.b16 %v3388, %v3387
    %v3472 = vpack.c.b16 %v3390, %v3389
    %v3473 = vpack.c.b16 %v3392, %v3391
    %v3474 = vpack.c.b16 %v3394, %v3393
    %v3475 = vpack.c.b16 %v3396, %v3395
    %v3476 = vpack.c.b16 %v3398, %v3397
    %v3477 = vpack.c.b16 %v3400, %v3399
    %v3478 = vpack.c.b16 %v3402, %v3401
    %v3479 = vpack.c.b16 %v3404, %v3403
    %v3480 = vpack.c.b16 %v3406, %v3405
    %v3481 = vpack.c.b16 %v3408, %v3407
    %v3482 = vpack.c.b16 %v3410, %v3409
    %v3483 = vpack.c.b16 %v3412, %v3411
    %v3484 = vpack.c.b16 %v3414, %v3413
    %v3485 = vpack.c.b16 %v3416, %v3415
    %v3486 = vpack.c.b16 %v3418, %v3417
    %v3487 = vpack.c.b16 %v3420, %v3419
    %v3488 = vpack.c.b16 %v3422, %v3421
    %v3489 = vpack.c.b16 %v3424, %v3423
    %v3490 = vpack.c.b16 %v3426, %v3425
    %v3491 = vpack.c.b16 %v3428, %v3427
    %v3492 = vpack.c.b16 %v3430, %v3429
    %v3493 = vpack.c.b16 %v3432, %v3431
    %v3494 = vpack.c.b16 %v3434, %v3433
    %v3495 = vpack.c.b16 %v3436, %v3435
    %v3496 = vpack.c.b16 %v3438, %v3437
    %v3497 = vpack.c.b16 %v3440, %v3439
    %v3498 = vpack.c.b16 %v3442, %v3441
    %v3499 = vpack.c.b16 %v3444, %v3443
    %v3500 = vpack.c.b16 %v3446, %v3445
    %v3501 = vpack.c.b16 %v3448, %v3447
    %v3502 = vpack.c.b16 %v3450, %v3449
    %v3503 = vpack.c.b16 %v3452, %v3451
    %v3504 = vpack.c.b16 %v3454, %v3453
    %v3505 = vpack.c.b16 %v3456, %v3455
    %vm3555 = vcmask 130048
    %v3557 = vsel %vm3555, %v3050, 0
    %v3560 = vsel %vm3555, %v3057, 0
    %v3563 = vsel %vm3555, %v3064, 0
    %v3566 = vsel %vm3555, %v3071, 0
    %v3569 = vsel %vm3555, %v3078, 0
    %v3572 = vsel %vm3555, %v3085, 0
    %v3575 = vsel %vm3555, %v3092, 0
    %v3578 = vsel %vm3555, %v3099, 0
    %v3581 = vsel %vm3555, %v3106, 0
    %v3584 = vsel %vm3555, %v3113, 0
    %v3587 = vsel %vm3555, %v3120, 0
    %v3590 = vsel %vm3555, %v3127, 0
    %v3593 = vsel %vm3555, %v3134, 0
    %v3596 = vsel %vm3555, %v3141, 0
    %v3599 = vsel %vm3555, %v3148, 0
    %v3602 = vsel %vm3555, %v3155, 0
    %3604 = vmatprep.subr.bf16.mxu0 0
    %3605 = vmatpush1.bf16.msra.mxu0 %v3457
    %3606 = vmatprep.subr.bf16.mxu0 0
    %3607 = vmatpush1.bf16.msra.mxu0 %v3458
    %3608 = vmatprep.subr.bf16.mxu0 0
    %3609 = vmatpush1.bf16.msra.mxu0 %v3459
    %3610 = vmatprep.subr.bf16.mxu0 0
    %3611 = vmatpush1.bf16.msra.mxu0 %v3460
    %3612 = vmatprep.subr.bf16.mxu0 0
    %3613 = vmatpush1.bf16.msra.mxu0 %v3461
    %3614 = vmatprep.subr.bf16.mxu0 0
    %3615 = vmatpush1.bf16.msra.mxu0 %v3462
    %3616 = vmatprep.subr.bf16.mxu0 0
    %3617 = vmatpush1.bf16.msra.mxu0 %v3463
    %3618 = vmatprep.subr.bf16.mxu0 0
    %3619 = vmatpush1.bf16.msra.mxu0 %v3464
    %3620 = vmatprep.subr.bf16.mxu0 0
    %3621 = vmatpush1.bf16.msra.mxu0 %v3465
    %3622 = vmatprep.subr.bf16.mxu0 0
    %3623 = vmatpush1.bf16.msra.mxu0 %v3466
    %3624 = vmatprep.subr.bf16.mxu0 0
    %3625 = vmatpush1.bf16.msra.mxu0 %v3467
    %3626 = vmatprep.subr.bf16.mxu0 0
    %3627 = vmatpush1.bf16.msra.mxu0 %v3468
    %3628 = vmatprep.subr.bf16.mxu0 0
    %3629 = vmatpush1.bf16.msra.mxu0 %v3469
    %3630 = vmatprep.subr.bf16.mxu0 0
    %3631 = vmatpush1.bf16.msra.mxu0 %v3470
    %3632 = vmatprep.subr.bf16.mxu0 0
    %3633 = vmatpush1.bf16.msra.mxu0 %v3471
    %3634 = vmatprep.subr.bf16.mxu0 0
    %3635 = vmatpush1.bf16.msra.mxu0 %v3472
    %3636 = vmatprep.mubr.bf16.mxu0 %v3045
    %3637 = vmatmul.mubr.bf16.gmra.mrb[0].mxu0 %v3044
    %v3638 = vpop.f32.mrb[0].mxu0
    %v3639 = vadd.f32 %v3259, %v3638
    %v3640 = vpop.f32.mrb[0].mxu0
    %v3641 = vpop.f32.mrb[0].mxu0
    %v3642 = vadd.f32 %v3259, %v3641
    %v3643 = vpop.f32.mrb[0].mxu0
    %3644 = vmatprep.mubr.bf16.mxu0 %v3052
    %3645 = vmatmul.mubr.bf16.gmra.mrb[0].mxu0 %v3051
    %v3646 = vpop.f32.mrb[0].mxu0
    %v3647 = vadd.f32 %v3259, %v3646
    %v3648 = vpop.f32.mrb[0].mxu0
    %v3649 = vpop.f32.mrb[0].mxu0
    %v3650 = vadd.f32 %v3259, %v3649
    %v3651 = vpop.f32.mrb[0].mxu0
    %3652 = vmatprep.mubr.bf16.mxu0 %v3059
    %3653 = vmatmul.mubr.bf16.gmra.mrb[0].mxu0 %v3058
    %v3654 = vpop.f32.mrb[0].mxu0
    %v3655 = vadd.f32 %v3259, %v3654
    %v3656 = vpop.f32.mrb[0].mxu0
    %v3657 = vpop.f32.mrb[0].mxu0
    %v3658 = vadd.f32 %v3259, %v3657
    %v3659 = vpop.f32.mrb[0].mxu0
    %3660 = vmatprep.mubr.bf16.mxu0 %v3066
    %3661 = vmatmul.mubr.bf16.gmra.mrb[0].mxu0 %v3065
    %v3662 = vpop.f32.mrb[0].mxu0
    %v3663 = vadd.f32 %v3259, %v3662
    %v3664 = vpop.f32.mrb[0].mxu0
    %v3665 = vpop.f32.mrb[0].mxu0
    %v3666 = vadd.f32 %v3259, %v3665
    %v3667 = vpop.f32.mrb[0].mxu0
    %3668 = vmatprep.mubr.bf16.mxu0 %v3073
    %3669 = vmatmul.mubr.bf16.gmra.mrb[0].mxu0 %v3072
    %v3670 = vpop.f32.mrb[0].mxu0
    %v3671 = vadd.f32 %v3259, %v3670
    %v3672 = vpop.f32.mrb[0].mxu0
    %v3673 = vpop.f32.mrb[0].mxu0
    %v3674 = vadd.f32 %v3259, %v3673
    %v3675 = vpop.f32.mrb[0].mxu0
    %3676 = vmatprep.mubr.bf16.mxu0 %v3080
    %3677 = vmatmul.mubr.bf16.gmra.mrb[0].mxu0 %v3079
    %v3678 = vpop.f32.mrb[0].mxu0
    %v3679 = vadd.f32 %v3259, %v3678
    %v3680 = vpop.f32.mrb[0].mxu0
    %v3681 = vpop.f32.mrb[0].mxu0
    %v3682 = vadd.f32 %v3259, %v3681
    %v3683 = vpop.f32.mrb[0].mxu0
    %3684 = vmatprep.mubr.bf16.mxu0 %v3087
    %3685 = vmatmul.mubr.bf16.gmra.mrb[0].mxu0 %v3086
    %v3686 = vpop.f32.mrb[0].mxu0
    %v3687 = vadd.f32 %v3259, %v3686
    %v3688 = vpop.f32.mrb[0].mxu0
    %v3689 = vpop.f32.mrb[0].mxu0
    %v3690 = vadd.f32 %v3259, %v3689
    %v3691 = vpop.f32.mrb[0].mxu0
    %3692 = vmatprep.mubr.bf16.mxu0 %v3094
    %3693 = vmatmul.mubr.bf16.gmra.mrb[0].mxu0 %v3093
    %v3694 = vpop.f32.mrb[0].mxu0
    %v3695 = vadd.f32 %v3259, %v3694
    %v3696 = vpop.f32.mrb[0].mxu0
    %v3697 = vpop.f32.mrb[0].mxu0
    %v3698 = vadd.f32 %v3259, %v3697
    %v3699 = vpop.f32.mrb[0].mxu0
    %3700 = vmatprep.mubr.bf16.mxu0 %v3101
    %3701 = vmatmul.mubr.bf16.gmra.mrb[0].mxu0 %v3100
    %v3702 = vpop.f32.mrb[0].mxu0
    %v3703 = vadd.f32 %v3259, %v3702
    %v3704 = vpop.f32.mrb[0].mxu0
    %v3705 = vpop.f32.mrb[0].mxu0
    %v3706 = vadd.f32 %v3259, %v3705
    %v3707 = vpop.f32.mrb[0].mxu0
    %3708 = vmatprep.mubr.bf16.mxu0 %v3108
    %3709 = vmatmul.mubr.bf16.gmra.mrb[0].mxu0 %v3107
    %v3710 = vpop.f32.mrb[0].mxu0
    %v3711 = vadd.f32 %v3259, %v3710
    %v3712 = vpop.f32.mrb[0].mxu0
    %v3713 = vpop.f32.mrb[0].mxu0
    %v3714 = vadd.f32 %v3259, %v3713
    %v3715 = vpop.f32.mrb[0].mxu0
    %3716 = vmatprep.mubr.bf16.mxu0 %v3115
    %3717 = vmatmul.mubr.bf16.gmra.mrb[0].mxu0 %v3114
    %v3718 = vpop.f32.mrb[0].mxu0
    %v3719 = vadd.f32 %v3259, %v3718
    %v3720 = vpop.f32.mrb[0].mxu0
    %v3721 = vpop.f32.mrb[0].mxu0
    %v3722 = vadd.f32 %v3259, %v3721
    %v3723 = vpop.f32.mrb[0].mxu0
    %3724 = vmatprep.mubr.bf16.mxu0 %v3122
    %3725 = vmatmul.mubr.bf16.gmra.mrb[0].mxu0 %v3121
    %v3726 = vpop.f32.mrb[0].mxu0
    %v3727 = vadd.f32 %v3259, %v3726
    %v3728 = vpop.f32.mrb[0].mxu0
    %v3729 = vpop.f32.mrb[0].mxu0
    %v3730 = vadd.f32 %v3259, %v3729
    %v3731 = vpop.f32.mrb[0].mxu0
    %3732 = vmatprep.mubr.bf16.mxu0 %v3129
    %3733 = vmatmul.mubr.bf16.gmra.mrb[0].mxu0 %v3128
    %v3734 = vpop.f32.mrb[0].mxu0
    %v3735 = vadd.f32 %v3259, %v3734
    %v3736 = vpop.f32.mrb[0].mxu0
    %v3737 = vpop.f32.mrb[0].mxu0
    %v3738 = vadd.f32 %v3259, %v3737
    %v3739 = vpop.f32.mrb[0].mxu0
    %3740 = vmatprep.mubr.bf16.mxu0 %v3136
    %3741 = vmatmul.mubr.bf16.gmra.mrb[0].mxu0 %v3135
    %v3742 = vpop.f32.mrb[0].mxu0
    %v3743 = vadd.f32 %v3259, %v3742
    %v3744 = vpop.f32.mrb[0].mxu0
    %v3745 = vpop.f32.mrb[0].mxu0
    %v3746 = vadd.f32 %v3259, %v3745
    %v3747 = vpop.f32.mrb[0].mxu0
    %3748 = vmatprep.mubr.bf16.mxu0 %v3143
    %3749 = vmatmul.mubr.bf16.gmra.mrb[0].mxu0 %v3142
    %v3750 = vpop.f32.mrb[0].mxu0
    %v3751 = vadd.f32 %v3259, %v3750
    %v3752 = vpop.f32.mrb[0].mxu0
    %v3753 = vpop.f32.mrb[0].mxu0
    %v3754 = vadd.f32 %v3259, %v3753
    %v3755 = vpop.f32.mrb[0].mxu0
    %3756 = vmatprep.mubr.bf16.mxu0 %v3150
    %3757 = vmatmul.mubr.bf16.gmra.mrb[0].mxu0 %v3149
    %v3758 = vpop.f32.mrb[0].mxu0
    %v3759 = vadd.f32 %v3259, %v3758
    %v3760 = vpop.f32.mrb[0].mxu0
    %v3761 = vpop.f32.mrb[0].mxu0
    %v3762 = vadd.f32 %v3259, %v3761
    %v3763 = vpop.f32.mrb[0].mxu0
    %3764 = vdwg.mxu0
    %3765 = vmatprep.subr.bf16.mxu0 0
    %3766 = vmatpush1.bf16.msra.mxu0 %v3473
    %3767 = vmatprep.subr.bf16.mxu0 0
    %3768 = vmatpush1.bf16.msra.mxu0 %v3474
    %3769 = vmatprep.subr.bf16.mxu0 0
    %3770 = vmatpush1.bf16.msra.mxu0 %v3475
    %3771 = vmatprep.subr.bf16.mxu0 0
    %3772 = vmatpush1.bf16.msra.mxu0 %v3476
    %3773 = vmatprep.subr.bf16.mxu0 0
    %3774 = vmatpush1.bf16.msra.mxu0 %v3477
    %3775 = vmatprep.subr.bf16.mxu0 0
    %3776 = vmatpush1.bf16.msra.mxu0 %v3478
    %3777 = vmatprep.subr.bf16.mxu0 0
    %3778 = vmatpush1.bf16.msra.mxu0 %v3479
    %3779 = vmatprep.subr.bf16.mxu0 0
    %3780 = vmatpush1.bf16.msra.mxu0 %v3480
    %3781 = vmatprep.subr.bf16.mxu0 0
    %3782 = vmatpush1.bf16.msra.mxu0 %v3481
    %3783 = vmatprep.subr.bf16.mxu0 0
    %3784 = vmatpush1.bf16.msra.mxu0 %v3482
    %3785 = vmatprep.subr.bf16.mxu0 0
    %3786 = vmatpush1.bf16.msra.mxu0 %v3483
    %3787 = vmatprep.subr.bf16.mxu0 0
    %3788 = vmatpush1.bf16.msra.mxu0 %v3484
    %3789 = vmatprep.subr.bf16.mxu0 0
    %3790 = vmatpush1.bf16.msra.mxu0 %v3485
    %3791 = vmatprep.subr.bf16.mxu0 0
    %3792 = vmatpush1.bf16.msra.mxu0 %v3486
    %3793 = vmatprep.subr.bf16.mxu0 0
    %3794 = vmatpush1.bf16.msra.mxu0 %v3487
    %3795 = vmatprep.subr.bf16.mxu0 0
    %3796 = vmatpush1.bf16.msra.mxu0 %v3488
    %3797 = vmatprep.mubr.bf16.mxu0 %v3047
    %3798 = vmatmul.mubr.bf16.gmra.mrb[0].mxu0 %v3046
    %v3799 = vpop.f32.mrb[0].mxu0
    %v3800 = vadd.f32 %v3639, %v3799
    %v3801 = vpop.f32.mrb[0].mxu0
    %v3802 = vpop.f32.mrb[0].mxu0
    %v3803 = vadd.f32 %v3642, %v3802
    %v3804 = vpop.f32.mrb[0].mxu0
    %3805 = vmatprep.mubr.bf16.mxu0 %v3054
    %3806 = vmatmul.mubr.bf16.gmra.mrb[0].mxu0 %v3053
    %v3807 = vpop.f32.mrb[0].mxu0
    %v3808 = vadd.f32 %v3647, %v3807
    %v3809 = vpop.f32.mrb[0].mxu0
    %v3810 = vpop.f32.mrb[0].mxu0
    %v3811 = vadd.f32 %v3650, %v3810
    %v3812 = vpop.f32.mrb[0].mxu0
    %3813 = vmatprep.mubr.bf16.mxu0 %v3061
    %3814 = vmatmul.mubr.bf16.gmra.mrb[0].mxu0 %v3060
    %v3815 = vpop.f32.mrb[0].mxu0
    %v3816 = vadd.f32 %v3655, %v3815
    %v3817 = vpop.f32.mrb[0].mxu0
    %v3818 = vpop.f32.mrb[0].mxu0
    %v3819 = vadd.f32 %v3658, %v3818
    %v3820 = vpop.f32.mrb[0].mxu0
    %3821 = vmatprep.mubr.bf16.mxu0 %v3068
    %3822 = vmatmul.mubr.bf16.gmra.mrb[0].mxu0 %v3067
    %v3823 = vpop.f32.mrb[0].mxu0
    %v3824 = vadd.f32 %v3663, %v3823
    %v3825 = vpop.f32.mrb[0].mxu0
    %v3826 = vpop.f32.mrb[0].mxu0
    %v3827 = vadd.f32 %v3666, %v3826
    %v3828 = vpop.f32.mrb[0].mxu0
    %3829 = vmatprep.mubr.bf16.mxu0 %v3075
    %3830 = vmatmul.mubr.bf16.gmra.mrb[0].mxu0 %v3074
    %v3831 = vpop.f32.mrb[0].mxu0
    %v3832 = vadd.f32 %v3671, %v3831
    %v3833 = vpop.f32.mrb[0].mxu0
    %v3834 = vpop.f32.mrb[0].mxu0
    %v3835 = vadd.f32 %v3674, %v3834
    %v3836 = vpop.f32.mrb[0].mxu0
    %3837 = vmatprep.mubr.bf16.mxu0 %v3082
    %3838 = vmatmul.mubr.bf16.gmra.mrb[0].mxu0 %v3081
    %v3839 = vpop.f32.mrb[0].mxu0
    %v3840 = vadd.f32 %v3679, %v3839
    %v3841 = vpop.f32.mrb[0].mxu0
    %v3842 = vpop.f32.mrb[0].mxu0
    %v3843 = vadd.f32 %v3682, %v3842
    %v3844 = vpop.f32.mrb[0].mxu0
    %3845 = vmatprep.mubr.bf16.mxu0 %v3089
    %3846 = vmatmul.mubr.bf16.gmra.mrb[0].mxu0 %v3088
    %v3847 = vpop.f32.mrb[0].mxu0
    %v3848 = vadd.f32 %v3687, %v3847
    %v3849 = vpop.f32.mrb[0].mxu0
    %v3850 = vpop.f32.mrb[0].mxu0
    %v3851 = vadd.f32 %v3690, %v3850
    %v3852 = vpop.f32.mrb[0].mxu0
    %3853 = vmatprep.mubr.bf16.mxu0 %v3096
    %3854 = vmatmul.mubr.bf16.gmra.mrb[0].mxu0 %v3095
    %v3855 = vpop.f32.mrb[0].mxu0
    %v3856 = vadd.f32 %v3695, %v3855
    %v3857 = vpop.f32.mrb[0].mxu0
    %v3858 = vpop.f32.mrb[0].mxu0
    %v3859 = vadd.f32 %v3698, %v3858
    %v3860 = vpop.f32.mrb[0].mxu0
    %3861 = vmatprep.mubr.bf16.mxu0 %v3103
    %3862 = vmatmul.mubr.bf16.gmra.mrb[0].mxu0 %v3102
    %v3863 = vpop.f32.mrb[0].mxu0
    %v3864 = vadd.f32 %v3703, %v3863
    %v3865 = vpop.f32.mrb[0].mxu0
    %v3866 = vpop.f32.mrb[0].mxu0
    %v3867 = vadd.f32 %v3706, %v3866
    %v3868 = vpop.f32.mrb[0].mxu0
    %3869 = vmatprep.mubr.bf16.mxu0 %v3110
    %3870 = vmatmul.mubr.bf16.gmra.mrb[0].mxu0 %v3109
    %v3871 = vpop.f32.mrb[0].mxu0
    %v3872 = vadd.f32 %v3711, %v3871
    %v3873 = vpop.f32.mrb[0].mxu0
    %v3874 = vpop.f32.mrb[0].mxu0
    %v3875 = vadd.f32 %v3714, %v3874
    %v3876 = vpop.f32.mrb[0].mxu0
    %3877 = vmatprep.mubr.bf16.mxu0 %v3117
    %3878 = vmatmul.mubr.bf16.gmra.mrb[0].mxu0 %v3116
    %v3879 = vpop.f32.mrb[0].mxu0
    %v3880 = vadd.f32 %v3719, %v3879
    %v3881 = vpop.f32.mrb[0].mxu0
    %v3882 = vpop.f32.mrb[0].mxu0
    %v3883 = vadd.f32 %v3722, %v3882
    %v3884 = vpop.f32.mrb[0].mxu0
    %3885 = vmatprep.mubr.bf16.mxu0 %v3124
    %3886 = vmatmul.mubr.bf16.gmra.mrb[0].mxu0 %v3123
    %v3887 = vpop.f32.mrb[0].mxu0
    %v3888 = vadd.f32 %v3727, %v3887
    %v3889 = vpop.f32.mrb[0].mxu0
    %v3890 = vpop.f32.mrb[0].mxu0
    %v3891 = vadd.f32 %v3730, %v3890
    %v3892 = vpop.f32.mrb[0].mxu0
    %3893 = vmatprep.mubr.bf16.mxu0 %v3131
    %3894 = vmatmul.mubr.bf16.gmra.mrb[0].mxu0 %v3130
    %v3895 = vpop.f32.mrb[0].mxu0
    %v3896 = vadd.f32 %v3735, %v3895
    %v3897 = vpop.f32.mrb[0].mxu0
    %v3898 = vpop.f32.mrb[0].mxu0
    %v3899 = vadd.f32 %v3738, %v3898
    %v3900 = vpop.f32.mrb[0].mxu0
    %3901 = vmatprep.mubr.bf16.mxu0 %v3138
    %3902 = vmatmul.mubr.bf16.gmra.mrb[0].mxu0 %v3137
    %v3903 = vpop.f32.mrb[0].mxu0
    %v3904 = vadd.f32 %v3743, %v3903
    %v3905 = vpop.f32.mrb[0].mxu0
    %v3906 = vpop.f32.mrb[0].mxu0
    %v3907 = vadd.f32 %v3746, %v3906
    %v3908 = vpop.f32.mrb[0].mxu0
    %3909 = vmatprep.mubr.bf16.mxu0 %v3145
    %3910 = vmatmul.mubr.bf16.gmra.mrb[0].mxu0 %v3144
    %v3911 = vpop.f32.mrb[0].mxu0
    %v3912 = vadd.f32 %v3751, %v3911
    %v3913 = vpop.f32.mrb[0].mxu0
    %v3914 = vpop.f32.mrb[0].mxu0
    %v3915 = vadd.f32 %v3754, %v3914
    %v3916 = vpop.f32.mrb[0].mxu0
    %3917 = vmatprep.mubr.bf16.mxu0 %v3152
    %3918 = vmatmul.mubr.bf16.gmra.mrb[0].mxu0 %v3151
    %v3919 = vpop.f32.mrb[0].mxu0
    %v3920 = vadd.f32 %v3759, %v3919
    %v3921 = vpop.f32.mrb[0].mxu0
    %v3922 = vpop.f32.mrb[0].mxu0
    %v3923 = vadd.f32 %v3762, %v3922
    %v3924 = vpop.f32.mrb[0].mxu0
    %3925 = vdwg.mxu0
    %3926 = vmatprep.subr.bf16.mxu0 0
    %3927 = vmatpush1.bf16.msra.mxu0 %v3489
    %3928 = vmatprep.subr.bf16.mxu0 0
    %3929 = vmatpush1.bf16.msra.mxu0 %v3490
    %3930 = vmatprep.subr.bf16.mxu0 0
    %3931 = vmatpush1.bf16.msra.mxu0 %v3491
    %3932 = vmatprep.subr.bf16.mxu0 0
    %3933 = vmatpush1.bf16.msra.mxu0 %v3492
    %3934 = vmatprep.subr.bf16.mxu0 0
    %3935 = vmatpush1.bf16.msra.mxu0 %v3493
    %3936 = vmatprep.subr.bf16.mxu0 0
    %3937 = vmatpush1.bf16.msra.mxu0 %v3494
    %3938 = vmatprep.subr.bf16.mxu0 0
    %3939 = vmatpush1.bf16.msra.mxu0 %v3495
    %3940 = vmatprep.subr.bf16.mxu0 0
    %3941 = vmatpush1.bf16.msra.mxu0 %v3496
    %3942 = vmatprep.subr.bf16.mxu0 0
    %3943 = vmatpush1.bf16.msra.mxu0 %v3497
    %3944 = vmatprep.subr.bf16.mxu0 0
    %3945 = vmatpush1.bf16.msra.mxu0 %v3498
    %3946 = vmatprep.subr.bf16.mxu0 0
    %3947 = vmatpush1.bf16.msra.mxu0 %v3499
    %3948 = vmatprep.subr.bf16.mxu0 0
    %3949 = vmatpush1.bf16.msra.mxu0 %v3500
    %3950 = vmatprep.subr.bf16.mxu0 0
    %3951 = vmatpush1.bf16.msra.mxu0 %v3501
    %3952 = vmatprep.subr.bf16.mxu0 0
    %3953 = vmatpush1.bf16.msra.mxu0 %v3502
    %3954 = vmatprep.subr.bf16.mxu0 0
    %3955 = vmatpush1.bf16.msra.mxu0 %v3503
    %3956 = vmatprep.subr.bf16.mxu0 0
    %3957 = vmatpush1.bf16.msra.mxu0 %v3504
    %3958 = vmatprep.mubr.bf16.mxu0 %v3049
    %3959 = vmatmul.mubr.bf16.gmra.mrb[0].mxu0 %v3048
    %v3960 = vpop.f32.mrb[0].mxu0
    %v3961 = vadd.f32 %v3800, %v3960
    %v3962 = vpop.f32.mrb[0].mxu0
    %v3963 = vpop.f32.mrb[0].mxu0
    %v3964 = vadd.f32 %v3803, %v3963
    %v3965 = vpop.f32.mrb[0].mxu0
    %3966 = vmatprep.mubr.bf16.mxu0 %v3056
    %3967 = vmatmul.mubr.bf16.gmra.mrb[0].mxu0 %v3055
    %v3968 = vpop.f32.mrb[0].mxu0
    %v3969 = vadd.f32 %v3808, %v3968
    %v3970 = vpop.f32.mrb[0].mxu0
    %v3971 = vpop.f32.mrb[0].mxu0
    %v3972 = vadd.f32 %v3811, %v3971
    %v3973 = vpop.f32.mrb[0].mxu0
    %3974 = vmatprep.mubr.bf16.mxu0 %v3063
    %3975 = vmatmul.mubr.bf16.gmra.mrb[0].mxu0 %v3062
    %v3976 = vpop.f32.mrb[0].mxu0
    %v3977 = vadd.f32 %v3816, %v3976
    %v3978 = vpop.f32.mrb[0].mxu0
    %v3979 = vpop.f32.mrb[0].mxu0
    %v3980 = vadd.f32 %v3819, %v3979
    %v3981 = vpop.f32.mrb[0].mxu0
    %3982 = vmatprep.mubr.bf16.mxu0 %v3070
    %3983 = vmatmul.mubr.bf16.gmra.mrb[0].mxu0 %v3069
    %v3984 = vpop.f32.mrb[0].mxu0
    %v3985 = vadd.f32 %v3824, %v3984
    %v3986 = vpop.f32.mrb[0].mxu0
    %v3987 = vpop.f32.mrb[0].mxu0
    %v3988 = vadd.f32 %v3827, %v3987
    %v3989 = vpop.f32.mrb[0].mxu0
    %3990 = vmatprep.mubr.bf16.mxu0 %v3077
    %3991 = vmatmul.mubr.bf16.gmra.mrb[0].mxu0 %v3076
    %v3992 = vpop.f32.mrb[0].mxu0
    %v3993 = vadd.f32 %v3832, %v3992
    %v3994 = vpop.f32.mrb[0].mxu0
    %v3995 = vpop.f32.mrb[0].mxu0
    %v3996 = vadd.f32 %v3835, %v3995
    %v3997 = vpop.f32.mrb[0].mxu0
    %3998 = vmatprep.mubr.bf16.mxu0 %v3084
    %3999 = vmatmul.mubr.bf16.gmra.mrb[0].mxu0 %v3083
    %v4000 = vpop.f32.mrb[0].mxu0
    %v4001 = vadd.f32 %v3840, %v4000
    %v4002 = vpop.f32.mrb[0].mxu0
    %v4003 = vpop.f32.mrb[0].mxu0
    %v4004 = vadd.f32 %v3843, %v4003
    %v4005 = vpop.f32.mrb[0].mxu0
    %4006 = vmatprep.mubr.bf16.mxu0 %v3091
    %4007 = vmatmul.mubr.bf16.gmra.mrb[0].mxu0 %v3090
    %v4008 = vpop.f32.mrb[0].mxu0
    %v4009 = vadd.f32 %v3848, %v4008
    %v4010 = vpop.f32.mrb[0].mxu0
    %v4011 = vpop.f32.mrb[0].mxu0
    %v4012 = vadd.f32 %v3851, %v4011
    %v4013 = vpop.f32.mrb[0].mxu0
    %4014 = vmatprep.mubr.bf16.mxu0 %v3098
    %4015 = vmatmul.mubr.bf16.gmra.mrb[0].mxu0 %v3097
    %v4016 = vpop.f32.mrb[0].mxu0
    %v4017 = vadd.f32 %v3856, %v4016
    %v4018 = vpop.f32.mrb[0].mxu0
    %v4019 = vpop.f32.mrb[0].mxu0
    %v4020 = vadd.f32 %v3859, %v4019
    %v4021 = vpop.f32.mrb[0].mxu0
    %4022 = vmatprep.mubr.bf16.mxu0 %v3105
    %4023 = vmatmul.mubr.bf16.gmra.mrb[0].mxu0 %v3104
    %v4024 = vpop.f32.mrb[0].mxu0
    %v4025 = vadd.f32 %v3864, %v4024
    %v4026 = vpop.f32.mrb[0].mxu0
    %v4027 = vpop.f32.mrb[0].mxu0
    %v4028 = vadd.f32 %v3867, %v4027
    %v4029 = vpop.f32.mrb[0].mxu0
    %4030 = vmatprep.mubr.bf16.mxu0 %v3112
    %4031 = vmatmul.mubr.bf16.gmra.mrb[0].mxu0 %v3111
    %v4032 = vpop.f32.mrb[0].mxu0
    %v4033 = vadd.f32 %v3872, %v4032
    %v4034 = vpop.f32.mrb[0].mxu0
    %v4035 = vpop.f32.mrb[0].mxu0
    %v4036 = vadd.f32 %v3875, %v4035
    %v4037 = vpop.f32.mrb[0].mxu0
    %4038 = vmatprep.mubr.bf16.mxu0 %v3119
    %4039 = vmatmul.mubr.bf16.gmra.mrb[0].mxu0 %v3118
    %v4040 = vpop.f32.mrb[0].mxu0
    %v4041 = vadd.f32 %v3880, %v4040
    %v4042 = vpop.f32.mrb[0].mxu0
    %v4043 = vpop.f32.mrb[0].mxu0
    %v4044 = vadd.f32 %v3883, %v4043
    %v4045 = vpop.f32.mrb[0].mxu0
    %4046 = vmatprep.mubr.bf16.mxu0 %v3126
    %4047 = vmatmul.mubr.bf16.gmra.mrb[0].mxu0 %v3125
    %v4048 = vpop.f32.mrb[0].mxu0
    %v4049 = vadd.f32 %v3888, %v4048
    %v4050 = vpop.f32.mrb[0].mxu0
    %v4051 = vpop.f32.mrb[0].mxu0
    %v4052 = vadd.f32 %v3891, %v4051
    %v4053 = vpop.f32.mrb[0].mxu0
    %4054 = vmatprep.mubr.bf16.mxu0 %v3133
    %4055 = vmatmul.mubr.bf16.gmra.mrb[0].mxu0 %v3132
    %v4056 = vpop.f32.mrb[0].mxu0
    %v4057 = vadd.f32 %v3896, %v4056
    %v4058 = vpop.f32.mrb[0].mxu0
    %v4059 = vpop.f32.mrb[0].mxu0
    %v4060 = vadd.f32 %v3899, %v4059
    %v4061 = vpop.f32.mrb[0].mxu0
    %4062 = vmatprep.mubr.bf16.mxu0 %v3140
    %4063 = vmatmul.mubr.bf16.gmra.mrb[0].mxu0 %v3139
    %v4064 = vpop.f32.mrb[0].mxu0
    %v4065 = vadd.f32 %v3904, %v4064
    %v4066 = vpop.f32.mrb[0].mxu0
    %v4067 = vpop.f32.mrb[0].mxu0
    %v4068 = vadd.f32 %v3907, %v4067
    %v4069 = vpop.f32.mrb[0].mxu0
    %4070 = vmatprep.mubr.bf16.mxu0 %v3147
    %4071 = vmatmul.mubr.bf16.gmra.mrb[0].mxu0 %v3146
    %v4072 = vpop.f32.mrb[0].mxu0
    %v4073 = vadd.f32 %v3912, %v4072
    %v4074 = vpop.f32.mrb[0].mxu0
    %v4075 = vpop.f32.mrb[0].mxu0
    %v4076 = vadd.f32 %v3915, %v4075
    %v4077 = vpop.f32.mrb[0].mxu0
    %4078 = vmatprep.mubr.bf16.mxu0 %v3154
    %4079 = vmatmul.mubr.bf16.gmra.mrb[0].mxu0 %v3153
    %v4080 = vpop.f32.mrb[0].mxu0
    %v4081 = vadd.f32 %v3920, %v4080
    %v4082 = vpop.f32.mrb[0].mxu0
    %v4083 = vpop.f32.mrb[0].mxu0
    %v4084 = vadd.f32 %v3923, %v4083
    %v4085 = vpop.f32.mrb[0].mxu0
    %4086 = vdwg.mxu0
    %4087 = vmatprep.subr.bf16.mxu0 0
    %4088 = vmatpush1.bf16.msra.mxu0 %v3505
    %4089 = vmatprep.subr.bf16.mxu0 0
    %4090 = vmatpush1.bf16.msra.mxu0 0
    %4091 = vmatprep.subr.bf16.mxu0 0
    %4092 = vmatpush1.bf16.msra.mxu0 0
    %4093 = vmatprep.subr.bf16.mxu0 0
    %4094 = vmatpush1.bf16.msra.mxu0 0
    %4095 = vmatprep.subr.bf16.mxu0 0
    %4096 = vmatpush1.bf16.msra.mxu0 0
    %4097 = vmatprep.subr.bf16.mxu0 0
    %4098 = vmatpush1.bf16.msra.mxu0 0
    %4099 = vmatprep.subr.bf16.mxu0 0
    %4100 = vmatpush1.bf16.msra.mxu0 0
    %4101 = vmatprep.subr.bf16.mxu0 0
    %4102 = vmatpush1.bf16.msra.mxu0 0
    %4103 = vmatprep.subr.bf16.mxu0 0
    %4104 = vmatpush1.bf16.msra.mxu0 0
    %4105 = vmatprep.subr.bf16.mxu0 0
    %4106 = vmatpush1.bf16.msra.mxu0 0
    %4107 = vmatprep.subr.bf16.mxu0 0
    %4108 = vmatpush1.bf16.msra.mxu0 0
    %4109 = vmatprep.subr.bf16.mxu0 0
    %4110 = vmatpush1.bf16.msra.mxu0 0
    %4111 = vmatprep.subr.bf16.mxu0 0
    %4112 = vmatpush1.bf16.msra.mxu0 0
    %4113 = vmatprep.subr.bf16.mxu0 0
    %4114 = vmatpush1.bf16.msra.mxu0 0
    %4115 = vmatprep.subr.bf16.mxu0 0
    %4116 = vmatpush1.bf16.msra.mxu0 0
    %4117 = vmatprep.subr.bf16.mxu0 0
    %4118 = vmatpush1.bf16.msra.mxu0 0
    %4119 = vmatprep.mubr.bf16.mxu0 0
    %4120 = vmatmul.mubr.bf16.gmra.mrb[0].mxu0 %v3557
    %v4121 = vpop.f32.mrb[0].mxu0
    %v4122 = vadd.f32 %v3961, %v4121
    %v4123 = vpop.f32.mrb[0].mxu0
    %v4124 = vpop.f32.mrb[0].mxu0
    %v4125 = vadd.f32 %v3964, %v4124
    %v4126 = vpop.f32.mrb[0].mxu0
    %4127 = vmatprep.mubr.bf16.mxu0 0
    %4128 = vmatmul.mubr.bf16.gmra.mrb[0].mxu0 %v3560
    %v4129 = vpop.f32.mrb[0].mxu0
    %v4130 = vadd.f32 %v3969, %v4129
    %v4131 = vpop.f32.mrb[0].mxu0
    %v4132 = vpop.f32.mrb[0].mxu0
    %v4133 = vadd.f32 %v3972, %v4132
    %v4134 = vpop.f32.mrb[0].mxu0
    %4135 = vmatprep.mubr.bf16.mxu0 0
    %4136 = vmatmul.mubr.bf16.gmra.mrb[0].mxu0 %v3563
    %v4137 = vpop.f32.mrb[0].mxu0
    %v4138 = vadd.f32 %v3977, %v4137
    %v4139 = vpop.f32.mrb[0].mxu0
    %v4140 = vpop.f32.mrb[0].mxu0
    %v4141 = vadd.f32 %v3980, %v4140
    %v4142 = vpop.f32.mrb[0].mxu0
    %4143 = vmatprep.mubr.bf16.mxu0 0
    %4144 = vmatmul.mubr.bf16.gmra.mrb[0].mxu0 %v3566
    %v4145 = vpop.f32.mrb[0].mxu0
    %v4146 = vadd.f32 %v3985, %v4145
    %v4147 = vpop.f32.mrb[0].mxu0
    %v4148 = vpop.f32.mrb[0].mxu0
    %v4149 = vadd.f32 %v3988, %v4148
    %v4150 = vpop.f32.mrb[0].mxu0
    %4151 = vmatprep.mubr.bf16.mxu0 0
    %4152 = vmatmul.mubr.bf16.gmra.mrb[0].mxu0 %v3569
    %v4153 = vpop.f32.mrb[0].mxu0
    %v4154 = vadd.f32 %v3993, %v4153
    %v4155 = vpop.f32.mrb[0].mxu0
    %v4156 = vpop.f32.mrb[0].mxu0
    %v4157 = vadd.f32 %v3996, %v4156
    %v4158 = vpop.f32.mrb[0].mxu0
    %4159 = vmatprep.mubr.bf16.mxu0 0
    %4160 = vmatmul.mubr.bf16.gmra.mrb[0].mxu0 %v3572
    %v4161 = vpop.f32.mrb[0].mxu0
    %v4162 = vadd.f32 %v4001, %v4161
    %v4163 = vpop.f32.mrb[0].mxu0
    %v4164 = vpop.f32.mrb[0].mxu0
    %v4165 = vadd.f32 %v4004, %v4164
    %v4166 = vpop.f32.mrb[0].mxu0
    %4167 = vmatprep.mubr.bf16.mxu0 0
    %4168 = vmatmul.mubr.bf16.gmra.mrb[0].mxu0 %v3575
    %v4169 = vpop.f32.mrb[0].mxu0
    %v4170 = vadd.f32 %v4009, %v4169
    %v4171 = vpop.f32.mrb[0].mxu0
    %v4172 = vpop.f32.mrb[0].mxu0
    %v4173 = vadd.f32 %v4012, %v4172
    %v4174 = vpop.f32.mrb[0].mxu0
    %4175 = vmatprep.mubr.bf16.mxu0 0
    %4176 = vmatmul.mubr.bf16.gmra.mrb[0].mxu0 %v3578
    %v4177 = vpop.f32.mrb[0].mxu0
    %v4178 = vadd.f32 %v4017, %v4177
    %v4179 = vpop.f32.mrb[0].mxu0
    %v4180 = vpop.f32.mrb[0].mxu0
    %v4181 = vadd.f32 %v4020, %v4180
    %v4182 = vpop.f32.mrb[0].mxu0
    %4183 = vmatprep.mubr.bf16.mxu0 0
    %4184 = vmatmul.mubr.bf16.gmra.mrb[0].mxu0 %v3581
    %v4185 = vpop.f32.mrb[0].mxu0
    %v4186 = vadd.f32 %v4025, %v4185
    %v4187 = vpop.f32.mrb[0].mxu0
    %v4188 = vpop.f32.mrb[0].mxu0
    %v4189 = vadd.f32 %v4028, %v4188
    %v4190 = vpop.f32.mrb[0].mxu0
    %4191 = vmatprep.mubr.bf16.mxu0 0
    %4192 = vmatmul.mubr.bf16.gmra.mrb[0].mxu0 %v3584
    %v4193 = vpop.f32.mrb[0].mxu0
    %v4194 = vadd.f32 %v4033, %v4193
    %v4195 = vpop.f32.mrb[0].mxu0
    %v4196 = vpop.f32.mrb[0].mxu0
    %v4197 = vadd.f32 %v4036, %v4196
    %v4198 = vpop.f32.mrb[0].mxu0
    %4199 = vmatprep.mubr.bf16.mxu0 0
    %4200 = vmatmul.mubr.bf16.gmra.mrb[0].mxu0 %v3587
    %v4201 = vpop.f32.mrb[0].mxu0
    %v4202 = vadd.f32 %v4041, %v4201
    %v4203 = vpop.f32.mrb[0].mxu0
    %v4204 = vpop.f32.mrb[0].mxu0
    %v4205 = vadd.f32 %v4044, %v4204
    %v4206 = vpop.f32.mrb[0].mxu0
    %4207 = vmatprep.mubr.bf16.mxu0 0
    %4208 = vmatmul.mubr.bf16.gmra.mrb[0].mxu0 %v3590
    %v4209 = vpop.f32.mrb[0].mxu0
    %v4210 = vadd.f32 %v4049, %v4209
    %v4211 = vpop.f32.mrb[0].mxu0
    %v4212 = vpop.f32.mrb[0].mxu0
    %v4213 = vadd.f32 %v4052, %v4212
    %v4214 = vpop.f32.mrb[0].mxu0
    %4215 = vmatprep.mubr.bf16.mxu0 0
    %4216 = vmatmul.mubr.bf16.gmra.mrb[0].mxu0 %v3593
    %v4217 = vpop.f32.mrb[0].mxu0
    %v4218 = vadd.f32 %v4057, %v4217
    %v4219 = vpop.f32.mrb[0].mxu0
    %v4220 = vpop.f32.mrb[0].mxu0
    %v4221 = vadd.f32 %v4060, %v4220
    %v4222 = vpop.f32.mrb[0].mxu0
    %4223 = vmatprep.mubr.bf16.mxu0 0
    %4224 = vmatmul.mubr.bf16.gmra.mrb[0].mxu0 %v3596
    %v4225 = vpop.f32.mrb[0].mxu0
    %v4226 = vadd.f32 %v4065, %v4225
    %v4227 = vpop.f32.mrb[0].mxu0
    %v4228 = vpop.f32.mrb[0].mxu0
    %v4229 = vadd.f32 %v4068, %v4228
    %v4230 = vpop.f32.mrb[0].mxu0
    %4231 = vmatprep.mubr.bf16.mxu0 0
    %4232 = vmatmul.mubr.bf16.gmra.mrb[0].mxu0 %v3599
    %v4233 = vpop.f32.mrb[0].mxu0
    %v4234 = vadd.f32 %v4073, %v4233
    %v4235 = vpop.f32.mrb[0].mxu0
    %v4236 = vpop.f32.mrb[0].mxu0
    %v4237 = vadd.f32 %v4076, %v4236
    %v4238 = vpop.f32.mrb[0].mxu0
    %4239 = vmatprep.mubr.bf16.mxu0 0
    %4240 = vmatmul.mubr.bf16.gmra.mrb[0].mxu0 %v3602
    %v4241 = vpop.f32.mrb[0].mxu0
    %v4242 = vadd.f32 %v4081, %v4241
    %v4243 = vpop.f32.mrb[0].mxu0
    %v4244 = vpop.f32.mrb[0].mxu0
    %v4245 = vadd.f32 %v4084, %v4244
    %v4246 = vpop.f32.mrb[0].mxu0
    %4247 = vdwg.mxu0
    %v4248 = vmax.f32 %v4122, 0.0
    %v4249 = vmax.f32 %v4125, 0.0
    %v4250 = vmax.f32 %v4130, 0.0
    %v4251 = vmax.f32 %v4133, 0.0
    %v4252 = vmax.f32 %v4138, 0.0
    %v4253 = vmax.f32 %v4141, 0.0
    %v4254 = vmax.f32 %v4146, 0.0
    %v4255 = vmax.f32 %v4149, 0.0
    %v4256 = vmax.f32 %v4154, 0.0
    %v4257 = vmax.f32 %v4157, 0.0
    %v4258 = vmax.f32 %v4162, 0.0
    %v4259 = vmax.f32 %v4165, 0.0
    %v4260 = vmax.f32 %v4170, 0.0
    %v4261 = vmax.f32 %v4173, 0.0
    %v4262 = vmax.f32 %v4178, 0.0
    %v4263 = vmax.f32 %v4181, 0.0
    %v4264 = vmax.f32 %v4186, 0.0
    %v4265 = vmax.f32 %v4189, 0.0
    %v4266 = vmax.f32 %v4194, 0.0
    %v4267 = vmax.f32 %v4197, 0.0
    %v4268 = vmax.f32 %v4202, 0.0
    %v4269 = vmax.f32 %v4205, 0.0
    %v4270 = vmax.f32 %v4210, 0.0
    %v4271 = vmax.f32 %v4213, 0.0
    %v4272 = vmax.f32 %v4218, 0.0
    %v4273 = vmax.f32 %v4221, 0.0
    %v4274 = vmax.f32 %v4226, 0.0
    %v4275 = vmax.f32 %v4229, 0.0
    %v4276 = vmax.f32 %v4234, 0.0
    %v4277 = vmax.f32 %v4237, 0.0
    %v4278 = vmax.f32 %v4242, 0.0
    %v4279 = vmax.f32 %v4245, 0.0
    %v4280 = vpack.c.bf16 %v4249, %v4248
    %v4281 = vpack.c.bf16 %v4251, %v4250
    %v4282 = vpack.c.bf16 %v4253, %v4252
    %v4283 = vpack.c.bf16 %v4255, %v4254
    %v4284 = vpack.c.bf16 %v4257, %v4256
    %v4285 = vpack.c.bf16 %v4259, %v4258
    %v4286 = vpack.c.bf16 %v4261, %v4260
    %v4287 = vpack.c.bf16 %v4263, %v4262
    %v4288 = vpack.c.bf16 %v4265, %v4264
    %v4289 = vpack.c.bf16 %v4267, %v4266
    %v4290 = vpack.c.bf16 %v4269, %v4268
    %v4291 = vpack.c.bf16 %v4271, %v4270
    %v4292 = vpack.c.bf16 %v4273, %v4272
    %v4293 = vpack.c.bf16 %v4275, %v4274
    %v4294 = vpack.c.bf16 %v4277, %v4276
    %v4295 = vpack.c.bf16 %v4279, %v4278
    %v4296 = vld [vmem:[%s3] sm:$0xf]
    %v4297 = vld [vmem:[%s3 + $0x4] sm:$0xf]
    %v4298 = vld [vmem:[%s3 + $0x8] sm:$0xf]
    %v4299 = vld [vmem:[%s3 + $0xc] sm:$0xf]
    %v4300 = vld [vmem:[%s3 + $0x10] sm:$0xf]
    %v4301 = vld [vmem:[%s3 + $0x14] sm:$0xf]
    %v4302 = vld [vmem:[%s3 + $0x18] sm:$0xf]
    %v4303 = vld [vmem:[%s3 + $0x1c] sm:$0xf]
    %v4304 = vld [vmem:[%s3 + $0x20] sm:$0xf]
    %v4305 = vld [vmem:[%s3 + $0x24] sm:$0xf]
    %v4306 = vld [vmem:[%s3 + $0x28] sm:$0xf]
    %v4307 = vld [vmem:[%s3 + $0x2c] sm:$0xf]
    %v4308 = vld [vmem:[%s3 + $0x30] sm:$0xf]
    %v4309 = vld [vmem:[%s3 + $0x34] sm:$0xf]
    %v4310 = vld [vmem:[%s3 + $0x38] sm:$0xf]
    %v4311 = vld [vmem:[%s3 + $0x3c] sm:$0xf]
    %v4312 = vld [vmem:[%s4] sm:$0x1]
    %v4314 = vlaneseq
    %v4315 = vshrl.u32 %v4314, 7
    %v4316 = vsub.s32 0, %v4315
    %v4317 = vrot.slane %v4312, %v4316
    %v4335 = vunpack.c.l.b16 %v4296
    %v4336 = vunpack.c.l.b16 %v4297
    %v4337 = vunpack.c.l.b16 %v4298
    %v4338 = vunpack.c.l.b16 %v4299
    %v4339 = vunpack.c.l.b16 %v4300
    %v4340 = vunpack.c.l.b16 %v4301
    %v4341 = vunpack.c.l.b16 %v4302
    %v4342 = vunpack.c.l.b16 %v4303
    %v4343 = vunpack.c.l.b16 %v4304
    %v4344 = vunpack.c.l.b16 %v4305
    %v4345 = vunpack.c.l.b16 %v4306
    %v4346 = vunpack.c.l.b16 %v4307
    %v4347 = vunpack.c.l.b16 %v4308
    %v4348 = vunpack.c.l.b16 %v4309
    %v4349 = vunpack.c.l.b16 %v4310
    %v4350 = vunpack.c.l.b16 %v4311
    %v4351 = vpack.c.b16 %v4336, %v4335
    %v4352 = vpack.c.b16 %v4338, %v4337
    %v4353 = vpack.c.b16 %v4340, %v4339
    %v4354 = vpack.c.b16 %v4342, %v4341
    %v4355 = vpack.c.b16 %v4344, %v4343
    %v4356 = vpack.c.b16 %v4346, %v4345
    %v4357 = vpack.c.b16 %v4348, %v4347
    %v4358 = vpack.c.b16 %v4350, %v4349
    %4367 = vmatprep.subr.bf16.mxu0 0
    %4368 = vmatpush1.bf16.msra.mxu0 %v4351
    %4369 = vmatprep.subr.bf16.mxu0 0
    %4370 = vmatpush1.bf16.msra.mxu0 %v4352
    %4371 = vmatprep.subr.bf16.mxu0 0
    %4372 = vmatpush1.bf16.msra.mxu0 %v4353
    %4373 = vmatprep.subr.bf16.mxu0 0
    %4374 = vmatpush1.bf16.msra.mxu0 %v4354
    %4375 = vmatprep.subr.bf16.mxu0 0
    %4376 = vmatpush1.bf16.msra.mxu0 %v4355
    %4377 = vmatprep.subr.bf16.mxu0 0
    %4378 = vmatpush1.bf16.msra.mxu0 %v4356
    %4379 = vmatprep.subr.bf16.mxu0 0
    %4380 = vmatpush1.bf16.msra.mxu0 %v4357
    %4381 = vmatprep.subr.bf16.mxu0 0
    %4382 = vmatpush1.bf16.msra.mxu0 %v4358
    %4383 = vmatprep.subr.bf16.mxu0 0
    %4384 = vmatpush1.bf16.msra.mxu0 0
    %4385 = vmatprep.subr.bf16.mxu0 0
    %4386 = vmatpush1.bf16.msra.mxu0 0
    %4387 = vmatprep.subr.bf16.mxu0 0
    %4388 = vmatpush1.bf16.msra.mxu0 0
    %4389 = vmatprep.subr.bf16.mxu0 0
    %4390 = vmatpush1.bf16.msra.mxu0 0
    %4391 = vmatprep.subr.bf16.mxu0 0
    %4392 = vmatpush1.bf16.msra.mxu0 0
    %4393 = vmatprep.subr.bf16.mxu0 0
    %4394 = vmatpush1.bf16.msra.mxu0 0
    %4395 = vmatprep.subr.bf16.mxu0 0
    %4396 = vmatpush1.bf16.msra.mxu0 0
    %4397 = vmatprep.subr.bf16.mxu0 0
    %4398 = vmatpush1.bf16.msra.mxu0 0
    %4399 = vmatprep.mubr.bf16.mxu0 0
    %4400 = vmatmul.mubr.bf16.gmra.mrb[0].mxu0 %v4280
    %v4401 = vpop.f32.mrb[0].mxu0
    %v4402 = vadd.f32 %v4317, %v4401
    %v4403 = vpop.f32.mrb[0].mxu0
    %v4404 = vpop.f32.mrb[0].mxu0
    %v4405 = vadd.f32 %v4317, %v4404
    %v4406 = vpop.f32.mrb[0].mxu0
    %4407 = vmatprep.mubr.bf16.mxu0 0
    %4408 = vmatmul.mubr.bf16.gmra.mrb[0].mxu0 %v4281
    %v4409 = vpop.f32.mrb[0].mxu0
    %v4410 = vadd.f32 %v4317, %v4409
    %v4411 = vpop.f32.mrb[0].mxu0
    %v4412 = vpop.f32.mrb[0].mxu0
    %v4413 = vadd.f32 %v4317, %v4412
    %v4414 = vpop.f32.mrb[0].mxu0
    %4415 = vmatprep.mubr.bf16.mxu0 0
    %4416 = vmatmul.mubr.bf16.gmra.mrb[0].mxu0 %v4282
    %v4417 = vpop.f32.mrb[0].mxu0
    %v4418 = vadd.f32 %v4317, %v4417
    %v4419 = vpop.f32.mrb[0].mxu0
    %v4420 = vpop.f32.mrb[0].mxu0
    %v4421 = vadd.f32 %v4317, %v4420
    %v4422 = vpop.f32.mrb[0].mxu0
    %4423 = vmatprep.mubr.bf16.mxu0 0
    %4424 = vmatmul.mubr.bf16.gmra.mrb[0].mxu0 %v4283
    %v4425 = vpop.f32.mrb[0].mxu0
    %v4426 = vadd.f32 %v4317, %v4425
    %v4427 = vpop.f32.mrb[0].mxu0
    %v4428 = vpop.f32.mrb[0].mxu0
    %v4429 = vadd.f32 %v4317, %v4428
    %v4430 = vpop.f32.mrb[0].mxu0
    %4431 = vmatprep.mubr.bf16.mxu0 0
    %4432 = vmatmul.mubr.bf16.gmra.mrb[0].mxu0 %v4284
    %v4433 = vpop.f32.mrb[0].mxu0
    %v4434 = vadd.f32 %v4317, %v4433
    %v4435 = vpop.f32.mrb[0].mxu0
    %v4436 = vpop.f32.mrb[0].mxu0
    %v4437 = vadd.f32 %v4317, %v4436
    %v4438 = vpop.f32.mrb[0].mxu0
    %4439 = vmatprep.mubr.bf16.mxu0 0
    %4440 = vmatmul.mubr.bf16.gmra.mrb[0].mxu0 %v4285
    %v4441 = vpop.f32.mrb[0].mxu0
    %v4442 = vadd.f32 %v4317, %v4441
    %v4443 = vpop.f32.mrb[0].mxu0
    %v4444 = vpop.f32.mrb[0].mxu0
    %v4445 = vadd.f32 %v4317, %v4444
    %v4446 = vpop.f32.mrb[0].mxu0
    %4447 = vmatprep.mubr.bf16.mxu0 0
    %4448 = vmatmul.mubr.bf16.gmra.mrb[0].mxu0 %v4286
    %v4449 = vpop.f32.mrb[0].mxu0
    %v4450 = vadd.f32 %v4317, %v4449
    %v4451 = vpop.f32.mrb[0].mxu0
    %v4452 = vpop.f32.mrb[0].mxu0
    %v4453 = vadd.f32 %v4317, %v4452
    %v4454 = vpop.f32.mrb[0].mxu0
    %4455 = vmatprep.mubr.bf16.mxu0 0
    %4456 = vmatmul.mubr.bf16.gmra.mrb[0].mxu0 %v4287
    %v4457 = vpop.f32.mrb[0].mxu0
    %v4458 = vadd.f32 %v4317, %v4457
    %v4459 = vpop.f32.mrb[0].mxu0
    %v4460 = vpop.f32.mrb[0].mxu0
    %v4461 = vadd.f32 %v4317, %v4460
    %v4462 = vpop.f32.mrb[0].mxu0
    %4463 = vmatprep.mubr.bf16.mxu0 0
    %4464 = vmatmul.mubr.bf16.gmra.mrb[0].mxu0 %v4288
    %v4465 = vpop.f32.mrb[0].mxu0
    %v4466 = vadd.f32 %v4317, %v4465
    %v4467 = vpop.f32.mrb[0].mxu0
    %v4468 = vpop.f32.mrb[0].mxu0
    %v4469 = vadd.f32 %v4317, %v4468
    %v4470 = vpop.f32.mrb[0].mxu0
    %4471 = vmatprep.mubr.bf16.mxu0 0
    %4472 = vmatmul.mubr.bf16.gmra.mrb[0].mxu0 %v4289
    %v4473 = vpop.f32.mrb[0].mxu0
    %v4474 = vadd.f32 %v4317, %v4473
    %v4475 = vpop.f32.mrb[0].mxu0
    %v4476 = vpop.f32.mrb[0].mxu0
    %v4477 = vadd.f32 %v4317, %v4476
    %v4478 = vpop.f32.mrb[0].mxu0
    %4479 = vmatprep.mubr.bf16.mxu0 0
    %4480 = vmatmul.mubr.bf16.gmra.mrb[0].mxu0 %v4290
    %v4481 = vpop.f32.mrb[0].mxu0
    %v4482 = vadd.f32 %v4317, %v4481
    %v4483 = vpop.f32.mrb[0].mxu0
    %v4484 = vpop.f32.mrb[0].mxu0
    %v4485 = vadd.f32 %v4317, %v4484
    %v4486 = vpop.f32.mrb[0].mxu0
    %4487 = vmatprep.mubr.bf16.mxu0 0
    %4488 = vmatmul.mubr.bf16.gmra.mrb[0].mxu0 %v4291
    %v4489 = vpop.f32.mrb[0].mxu0
    %v4490 = vadd.f32 %v4317, %v4489
    %v4491 = vpop.f32.mrb[0].mxu0
    %v4492 = vpop.f32.mrb[0].mxu0
    %v4493 = vadd.f32 %v4317, %v4492
    %v4494 = vpop.f32.mrb[0].mxu0
    %4495 = vmatprep.mubr.bf16.mxu0 0
    %4496 = vmatmul.mubr.bf16.gmra.mrb[0].mxu0 %v4292
    %v4497 = vpop.f32.mrb[0].mxu0
    %v4498 = vadd.f32 %v4317, %v4497
    %v4499 = vpop.f32.mrb[0].mxu0
    %v4500 = vpop.f32.mrb[0].mxu0
    %v4501 = vadd.f32 %v4317, %v4500
    %v4502 = vpop.f32.mrb[0].mxu0
    %4503 = vmatprep.mubr.bf16.mxu0 0
    %4504 = vmatmul.mubr.bf16.gmra.mrb[0].mxu0 %v4293
    %v4505 = vpop.f32.mrb[0].mxu0
    %v4506 = vadd.f32 %v4317, %v4505
    %v4507 = vpop.f32.mrb[0].mxu0
    %v4508 = vpop.f32.mrb[0].mxu0
    %v4509 = vadd.f32 %v4317, %v4508
    %v4510 = vpop.f32.mrb[0].mxu0
    %4511 = vmatprep.mubr.bf16.mxu0 0
    %4512 = vmatmul.mubr.bf16.gmra.mrb[0].mxu0 %v4294
    %v4513 = vpop.f32.mrb[0].mxu0
    %v4514 = vadd.f32 %v4317, %v4513
    %v4515 = vpop.f32.mrb[0].mxu0
    %v4516 = vpop.f32.mrb[0].mxu0
    %v4517 = vadd.f32 %v4317, %v4516
    %v4518 = vpop.f32.mrb[0].mxu0
    %4519 = vmatprep.mubr.bf16.mxu0 0
    %4520 = vmatmul.mubr.bf16.gmra.mrb[0].mxu0 %v4295
    %v4521 = vpop.f32.mrb[0].mxu0
    %v4522 = vadd.f32 %v4317, %v4521
    %v4523 = vpop.f32.mrb[0].mxu0
    %v4524 = vpop.f32.mrb[0].mxu0
    %v4525 = vadd.f32 %v4317, %v4524
    %v4526 = vpop.f32.mrb[0].mxu0
    %4527 = vdwg.mxu0
    %vm4528 = vcmask 80896
    %4529 = vst.msk [vmem:[#allocation5] sm:$0xff] %vm4528, %v4402
    %4530 = vst.msk [vmem:[#allocation5 + $0x8] sm:$0xff] %vm4528, %v4405
    %4531 = vst.msk [vmem:[#allocation5 + $0x10] sm:$0xff] %vm4528, %v4410
    %4532 = vst.msk [vmem:[#allocation5 + $0x18] sm:$0xff] %vm4528, %v4413
    %4533 = vst.msk [vmem:[#allocation5 + $0x20] sm:$0xff] %vm4528, %v4418
    %4534 = vst.msk [vmem:[#allocation5 + $0x28] sm:$0xff] %vm4528, %v4421
    %4535 = vst.msk [vmem:[#allocation5 + $0x30] sm:$0xff] %vm4528, %v4426
    %4536 = vst.msk [vmem:[#allocation5 + $0x38] sm:$0xff] %vm4528, %v4429
    %4537 = vst.msk [vmem:[#allocation5 + $0x40] sm:$0xff] %vm4528, %v4434
    %4538 = vst.msk [vmem:[#allocation5 + $0x48] sm:$0xff] %vm4528, %v4437
    %4539 = vst.msk [vmem:[#allocation5 + $0x50] sm:$0xff] %vm4528, %v4442
    %4540 = vst.msk [vmem:[#allocation5 + $0x58] sm:$0xff] %vm4528, %v4445
    %4541 = vst.msk [vmem:[#allocation5 + $0x60] sm:$0xff] %vm4528, %v4450
    %4542 = vst.msk [vmem:[#allocation5 + $0x68] sm:$0xff] %vm4528, %v4453
    %4543 = vst.msk [vmem:[#allocation5 + $0x70] sm:$0xff] %vm4528, %v4458
    %4544 = vst.msk [vmem:[#allocation5 + $0x78] sm:$0xff] %vm4528, %v4461
    %4545 = vst.msk [vmem:[#allocation5 + $0x80] sm:$0xff] %vm4528, %v4466
    %4546 = vst.msk [vmem:[#allocation5 + $0x88] sm:$0xff] %vm4528, %v4469
    %4547 = vst.msk [vmem:[#allocation5 + $0x90] sm:$0xff] %vm4528, %v4474
    %4548 = vst.msk [vmem:[#allocation5 + $0x98] sm:$0xff] %vm4528, %v4477
    %4549 = vst.msk [vmem:[#allocation5 + $0xa0] sm:$0xff] %vm4528, %v4482
    %4550 = vst.msk [vmem:[#allocation5 + $0xa8] sm:$0xff] %vm4528, %v4485
    %4551 = vst.msk [vmem:[#allocation5 + $0xb0] sm:$0xff] %vm4528, %v4490
    %4552 = vst.msk [vmem:[#allocation5 + $0xb8] sm:$0xff] %vm4528, %v4493
    %4553 = vst.msk [vmem:[#allocation5 + $0xc0] sm:$0xff] %vm4528, %v4498
    %4554 = vst.msk [vmem:[#allocation5 + $0xc8] sm:$0xff] %vm4528, %v4501
    %4555 = vst.msk [vmem:[#allocation5 + $0xd0] sm:$0xff] %vm4528, %v4506
    %4556 = vst.msk [vmem:[#allocation5 + $0xd8] sm:$0xff] %vm4528, %v4509
    %4557 = vst.msk [vmem:[#allocation5 + $0xe0] sm:$0xff] %vm4528, %v4514
    %4558 = vst.msk [vmem:[#allocation5 + $0xe8] sm:$0xff] %vm4528, %v4517
    %4559 = vst.msk [vmem:[#allocation5 + $0xf0] sm:$0xff] %vm4528, %v4522
    %4560 = vst.msk [vmem:[#allocation5 + $0xf8] sm:$0xff] %vm4528, %v4525
    // Predicated region
    $region26: #{tpu_custom_call.1} parent=1 // pred_check
      _
    $region27: #{tpu_custom_call.1} parent=1 // pred_check_branch
      %4562 = sbr.rel (0) target = $region29
    $region28: #{tpu_custom_call.1} parent=1 // pred_region
      %s4564 = ssub.s32 4096, 32
      %4565 = vsyncadd [#allocation4], %s4564
      %s4566 = sshll.u32 [#allocation5], 4
      %s4567 = int_to_ptr.vmem [resolvable:$true] %s4566
      %4572 = dma.vmem_to_hbm [thread:$0]  %s4567, 32, %s5, [#allocation4], 32, 32, 2
    $region29: #{tpu_custom_call.1} parent=1 // pred_fallthru
      _
    // Predicated region
    $region30: #{tpu_custom_call.1} parent=1 // pred_check
      _
    $region31: #{tpu_custom_call.1} parent=1 // pred_check_branch
      %4574 = sbr.rel (0) target = $region33
    $region32: #{tpu_custom_call.1} parent=1 // pred_region
      %4575 = dma.done [#allocation4], 4096
    $region33: #{tpu_custom_call.1} parent=1 // pred_fallthru
      _
    %4576 = vsyncpa [#allocation3], 1
    %4577 = vsyncpa [#allocation4], 1

</llo_original>
